<compile_context>
chip_gen: v6e
topology: v6e:2x2x1
jax: 0.10.0
libtpu: 0.0.40
codegen_flags: <defaults>
</compile_context>

<pallas_src>
import functools

import jax
import jax.numpy as jnp
from jax import lax
from jax.experimental import pallas as pl
from jax.experimental.pallas import tpu as pltpu


_BBOX_XFORM_CLIP = 4.135166556742356      # log(1000/16), maskrcnn_benchmark BoxCoder


# ---------------------------------------------------------------------------
# In-kernel helper: 3x3 conv as 3 banded MXU matmuls (lane-dense everywhere)
# ---------------------------------------------------------------------------
def _conv_banded(x_bf16, l_ref, b_ref, bias_ref, relu):
    """out = sum_ki (L_ki @ x) @ B_ki + bias, f32 accumulation."""
    acc = None
    for ki in range(3):                                   # static unroll (3 taps)
        t = jnp.dot(l_ref[ki], x_bf16, preferred_element_type=jnp.float32)
        y = jnp.dot(t.astype(jnp.bfloat16), b_ref[ki],
                    preferred_element_type=jnp.float32)
        acc = y if acc is None else acc + y
    acc = acc + bias_ref[...]
    if relu:
        acc = jnp.maximum(acc, 0.0)
    return acc


# ---------------------------------------------------------------------------
# Fused backbone + RPN + anchor-decode kernel (one grid step = IB images)
# ---------------------------------------------------------------------------
def _rcnn_fused_kernel(x_ref,
                       l_stem_ref, w_stem_ref, c_stem_ref,
                       l_c2_ref, w_c2_ref, c_c2_ref,
                       l_s1_ref, w_fpn_ref, c_fpn_ref,
                       w_rpn_ref, c_rpn_ref,
                       w_head_ref, c_head_ref,
                       anc_ref,
                       out_ref,
                       *, Q, HEAD_N, img_h, img_w):
    bf16 = jnp.bfloat16

    x = x_ref[...]                                               # (IB*H, W*Cin) bf16
    # backbone: stem 3x3/s1 + ReLU, c2 3x3/s2 + ReLU
    a1 = _conv_banded(x, l_stem_ref, w_stem_ref, c_stem_ref, relu=True)
    a2 = _conv_banded(a1.astype(bf16), l_c2_ref, w_c2_ref, c_c2_ref, relu=True)
    # FPN 3x3 (lateral 1x1 folded into the weights on host), no ReLU
    a4 = _conv_banded(a2.astype(bf16), l_s1_ref, w_fpn_ref, c_fpn_ref, relu=False)
    # RPN 3x3 conv + ReLU
    a5 = _conv_banded(a4.astype(bf16), l_s1_ref, w_rpn_ref, c_rpn_ref, relu=True)

    # fused 1x1 cls+bbox head, lane layout: [logits|dx|dy|dw|dh| zero-pad] in Q-wide
    # groups (Q = fw*A), padded to HEAD_N (multiple of 128) lanes.
    hd = jnp.dot(a5.astype(bf16), w_head_ref[...],
                 preferred_element_type=jnp.float32) + c_head_ref[...]

    logits = hd[:, 0:Q]
    d_ct = hd[:, Q:3 * Q]                                        # (dx | dy)
    d_sz = jnp.minimum(hd[:, 3 * Q:5 * Q], _BBOX_XFORM_CLIP)     # (dw | dh), clamp hi

    # anchor decode on paired (x|y) lane groups
    anc = anc_ref[...]                                           # (rows, 4Q) f32
    a_lo = anc[:, 0:2 * Q]                                       # (x1 | y1)
    a_hi = anc[:, 2 * Q:4 * Q]                                   # (x2 | y2)
    sz = a_hi - a_lo + 1.0                                       # (ws | hs)
    ct = a_lo + 0.5 * sz                                         # (cx | cy)
    p_ct = d_ct * sz + ct
    p_sz = jnp.exp(d_sz) * sz
    lo = p_ct - 0.5 * p_sz
    hi = p_ct + 0.5 * p_sz - 1.0

    lane = lax.broadcasted_iota(jnp.int32, (1, 2 * Q), 1)
    clip_hi = jnp.where(lane < Q, img_w - 1.0, img_h - 1.0)
    lo = jnp.clip(lo, 0.0, clip_hi)
    hi = jnp.clip(hi, 0.0, clip_hi)
    scores = jax.nn.sigmoid(logits)

    rows = hd.shape[0]
    pad = jnp.zeros((rows, HEAD_N - 5 * Q), jnp.float32)
    # single lane-dense (rows, HEAD_N) store: [x1|y1|x2|y2|scores|zeros]
    out_ref[...] = jnp.concatenate([lo, hi, scores, pad], axis=1)


# ---------------------------------------------------------------------------
# Host-side parameter init (identical to the PyTorch-analogue toy model)
# ---------------------------------------------------------------------------
def init_params(key, in_channels=4, out_channels=32, num_anchors=3):
    ks = jax.random.split(key, 8)

    def conv_w(k, o, c, kh, kw):
        return jax.random.normal(k, (o, c, kh, kw), jnp.float32) * 0.05

    p = {}
    p["stem_w"] = conv_w(ks[0], 16, in_channels, 3, 3); p["stem_b"] = jnp.zeros((16,), jnp.float32)
    p["c2_w"] = conv_w(ks[1], out_channels, 16, 3, 3);  p["c2_b"] = jnp.zeros((out_channels,), jnp.float32)
    p["lat_w"] = conv_w(ks[2], out_channels, out_channels, 1, 1); p["lat_b"] = jnp.zeros((out_channels,), jnp.float32)
    p["fpn_w"] = conv_w(ks[3], out_channels, out_channels, 3, 3); p["fpn_b"] = jnp.zeros((out_channels,), jnp.float32)
    p["rpn_conv_w"] = conv_w(ks[4], out_channels, out_channels, 3, 3); p["rpn_conv_b"] = jnp.zeros((out_channels,), jnp.float32)
    p["rpn_cls_w"] = conv_w(ks[5], num_anchors, out_channels, 1, 1); p["rpn_cls_b"] = jnp.zeros((num_anchors,), jnp.float32)
    p["rpn_bbox_w"] = conv_w(ks[6], 4 * num_anchors, out_channels, 1, 1); p["rpn_bbox_b"] = jnp.zeros((4 * num_anchors,), jnp.float32)
    return p


# ---------------------------------------------------------------------------
# Host-side weight prep: banded conv matrices, row-select matrices, head, anchors
# ---------------------------------------------------------------------------
def _band_weight(conv_w_oihw, w_in, w_out, stride):
    """B_ki[wi*Cin+c, wo*Cout+co] = W[co,c,ki,kj] iff wi == stride*wo + kj - 1."""
    o, c, _, _ = conv_w_oihw.shape
    wi = jnp.arange(w_in).reshape(1, w_in, 1)
    wo = jnp.arange(w_out).reshape(1, 1, w_out)
    kj = jnp.arange(3).reshape(3, 1, 1)
    mask = (wi == stride * wo + kj - 1).astype(jnp.float32)        # (3, w_in, w_out)
    b = jnp.einsum('jxw,ockj->kxcwo', mask, conv_w_oihw.astype(jnp.float32))
    return b.reshape(3, w_in * c, w_out * o).astype(jnp.bfloat16)


def _row_select(h_in, h_out, stride, ib):
    """L_ki[b*h_out+ho, b*h_in+hi] = 1 iff hi == stride*ho + ki - 1 (per image b)."""
    ho = jnp.arange(h_out).reshape(1, h_out, 1)
    hi = jnp.arange(h_in).reshape(1, 1, h_in)
    ki = jnp.arange(3).reshape(3, 1, 1)
    sel = (hi == stride * ho + ki - 1).astype(jnp.float32)         # (3, h_out, h_in)
    eye = jnp.eye(ib, dtype=jnp.float32)
    full = jnp.einsum('kab,ij->kiajb', sel, eye)
    return full.reshape(3, ib * h_out, ib * h_in).astype(jnp.bfloat16)


def _bias_row(b, w_out):
    """bias_row[wo*Cout + co] = b[co]."""
    return jnp.tile(b.astype(jnp.float32), (w_out,)).reshape(1, -1)


def _head_weight(params, fw, a, head_n):
    """Fused 1x1 cls+bbox head in lane layout [q*(fw*A) + wo*A + a], q in
    {logits, dx, dy, dw, dh}, padded to head_n lanes."""
    c2 = params["rpn_cls_w"].shape[1]
    w_cls = params["rpn_cls_w"][:, :, 0, 0]                        # (A, C2)
    b_cls = params["rpn_cls_b"]
    w_bb = params["rpn_bbox_w"][:, :, 0, 0].reshape(a, 4, c2)      # [a, k, c]
    b_bb = params["rpn_bbox_b"].reshape(a, 4)
    w_stk = jnp.concatenate([w_cls[None], jnp.transpose(w_bb, (1, 0, 2))], axis=0)  # (5,A,C2)
    b_stk = jnp.concatenate([b_cls[None], b_bb.T], axis=0)         # (5, A)
    q = fw * a
    eye = jnp.eye(fw, dtype=jnp.float32)
    t = jnp.einsum('xw,qac->xcqwa', eye, w_stk.astype(jnp.float32))  # (fw,C2,5,fw,A)
    w_head = t.reshape(fw * c2, 5 * q)
    w_head = jnp.pad(w_head, ((0, 0), (0, head_n - 5 * q))).astype(jnp.bfloat16)
    b_head = jnp.broadcast_to(b_stk[:, None, :], (5, fw, a)).reshape(1, 5 * q)
    b_head = jnp.pad(b_head.astype(jnp.float32), ((0, 0), (0, head_n - 5 * q)))
    return w_head, b_head


def _make_anchors(fh, fw, stride, a, ib, sizes=(8.0, 16.0, 32.0)):
    """Anchors in lane layout [k*(fw*A) + wo*A + a], k in {x1,y1,x2,y2}, IB-tiled rows."""
    ys = (jnp.arange(fh, dtype=jnp.float32) + 0.5) * stride
    xs = (jnp.arange(fw, dtype=jnp.float32) + 0.5) * stride
    half = jnp.asarray(sizes[:a], jnp.float32) / 2.0
    cx = jnp.broadcast_to(xs[None, :, None], (fh, fw, a))
    cy = jnp.broadcast_to(ys[:, None, None], (fh, fw, a))
    hh = jnp.broadcast_to(half[None, None, :], (fh, fw, a))
    anc = jnp.stack([cx - hh, cy - hh, cx + hh - 1.0, cy + hh - 1.0], axis=1)
    anc = anc.reshape(fh, 4 * fw * a)
    return jnp.tile(anc, (ib, 1))


# ---------------------------------------------------------------------------
# Forward wrapper
# ---------------------------------------------------------------------------
def generalized_rcnn_forward(images_nchw, params, *, post_top_n=50,
                             num_anchors=3, images_per_step=None):
    x = jnp.transpose(images_nchw, (0, 2, 3, 1)).astype(jnp.float32)   # NHWC
    B, H, W, Cin = x.shape
    A = num_anchors
    fh, fw = H // 2, W // 2
    Q = fw * A
    HEAD_N = max(128, ((5 * Q + 127) // 128) * 128)
    T = fh * fw * A
    IB = B if images_per_step is None else images_per_step
    assert B % IB == 0

    # lane-folded input: rows = (image, row), lanes = (col, channel); bf16 once.
    x_lanes = x.reshape(B * H, W * Cin).astype(jnp.bfloat16)

    # banded conv operators (host precompute, tiny)
    l_stem = _row_select(H, H, 1, IB)
    w_stem = _band_weight(params["stem_w"], W, W, 1)
    c_stem = _bias_row(params["stem_b"], W)

    l_c2 = _row_select(H, fh, 2, IB)
    w_c2 = _band_weight(params["c2_w"], W, fw, 2)
    c_c2 = _bias_row(params["c2_b"], fw)

    # fold the 1x1 lateral conv into the 3x3 FPN conv. Exact here because
    # b_lat == 0; with a nonzero trained b_lat only the 1-pixel border differs.
    lat_w = params["lat_w"][:, :, 0, 0]                                 # (C2, C2)
    fpn_w_eff = jnp.einsum('omkl,mc->ockl', params["fpn_w"], lat_w)
    fpn_b_eff = params["fpn_b"] + jnp.einsum('omkl,m->o', params["fpn_w"],
                                             params["lat_b"])
    l_s1 = _row_select(fh, fh, 1, IB)            # shared by FPN and RPN 3x3 convs
    w_fpn = _band_weight(fpn_w_eff, fw, fw, 1)
    c_fpn = _bias_row(fpn_b_eff, fw)

    w_rpn = _band_weight(params["rpn_conv_w"], fw, fw, 1)
    c_rpn = _bias_row(params["rpn_conv_b"], fw)

    w_head, c_head = _head_weight(params, fw, A, HEAD_N)
    anc = _make_anchors(fh, fw, float(H // fh), A, IB)                  # (IB*fh, 4Q)

    kernel = functools.partial(_rcnn_fused_kernel, Q=Q, HEAD_N=HEAD_N,
                               img_h=float(H), img_w=float(W))

    def _full(arr):
        nd = arr.ndim
        return pl.BlockSpec(arr.shape, lambda g, _nd=nd: (0,) * _nd)

    out = pl.pallas_call(
        kernel,
        out_shape=jax.ShapeDtypeStruct((B * fh, HEAD_N), jnp.float32),
        grid=(B // IB,),
        in_specs=[
            pl.BlockSpec((IB * H, W * Cin), lambda g: (g, 0)),
            _full(l_stem), _full(w_stem), _full(c_stem),
            _full(l_c2), _full(w_c2), _full(c_c2),
            _full(l_s1), _full(w_fpn), _full(c_fpn),
            _full(w_rpn), _full(c_rpn),
            _full(w_head), _full(c_head),
            _full(anc),
        ],
        out_specs=pl.BlockSpec((IB * fh, HEAD_N), lambda g: (g, 0)),
        compiler_params=pltpu.CompilerParams(
            dimension_semantics=("parallel",)),
    )(x_lanes, l_stem, w_stem, c_stem, l_c2, w_c2, c_c2,
      l_s1, w_fpn, c_fpn, w_rpn, c_rpn, w_head, c_head, anc)

    # unpack the single lane-dense slab -> (B, T, 4) boxes / (B, T) scores
    out = out.reshape(B, fh, HEAD_N)
    x1 = out[:, :, 0 * Q:1 * Q].reshape(B, T)
    y1 = out[:, :, 1 * Q:2 * Q].reshape(B, T)
    x2 = out[:, :, 2 * Q:3 * Q].reshape(B, T)
    y2 = out[:, :, 3 * Q:4 * Q].reshape(B, T)
    scores = out[:, :, 4 * Q:5 * Q].reshape(B, T)
    boxes = jnp.stack([x1, y1, x2, y2], axis=-1)

    # TODO(synk): per-image NMS (BoxList post-processing) has no clean Pallas
    # equivalent; return top-k objectness-scored proposals instead.
    k = min(post_top_n, T)
    top_scores, top_idx = jax.lax.top_k(scores, k)
    top_boxes = jnp.take_along_axis(boxes, top_idx[..., None], axis=1)

    proposals = {"boxes": top_boxes, "scores": top_scores}
    result = proposals                           # RPN-only model: result = proposals
    return result


if __name__ == "__main__":
    key = jax.random.PRNGKey(0)
    k_img, k_par = jax.random.split(key)
    images = jax.random.normal(k_img, (2, 4, 16, 16), jnp.float32)   # NCHW, like PyTorch
    params = init_params(k_par, in_channels=4, out_channels=32, num_anchors=3)

    fwd = jax.jit(generalized_rcnn_forward)
    result = fwd(images, params)
    jax.block_until_ready(result)

    assert result["boxes"].shape == (2, 50, 4)
    assert result["scores"].shape == (2, 50)
    assert bool(jnp.all(jnp.isfinite(result["boxes"])))
    assert bool(jnp.all((result["scores"] >= 0.0) & (result["scores"] <= 1.0)))
    print("KERNEL_OK")
</pallas_src>

<mosaic_0001>
module attributes {stable_mosaic.version = 11 : i64} {
  func.func @_rcnn_fused_kernel(%arg0: i32, %arg1: memref<32x64xbf16, #tpu.memory_space<vmem>>, %arg2: memref<3x32x32xbf16, #tpu.memory_space<vmem>>, %arg3: memref<3x64x256xbf16, #tpu.memory_space<vmem>>, %arg4: memref<1x256xf32, #tpu.memory_space<vmem>>, %arg5: memref<3x16x32xbf16, #tpu.memory_space<vmem>>, %arg6: memref<3x256x256xbf16, #tpu.memory_space<vmem>>, %arg7: memref<1x256xf32, #tpu.memory_space<vmem>>, %arg8: memref<3x16x16xbf16, #tpu.memory_space<vmem>>, %arg9: memref<3x256x256xbf16, #tpu.memory_space<vmem>>, %arg10: memref<1x256xf32, #tpu.memory_space<vmem>>, %arg11: memref<3x256x256xbf16, #tpu.memory_space<vmem>>, %arg12: memref<1x256xf32, #tpu.memory_space<vmem>>, %arg13: memref<256x128xbf16, #tpu.memory_space<vmem>>, %arg14: memref<1x128xf32, #tpu.memory_space<vmem>>, %arg15: memref<16x96xf32, #tpu.memory_space<vmem>>, %arg16: memref<16x128xf32, #tpu.memory_space<vmem>>) attributes {dimension_semantics = [#tpu.dimension_semantics<parallel>], iteration_bounds = array<i64: 1>, scalar_prefetch = 0 : i64, scratch_operands = 0 : i64, tpu.core_type = #tpu.core_type<tc>, window_params = [{transform_indices = @transform_0, window_bounds = array<i64: 32, 64>}, {pipeline_mode = #tpu.pipeline_mode<synchronous>, transform_indices = @transform_1, window_bounds = array<i64: 3, 32, 32>}, {pipeline_mode = #tpu.pipeline_mode<synchronous>, transform_indices = @transform_2, window_bounds = array<i64: 3, 64, 256>}, {pipeline_mode = #tpu.pipeline_mode<synchronous>, transform_indices = @transform_3, window_bounds = array<i64: 1, 256>}, {pipeline_mode = #tpu.pipeline_mode<synchronous>, transform_indices = @transform_4, window_bounds = array<i64: 3, 16, 32>}, {pipeline_mode = #tpu.pipeline_mode<synchronous>, transform_indices = @transform_5, window_bounds = array<i64: 3, 256, 256>}, {pipeline_mode = #tpu.pipeline_mode<synchronous>, transform_indices = @transform_6, window_bounds = array<i64: 1, 256>}, {pipeline_mode = #tpu.pipeline_mode<synchronous>, transform_indices = @transform_7, window_bounds = array<i64: 3, 16, 16>}, {pipeline_mode = #tpu.pipeline_mode<synchronous>, transform_indices = @transform_8, window_bounds = array<i64: 3, 256, 256>}, {pipeline_mode = #tpu.pipeline_mode<synchronous>, transform_indices = @transform_9, window_bounds = array<i64: 1, 256>}, {pipeline_mode = #tpu.pipeline_mode<synchronous>, transform_indices = @transform_10, window_bounds = array<i64: 3, 256, 256>}, {pipeline_mode = #tpu.pipeline_mode<synchronous>, transform_indices = @transform_11, window_bounds = array<i64: 1, 256>}, {pipeline_mode = #tpu.pipeline_mode<synchronous>, transform_indices = @transform_12, window_bounds = array<i64: 256, 128>}, {pipeline_mode = #tpu.pipeline_mode<synchronous>, transform_indices = @transform_13, window_bounds = array<i64: 1, 128>}, {pipeline_mode = #tpu.pipeline_mode<synchronous>, transform_indices = @transform_14, window_bounds = array<i64: 16, 96>}, {transform_indices = @transform_15, window_bounds = array<i64: 16, 128>}]} {
    %c0 = arith.constant 0 : index
    %c0_0 = arith.constant 0 : index
    %0 = vector.load %arg1[%c0, %c0_0] : memref<32x64xbf16, #tpu.memory_space<vmem>>, vector<32x64xbf16>
    %c0_1 = arith.constant 0 : index
    %c0_2 = arith.constant 0 : index
    %c0_3 = arith.constant 0 : index
    %1 = vector.load %arg2[%c0_1, %c0_2, %c0_3] : memref<3x32x32xbf16, #tpu.memory_space<vmem>>, vector<1x32x32xbf16>
    %2 = vector.shape_cast %1 : vector<1x32x32xbf16> to vector<32x32xbf16>
    %cst = arith.constant dense<0.000000e+00> : vector<32x64xf32>
    %3 = tpu.matmul %2, %0, %cst {dimension_numbers = #tpu.dot_dimension_numbers<[1], [0], [0], [1], [0, 0, 1, 1], [], []>} : vector<32x32xbf16>, vector<32x64xbf16>, vector<32x64xf32> -> vector<32x64xf32>
    %4 = arith.truncf %3 : vector<32x64xf32> to vector<32x64xbf16>
    %c0_4 = arith.constant 0 : index
    %c0_5 = arith.constant 0 : index
    %c0_6 = arith.constant 0 : index
    %5 = vector.load %arg3[%c0_4, %c0_5, %c0_6] : memref<3x64x256xbf16, #tpu.memory_space<vmem>>, vector<1x64x256xbf16>
    %6 = vector.shape_cast %5 : vector<1x64x256xbf16> to vector<64x256xbf16>
    %cst_7 = arith.constant dense<0.000000e+00> : vector<32x256xf32>
    %7 = tpu.matmul %4, %6, %cst_7 {dimension_numbers = #tpu.dot_dimension_numbers<[1], [0], [0], [1], [0, 0, 1, 1], [], []>} : vector<32x64xbf16>, vector<64x256xbf16>, vector<32x256xf32> -> vector<32x256xf32>
    %c1 = arith.constant 1 : index
    %c0_8 = arith.constant 0 : index
    %c0_9 = arith.constant 0 : index
    %8 = vector.load %arg2[%c1, %c0_8, %c0_9] : memref<3x32x32xbf16, #tpu.memory_space<vmem>>, vector<1x32x32xbf16>
    %9 = vector.shape_cast %8 : vector<1x32x32xbf16> to vector<32x32xbf16>
    %cst_10 = arith.constant dense<0.000000e+00> : vector<32x64xf32>
    %10 = tpu.matmul %9, %0, %cst_10 {dimension_numbers = #tpu.dot_dimension_numbers<[1], [0], [0], [1], [0, 0, 1, 1], [], []>} : vector<32x32xbf16>, vector<32x64xbf16>, vector<32x64xf32> -> vector<32x64xf32>
    %11 = arith.truncf %10 : vector<32x64xf32> to vector<32x64xbf16>
    %c1_11 = arith.constant 1 : index
    %c0_12 = arith.constant 0 : index
    %c0_13 = arith.constant 0 : index
    %12 = vector.load %arg3[%c1_11, %c0_12, %c0_13] : memref<3x64x256xbf16, #tpu.memory_space<vmem>>, vector<1x64x256xbf16>
    %13 = vector.shape_cast %12 : vector<1x64x256xbf16> to vector<64x256xbf16>
    %cst_14 = arith.constant dense<0.000000e+00> : vector<32x256xf32>
    %14 = tpu.matmul %11, %13, %cst_14 {dimension_numbers = #tpu.dot_dimension_numbers<[1], [0], [0], [1], [0, 0, 1, 1], [], []>} : vector<32x64xbf16>, vector<64x256xbf16>, vector<32x256xf32> -> vector<32x256xf32>
    %15 = arith.addf %7, %14 : vector<32x256xf32>
    %c2 = arith.constant 2 : index
    %c0_15 = arith.constant 0 : index
    %c0_16 = arith.constant 0 : index
    %16 = vector.load %arg2[%c2, %c0_15, %c0_16] : memref<3x32x32xbf16, #tpu.memory_space<vmem>>, vector<1x32x32xbf16>
    %17 = vector.shape_cast %16 : vector<1x32x32xbf16> to vector<32x32xbf16>
    %cst_17 = arith.constant dense<0.000000e+00> : vector<32x64xf32>
    %18 = tpu.matmul %17, %0, %cst_17 {dimension_numbers = #tpu.dot_dimension_numbers<[1], [0], [0], [1], [0, 0, 1, 1], [], []>} : vector<32x32xbf16>, vector<32x64xbf16>, vector<32x64xf32> -> vector<32x64xf32>
    %19 = arith.truncf %18 : vector<32x64xf32> to vector<32x64xbf16>
    %c2_18 = arith.constant 2 : index
    %c0_19 = arith.constant 0 : index
    %c0_20 = arith.constant 0 : index
    %20 = vector.load %arg3[%c2_18, %c0_19, %c0_20] : memref<3x64x256xbf16, #tpu.memory_space<vmem>>, vector<1x64x256xbf16>
    %21 = vector.shape_cast %20 : vector<1x64x256xbf16> to vector<64x256xbf16>
    %cst_21 = arith.constant dense<0.000000e+00> : vector<32x256xf32>
    %22 = tpu.matmul %19, %21, %cst_21 {dimension_numbers = #tpu.dot_dimension_numbers<[1], [0], [0], [1], [0, 0, 1, 1], [], []>} : vector<32x64xbf16>, vector<64x256xbf16>, vector<32x256xf32> -> vector<32x256xf32>
    %23 = arith.addf %15, %22 : vector<32x256xf32>
    %c0_22 = arith.constant 0 : index
    %c0_23 = arith.constant 0 : index
    %24 = vector.load %arg4[%c0_22, %c0_23] : memref<1x256xf32, #tpu.memory_space<vmem>>, vector<1x256xf32>
    %25 = vector.broadcast %24 : vector<1x256xf32> to vector<32x256xf32>
    %26 = arith.addf %23, %25 : vector<32x256xf32>
    %cst_24 = arith.constant 0.000000e+00 : f32
    %27 = vector.broadcast %cst_24 : f32 to vector<32x256xf32>
    %28 = arith.maximumf %26, %27 : vector<32x256xf32>
    %29 = arith.truncf %28 : vector<32x256xf32> to vector<32x256xbf16>
    %c0_25 = arith.constant 0 : index
    %c0_26 = arith.constant 0 : index
    %c0_27 = arith.constant 0 : index
    %30 = vector.load %arg5[%c0_25, %c0_26, %c0_27] : memref<3x16x32xbf16, #tpu.memory_space<vmem>>, vector<1x16x32xbf16>
    %31 = vector.shape_cast %30 : vector<1x16x32xbf16> to vector<16x32xbf16>
    %cst_28 = arith.constant dense<0.000000e+00> : vector<16x256xf32>
    %32 = tpu.matmul %31, %29, %cst_28 {dimension_numbers = #tpu.dot_dimension_numbers<[1], [0], [0], [1], [0, 0, 1, 1], [], []>} : vector<16x32xbf16>, vector<32x256xbf16>, vector<16x256xf32> -> vector<16x256xf32>
    %33 = arith.truncf %32 : vector<16x256xf32> to vector<16x256xbf16>
    %c0_29 = arith.constant 0 : index
    %c0_30 = arith.constant 0 : index
    %c0_31 = arith.constant 0 : index
    %34 = vector.load %arg6[%c0_29, %c0_30, %c0_31] : memref<3x256x256xbf16, #tpu.memory_space<vmem>>, vector<1x256x256xbf16>
    %35 = vector.shape_cast %34 : vector<1x256x256xbf16> to vector<256x256xbf16>
    %cst_32 = arith.constant dense<0.000000e+00> : vector<16x256xf32>
    %36 = tpu.matmul %33, %35, %cst_32 {dimension_numbers = #tpu.dot_dimension_numbers<[1], [0], [0], [1], [0, 0, 1, 1], [], []>} : vector<16x256xbf16>, vector<256x256xbf16>, vector<16x256xf32> -> vector<16x256xf32>
    %c1_33 = arith.constant 1 : index
    %c0_34 = arith.constant 0 : index
    %c0_35 = arith.constant 0 : index
    %37 = vector.load %arg5[%c1_33, %c0_34, %c0_35] : memref<3x16x32xbf16, #tpu.memory_space<vmem>>, vector<1x16x32xbf16>
    %38 = vector.shape_cast %37 : vector<1x16x32xbf16> to vector<16x32xbf16>
    %cst_36 = arith.constant dense<0.000000e+00> : vector<16x256xf32>
    %39 = tpu.matmul %38, %29, %cst_36 {dimension_numbers = #tpu.dot_dimension_numbers<[1], [0], [0], [1], [0, 0, 1, 1], [], []>} : vector<16x32xbf16>, vector<32x256xbf16>, vector<16x256xf32> -> vector<16x256xf32>
    %40 = arith.truncf %39 : vector<16x256xf32> to vector<16x256xbf16>
    %c1_37 = arith.constant 1 : index
    %c0_38 = arith.constant 0 : index
    %c0_39 = arith.constant 0 : index
    %41 = vector.load %arg6[%c1_37, %c0_38, %c0_39] : memref<3x256x256xbf16, #tpu.memory_space<vmem>>, vector<1x256x256xbf16>
    %42 = vector.shape_cast %41 : vector<1x256x256xbf16> to vector<256x256xbf16>
    %cst_40 = arith.constant dense<0.000000e+00> : vector<16x256xf32>
    %43 = tpu.matmul %40, %42, %cst_40 {dimension_numbers = #tpu.dot_dimension_numbers<[1], [0], [0], [1], [0, 0, 1, 1], [], []>} : vector<16x256xbf16>, vector<256x256xbf16>, vector<16x256xf32> -> vector<16x256xf32>
    %44 = arith.addf %36, %43 : vector<16x256xf32>
    %c2_41 = arith.constant 2 : index
    %c0_42 = arith.constant 0 : index
    %c0_43 = arith.constant 0 : index
    %45 = vector.load %arg5[%c2_41, %c0_42, %c0_43] : memref<3x16x32xbf16, #tpu.memory_space<vmem>>, vector<1x16x32xbf16>
    %46 = vector.shape_cast %45 : vector<1x16x32xbf16> to vector<16x32xbf16>
    %cst_44 = arith.constant dense<0.000000e+00> : vector<16x256xf32>
    %47 = tpu.matmul %46, %29, %cst_44 {dimension_numbers = #tpu.dot_dimension_numbers<[1], [0], [0], [1], [0, 0, 1, 1], [], []>} : vector<16x32xbf16>, vector<32x256xbf16>, vector<16x256xf32> -> vector<16x256xf32>
    %48 = arith.truncf %47 : vector<16x256xf32> to vector<16x256xbf16>
    %c2_45 = arith.constant 2 : index
    %c0_46 = arith.constant 0 : index
    %c0_47 = arith.constant 0 : index
    %49 = vector.load %arg6[%c2_45, %c0_46, %c0_47] : memref<3x256x256xbf16, #tpu.memory_space<vmem>>, vector<1x256x256xbf16>
    %50 = vector.shape_cast %49 : vector<1x256x256xbf16> to vector<256x256xbf16>
    %cst_48 = arith.constant dense<0.000000e+00> : vector<16x256xf32>
    %51 = tpu.matmul %48, %50, %cst_48 {dimension_numbers = #tpu.dot_dimension_numbers<[1], [0], [0], [1], [0, 0, 1, 1], [], []>} : vector<16x256xbf16>, vector<256x256xbf16>, vector<16x256xf32> -> vector<16x256xf32>
    %52 = arith.addf %44, %51 : vector<16x256xf32>
    %c0_49 = arith.constant 0 : index
    %c0_50 = arith.constant 0 : index
    %53 = vector.load %arg7[%c0_49, %c0_50] : memref<1x256xf32, #tpu.memory_space<vmem>>, vector<1x256xf32>
    %54 = vector.broadcast %53 : vector<1x256xf32> to vector<16x256xf32>
    %55 = arith.addf %52, %54 : vector<16x256xf32>
    %cst_51 = arith.constant 0.000000e+00 : f32
    %56 = vector.broadcast %cst_51 : f32 to vector<16x256xf32>
    %57 = arith.maximumf %55, %56 : vector<16x256xf32>
    %58 = arith.truncf %57 : vector<16x256xf32> to vector<16x256xbf16>
    %c0_52 = arith.constant 0 : index
    %c0_53 = arith.constant 0 : index
    %c0_54 = arith.constant 0 : index
    %59 = vector.load %arg8[%c0_52, %c0_53, %c0_54] : memref<3x16x16xbf16, #tpu.memory_space<vmem>>, vector<1x16x16xbf16>
    %60 = vector.shape_cast %59 : vector<1x16x16xbf16> to vector<16x16xbf16>
    %cst_55 = arith.constant dense<0.000000e+00> : vector<16x256xf32>
    %61 = tpu.matmul %60, %58, %cst_55 {dimension_numbers = #tpu.dot_dimension_numbers<[1], [0], [0], [1], [0, 0, 1, 1], [], []>} : vector<16x16xbf16>, vector<16x256xbf16>, vector<16x256xf32> -> vector<16x256xf32>
    %62 = arith.truncf %61 : vector<16x256xf32> to vector<16x256xbf16>
    %c0_56 = arith.constant 0 : index
    %c0_57 = arith.constant 0 : index
    %c0_58 = arith.constant 0 : index
    %63 = vector.load %arg9[%c0_56, %c0_57, %c0_58] : memref<3x256x256xbf16, #tpu.memory_space<vmem>>, vector<1x256x256xbf16>
    %64 = vector.shape_cast %63 : vector<1x256x256xbf16> to vector<256x256xbf16>
    %cst_59 = arith.constant dense<0.000000e+00> : vector<16x256xf32>
    %65 = tpu.matmul %62, %64, %cst_59 {dimension_numbers = #tpu.dot_dimension_numbers<[1], [0], [0], [1], [0, 0, 1, 1], [], []>} : vector<16x256xbf16>, vector<256x256xbf16>, vector<16x256xf32> -> vector<16x256xf32>
    %c1_60 = arith.constant 1 : index
    %c0_61 = arith.constant 0 : index
    %c0_62 = arith.constant 0 : index
    %66 = vector.load %arg8[%c1_60, %c0_61, %c0_62] : memref<3x16x16xbf16, #tpu.memory_space<vmem>>, vector<1x16x16xbf16>
    %67 = vector.shape_cast %66 : vector<1x16x16xbf16> to vector<16x16xbf16>
    %cst_63 = arith.constant dense<0.000000e+00> : vector<16x256xf32>
    %68 = tpu.matmul %67, %58, %cst_63 {dimension_numbers = #tpu.dot_dimension_numbers<[1], [0], [0], [1], [0, 0, 1, 1], [], []>} : vector<16x16xbf16>, vector<16x256xbf16>, vector<16x256xf32> -> vector<16x256xf32>
    %69 = arith.truncf %68 : vector<16x256xf32> to vector<16x256xbf16>
    %c1_64 = arith.constant 1 : index
    %c0_65 = arith.constant 0 : index
    %c0_66 = arith.constant 0 : index
    %70 = vector.load %arg9[%c1_64, %c0_65, %c0_66] : memref<3x256x256xbf16, #tpu.memory_space<vmem>>, vector<1x256x256xbf16>
    %71 = vector.shape_cast %70 : vector<1x256x256xbf16> to vector<256x256xbf16>
    %cst_67 = arith.constant dense<0.000000e+00> : vector<16x256xf32>
    %72 = tpu.matmul %69, %71, %cst_67 {dimension_numbers = #tpu.dot_dimension_numbers<[1], [0], [0], [1], [0, 0, 1, 1], [], []>} : vector<16x256xbf16>, vector<256x256xbf16>, vector<16x256xf32> -> vector<16x256xf32>
    %73 = arith.addf %65, %72 : vector<16x256xf32>
    %c2_68 = arith.constant 2 : index
    %c0_69 = arith.constant 0 : index
    %c0_70 = arith.constant 0 : index
    %74 = vector.load %arg8[%c2_68, %c0_69, %c0_70] : memref<3x16x16xbf16, #tpu.memory_space<vmem>>, vector<1x16x16xbf16>
    %75 = vector.shape_cast %74 : vector<1x16x16xbf16> to vector<16x16xbf16>
    %cst_71 = arith.constant dense<0.000000e+00> : vector<16x256xf32>
    %76 = tpu.matmul %75, %58, %cst_71 {dimension_numbers = #tpu.dot_dimension_numbers<[1], [0], [0], [1], [0, 0, 1, 1], [], []>} : vector<16x16xbf16>, vector<16x256xbf16>, vector<16x256xf32> -> vector<16x256xf32>
    %77 = arith.truncf %76 : vector<16x256xf32> to vector<16x256xbf16>
    %c2_72 = arith.constant 2 : index
    %c0_73 = arith.constant 0 : index
    %c0_74 = arith.constant 0 : index
    %78 = vector.load %arg9[%c2_72, %c0_73, %c0_74] : memref<3x256x256xbf16, #tpu.memory_space<vmem>>, vector<1x256x256xbf16>
    %79 = vector.shape_cast %78 : vector<1x256x256xbf16> to vector<256x256xbf16>
    %cst_75 = arith.constant dense<0.000000e+00> : vector<16x256xf32>
    %80 = tpu.matmul %77, %79, %cst_75 {dimension_numbers = #tpu.dot_dimension_numbers<[1], [0], [0], [1], [0, 0, 1, 1], [], []>} : vector<16x256xbf16>, vector<256x256xbf16>, vector<16x256xf32> -> vector<16x256xf32>
    %81 = arith.addf %73, %80 : vector<16x256xf32>
    %c0_76 = arith.constant 0 : index
    %c0_77 = arith.constant 0 : index
    %82 = vector.load %arg10[%c0_76, %c0_77] : memref<1x256xf32, #tpu.memory_space<vmem>>, vector<1x256xf32>
    %83 = vector.broadcast %82 : vector<1x256xf32> to vector<16x256xf32>
    %84 = arith.addf %81, %83 : vector<16x256xf32>
    %85 = arith.truncf %84 : vector<16x256xf32> to vector<16x256xbf16>
    %c0_78 = arith.constant 0 : index
    %c0_79 = arith.constant 0 : index
    %c0_80 = arith.constant 0 : index
    %86 = vector.load %arg8[%c0_78, %c0_79, %c0_80] : memref<3x16x16xbf16, #tpu.memory_space<vmem>>, vector<1x16x16xbf16>
    %87 = vector.shape_cast %86 : vector<1x16x16xbf16> to vector<16x16xbf16>
    %cst_81 = arith.constant dense<0.000000e+00> : vector<16x256xf32>
    %88 = tpu.matmul %87, %85, %cst_81 {dimension_numbers = #tpu.dot_dimension_numbers<[1], [0], [0], [1], [0, 0, 1, 1], [], []>} : vector<16x16xbf16>, vector<16x256xbf16>, vector<16x256xf32> -> vector<16x256xf32>
    %89 = arith.truncf %88 : vector<16x256xf32> to vector<16x256xbf16>
    %c0_82 = arith.constant 0 : index
    %c0_83 = arith.constant 0 : index
    %c0_84 = arith.constant 0 : index
    %90 = vector.load %arg11[%c0_82, %c0_83, %c0_84] : memref<3x256x256xbf16, #tpu.memory_space<vmem>>, vector<1x256x256xbf16>
    %91 = vector.shape_cast %90 : vector<1x256x256xbf16> to vector<256x256xbf16>
    %cst_85 = arith.constant dense<0.000000e+00> : vector<16x256xf32>
    %92 = tpu.matmul %89, %91, %cst_85 {dimension_numbers = #tpu.dot_dimension_numbers<[1], [0], [0], [1], [0, 0, 1, 1], [], []>} : vector<16x256xbf16>, vector<256x256xbf16>, vector<16x256xf32> -> vector<16x256xf32>
    %c1_86 = arith.constant 1 : index
    %c0_87 = arith.constant 0 : index
    %c0_88 = arith.constant 0 : index
    %93 = vector.load %arg8[%c1_86, %c0_87, %c0_88] : memref<3x16x16xbf16, #tpu.memory_space<vmem>>, vector<1x16x16xbf16>
    %94 = vector.shape_cast %93 : vector<1x16x16xbf16> to vector<16x16xbf16>
    %cst_89 = arith.constant dense<0.000000e+00> : vector<16x256xf32>
    %95 = tpu.matmul %94, %85, %cst_89 {dimension_numbers = #tpu.dot_dimension_numbers<[1], [0], [0], [1], [0, 0, 1, 1], [], []>} : vector<16x16xbf16>, vector<16x256xbf16>, vector<16x256xf32> -> vector<16x256xf32>
    %96 = arith.truncf %95 : vector<16x256xf32> to vector<16x256xbf16>
    %c1_90 = arith.constant 1 : index
    %c0_91 = arith.constant 0 : index
    %c0_92 = arith.constant 0 : index
    %97 = vector.load %arg11[%c1_90, %c0_91, %c0_92] : memref<3x256x256xbf16, #tpu.memory_space<vmem>>, vector<1x256x256xbf16>
    %98 = vector.shape_cast %97 : vector<1x256x256xbf16> to vector<256x256xbf16>
    %cst_93 = arith.constant dense<0.000000e+00> : vector<16x256xf32>
    %99 = tpu.matmul %96, %98, %cst_93 {dimension_numbers = #tpu.dot_dimension_numbers<[1], [0], [0], [1], [0, 0, 1, 1], [], []>} : vector<16x256xbf16>, vector<256x256xbf16>, vector<16x256xf32> -> vector<16x256xf32>
    %100 = arith.addf %92, %99 : vector<16x256xf32>
    %c2_94 = arith.constant 2 : index
    %c0_95 = arith.constant 0 : index
    %c0_96 = arith.constant 0 : index
    %101 = vector.load %arg8[%c2_94, %c0_95, %c0_96] : memref<3x16x16xbf16, #tpu.memory_space<vmem>>, vector<1x16x16xbf16>
    %102 = vector.shape_cast %101 : vector<1x16x16xbf16> to vector<16x16xbf16>
    %cst_97 = arith.constant dense<0.000000e+00> : vector<16x256xf32>
    %103 = tpu.matmul %102, %85, %cst_97 {dimension_numbers = #tpu.dot_dimension_numbers<[1], [0], [0], [1], [0, 0, 1, 1], [], []>} : vector<16x16xbf16>, vector<16x256xbf16>, vector<16x256xf32> -> vector<16x256xf32>
    %104 = arith.truncf %103 : vector<16x256xf32> to vector<16x256xbf16>
    %c2_98 = arith.constant 2 : index
    %c0_99 = arith.constant 0 : index
    %c0_100 = arith.constant 0 : index
    %105 = vector.load %arg11[%c2_98, %c0_99, %c0_100] : memref<3x256x256xbf16, #tpu.memory_space<vmem>>, vector<1x256x256xbf16>
    %106 = vector.shape_cast %105 : vector<1x256x256xbf16> to vector<256x256xbf16>
    %cst_101 = arith.constant dense<0.000000e+00> : vector<16x256xf32>
    %107 = tpu.matmul %104, %106, %cst_101 {dimension_numbers = #tpu.dot_dimension_numbers<[1], [0], [0], [1], [0, 0, 1, 1], [], []>} : vector<16x256xbf16>, vector<256x256xbf16>, vector<16x256xf32> -> vector<16x256xf32>
    %108 = arith.addf %100, %107 : vector<16x256xf32>
    %c0_102 = arith.constant 0 : index
    %c0_103 = arith.constant 0 : index
    %109 = vector.load %arg12[%c0_102, %c0_103] : memref<1x256xf32, #tpu.memory_space<vmem>>, vector<1x256xf32>
    %110 = vector.broadcast %109 : vector<1x256xf32> to vector<16x256xf32>
    %111 = arith.addf %108, %110 : vector<16x256xf32>
    %cst_104 = arith.constant 0.000000e+00 : f32
    %112 = vector.broadcast %cst_104 : f32 to vector<16x256xf32>
    %113 = arith.maximumf %111, %112 : vector<16x256xf32>
    %114 = arith.truncf %113 : vector<16x256xf32> to vector<16x256xbf16>
    %c0_105 = arith.constant 0 : index
    %c0_106 = arith.constant 0 : index
    %115 = vector.load %arg13[%c0_105, %c0_106] : memref<256x128xbf16, #tpu.memory_space<vmem>>, vector<256x128xbf16>
    %cst_107 = arith.constant dense<0.000000e+00> : vector<16x128xf32>
    %116 = tpu.matmul %114, %115, %cst_107 {dimension_numbers = #tpu.dot_dimension_numbers<[1], [0], [0], [1], [0, 0, 1, 1], [], []>} : vector<16x256xbf16>, vector<256x128xbf16>, vector<16x128xf32> -> vector<16x128xf32>
    %c0_108 = arith.constant 0 : index
    %c0_109 = arith.constant 0 : index
    %117 = vector.load %arg14[%c0_108, %c0_109] : memref<1x128xf32, #tpu.memory_space<vmem>>, vector<1x128xf32>
    %118 = vector.broadcast %117 : vector<1x128xf32> to vector<16x128xf32>
    %119 = arith.addf %116, %118 : vector<16x128xf32>
    %120 = vector.extract_strided_slice %119 {offsets = [0, 0], sizes = [16, 24], strides = [1, 1]} : vector<16x128xf32> to vector<16x24xf32>
    %121 = vector.extract_strided_slice %119 {offsets = [0, 24], sizes = [16, 48], strides = [1, 1]} : vector<16x128xf32> to vector<16x48xf32>
    %122 = vector.extract_strided_slice %119 {offsets = [0, 72], sizes = [16, 48], strides = [1, 1]} : vector<16x128xf32> to vector<16x48xf32>
    %cst_110 = arith.constant 4.13516665 : f32
    %123 = vector.broadcast %cst_110 : f32 to vector<16x48xf32>
    %124 = arith.minimumf %122, %123 : vector<16x48xf32>
    %c0_111 = arith.constant 0 : index
    %c0_112 = arith.constant 0 : index
    %125 = vector.load %arg15[%c0_111, %c0_112] : memref<16x96xf32, #tpu.memory_space<vmem>>, vector<16x96xf32>
    %126 = vector.extract_strided_slice %125 {offsets = [0, 0], sizes = [16, 48], strides = [1, 1]} : vector<16x96xf32> to vector<16x48xf32>
    %127 = vector.extract_strided_slice %125 {offsets = [0, 48], sizes = [16, 48], strides = [1, 1]} : vector<16x96xf32> to vector<16x48xf32>
    %128 = arith.subf %127, %126 : vector<16x48xf32>
    %cst_113 = arith.constant 1.000000e+00 : f32
    %129 = vector.broadcast %cst_113 : f32 to vector<16x48xf32>
    %130 = arith.addf %128, %129 : vector<16x48xf32>
    %cst_114 = arith.constant 5.000000e-01 : f32
    %131 = vector.broadcast %cst_114 : f32 to vector<16x48xf32>
    %132 = arith.mulf %131, %130 : vector<16x48xf32>
    %133 = arith.addf %126, %132 : vector<16x48xf32>
    %134 = arith.mulf %121, %130 : vector<16x48xf32>
    %135 = arith.addf %134, %133 : vector<16x48xf32>
    %136 = math.exp %124 : vector<16x48xf32>
    %137 = arith.mulf %136, %130 : vector<16x48xf32>
    %cst_115 = arith.constant 5.000000e-01 : f32
    %138 = vector.broadcast %cst_115 : f32 to vector<16x48xf32>
    %139 = arith.mulf %138, %137 : vector<16x48xf32>
    %140 = arith.subf %135, %139 : vector<16x48xf32>
    %cst_116 = arith.constant 5.000000e-01 : f32
    %141 = vector.broadcast %cst_116 : f32 to vector<16x48xf32>
    %142 = arith.mulf %141, %137 : vector<16x48xf32>
    %143 = arith.addf %135, %142 : vector<16x48xf32>
    %cst_117 = arith.constant 1.000000e+00 : f32
    %144 = vector.broadcast %cst_117 : f32 to vector<16x48xf32>
    %145 = arith.subf %143, %144 : vector<16x48xf32>
    %146 = tpu.iota {dimensions = array<i32: 1>} : vector<1x48xi32>
    %c24_i32 = arith.constant 24 : i32
    %147 = vector.broadcast %c24_i32 : i32 to vector<1x48xi32>
    %148 = arith.cmpi slt, %146, %147 : vector<1x48xi32>
    %cst_118 = arith.constant 1.500000e+01 : f32
    %cst_119 = arith.constant 1.500000e+01 : f32
    %149 = vector.broadcast %cst_118 : f32 to vector<1x48xf32>
    %150 = vector.broadcast %cst_119 : f32 to vector<1x48xf32>
    %151 = arith.select %148, %149, %150 : vector<1x48xi1>, vector<1x48xf32>
    %cst_120 = arith.constant 0.000000e+00 : f32
    %152 = vector.broadcast %cst_120 : f32 to vector<16x48xf32>
    %153 = arith.maximumf %152, %140 : vector<16x48xf32>
    %154 = vector.broadcast %151 : vector<1x48xf32> to vector<16x48xf32>
    %155 = arith.minimumf %154, %153 : vector<16x48xf32>
    %cst_121 = arith.constant 0.000000e+00 : f32
    %156 = vector.broadcast %cst_121 : f32 to vector<16x48xf32>
    %157 = arith.maximumf %156, %145 : vector<16x48xf32>
    %158 = vector.broadcast %151 : vector<1x48xf32> to vector<16x48xf32>
    %159 = arith.minimumf %158, %157 : vector<16x48xf32>
    %160 = arith.negf %120 : vector<16x24xf32>
    %161 = math.exp %160 : vector<16x24xf32>
    %cst_122 = arith.constant 1.000000e+00 : f32
    %162 = vector.broadcast %cst_122 : f32 to vector<16x24xf32>
    %163 = arith.addf %162, %161 : vector<16x24xf32>
    %164 = arith.divf %162, %163 : vector<16x24xf32>
    %cst_123 = arith.constant 0.000000e+00 : f32
    %165 = vector.broadcast %cst_123 : f32 to vector<16x8xf32>
    %166 = tpu.concatenate %155, %159, %164, %165 in 1 : vector<16x48xf32>, vector<16x48xf32>, vector<16x24xf32>, vector<16x8xf32> -> vector<16x128xf32>
    %c0_124 = arith.constant 0 : index
    %c0_125 = arith.constant 0 : index
    %167 = vector.load %arg16[%c0_124, %c0_125] : memref<16x128xf32, #tpu.memory_space<vmem>>, vector<16x128xf32>
    tpu.vector_store %arg16[%c0_124, %c0_125], %166 {strides = array<i32>} : memref<16x128xf32, #tpu.memory_space<vmem>>, vector<16x128xf32>,
    return
  }
  func.func @transform_0(%arg0: i32) -> (i32, i32) {
    %c0_i32 = arith.constant 0 : i32
    %c0_i32_0 = arith.constant 0 : i32
    return %arg0, %c0_i32 : i32, i32
  }
  func.func @transform_1(%arg0: i32) -> (i32, i32, i32) {
    %c0_i32 = arith.constant 0 : i32
    %c0_i32_0 = arith.constant 0 : i32
    %c0_i32_1 = arith.constant 0 : i32
    %c0_i32_2 = arith.constant 0 : i32
    return %c0_i32, %c0_i32_0, %c0_i32_1 : i32, i32, i32
  }
  func.func @transform_2(%arg0: i32) -> (i32, i32, i32) {
    %c0_i32 = arith.constant 0 : i32
    %c0_i32_0 = arith.constant 0 : i32
    %c0_i32_1 = arith.constant 0 : i32
    %c0_i32_2 = arith.constant 0 : i32
    return %c0_i32, %c0_i32_0, %c0_i32_1 : i32, i32, i32
  }
  func.func @transform_3(%arg0: i32) -> (i32, i32) {
    %c0_i32 = arith.constant 0 : i32
    %c0_i32_0 = arith.constant 0 : i32
    %c0_i32_1 = arith.constant 0 : i32
    return %c0_i32, %c0_i32_0 : i32, i32
  }
  func.func @transform_4(%arg0: i32) -> (i32, i32, i32) {
    %c0_i32 = arith.constant 0 : i32
    %c0_i32_0 = arith.constant 0 : i32
    %c0_i32_1 = arith.constant 0 : i32
    %c0_i32_2 = arith.constant 0 : i32
    return %c0_i32, %c0_i32_0, %c0_i32_1 : i32, i32, i32
  }
  func.func @transform_5(%arg0: i32) -> (i32, i32, i32) {
    %c0_i32 = arith.constant 0 : i32
    %c0_i32_0 = arith.constant 0 : i32
    %c0_i32_1 = arith.constant 0 : i32
    %c0_i32_2 = arith.constant 0 : i32
    return %c0_i32, %c0_i32_0, %c0_i32_1 : i32, i32, i32
  }
  func.func @transform_6(%arg0: i32) -> (i32, i32) {
    %c0_i32 = arith.constant 0 : i32
    %c0_i32_0 = arith.constant 0 : i32
    %c0_i32_1 = arith.constant 0 : i32
    return %c0_i32, %c0_i32_0 : i32, i32
  }
  func.func @transform_7(%arg0: i32) -> (i32, i32, i32) {
    %c0_i32 = arith.constant 0 : i32
    %c0_i32_0 = arith.constant 0 : i32
    %c0_i32_1 = arith.constant 0 : i32
    %c0_i32_2 = arith.constant 0 : i32
    return %c0_i32, %c0_i32_0, %c0_i32_1 : i32, i32, i32
  }
  func.func @transform_8(%arg0: i32) -> (i32, i32, i32) {
    %c0_i32 = arith.constant 0 : i32
    %c0_i32_0 = arith.constant 0 : i32
    %c0_i32_1 = arith.constant 0 : i32
    %c0_i32_2 = arith.constant 0 : i32
    return %c0_i32, %c0_i32_0, %c0_i32_1 : i32, i32, i32
  }
  func.func @transform_9(%arg0: i32) -> (i32, i32) {
    %c0_i32 = arith.constant 0 : i32
    %c0_i32_0 = arith.constant 0 : i32
    %c0_i32_1 = arith.constant 0 : i32
    return %c0_i32, %c0_i32_0 : i32, i32
  }
  func.func @transform_10(%arg0: i32) -> (i32, i32, i32) {
    %c0_i32 = arith.constant 0 : i32
    %c0_i32_0 = arith.constant 0 : i32
    %c0_i32_1 = arith.constant 0 : i32
    %c0_i32_2 = arith.constant 0 : i32
    return %c0_i32, %c0_i32_0, %c0_i32_1 : i32, i32, i32
  }
  func.func @transform_11(%arg0: i32) -> (i32, i32) {
    %c0_i32 = arith.constant 0 : i32
    %c0_i32_0 = arith.constant 0 : i32
    %c0_i32_1 = arith.constant 0 : i32
    return %c0_i32, %c0_i32_0 : i32, i32
  }
  func.func @transform_12(%arg0: i32) -> (i32, i32) {
    %c0_i32 = arith.constant 0 : i32
    %c0_i32_0 = arith.constant 0 : i32
    %c0_i32_1 = arith.constant 0 : i32
    return %c0_i32, %c0_i32_0 : i32, i32
  }
  func.func @transform_13(%arg0: i32) -> (i32, i32) {
    %c0_i32 = arith.constant 0 : i32
    %c0_i32_0 = arith.constant 0 : i32
    %c0_i32_1 = arith.constant 0 : i32
    return %c0_i32, %c0_i32_0 : i32, i32
  }
  func.func @transform_14(%arg0: i32) -> (i32, i32) {
    %c0_i32 = arith.constant 0 : i32
    %c0_i32_0 = arith.constant 0 : i32
    %c0_i32_1 = arith.constant 0 : i32
    return %c0_i32, %c0_i32_0 : i32, i32
  }
  func.func @transform_15(%arg0: i32) -> (i32, i32) {
    %c0_i32 = arith.constant 0 : i32
    %c0_i32_0 = arith.constant 0 : i32
    return %arg0, %c0_i32 : i32, i32
  }
}

</mosaic_0001>

<llo_original>
// kernel: tile.37
$region0: #{tile.37}
  #allocation0 [shape = 's32[1]{0}', space=sflag, size = 0x4, scoped, tag = 'scoped memory for tile.37']
  %s0 = inlined_call_operand.vmem [shape: f32[32], index: 0, kind: input, shape index: {}]
  %s1 = inlined_call_operand.vmem [shape: f32[8,32], index: 1, kind: output, shape index: {}]
  // Predicated region
  $region2: #{tile.37} parent=0 // pred_check
    _
  $region3: #{tile.37} parent=0 // pred_check_branch
    %3 = sbr.rel (0) target = $region5
  $region4: #{tile.37} parent=0 // pred_region
    _
  $region5: #{tile.37} parent=0 // pred_fallthru
    _
  %v4 = vld [vmem:[%s0] ss:$0 sm:$0xff]
  %5 = vst [vmem:[%s1] sm:$0xff] %v4

// kernel: tile.38
$region0: #{tile.38}
  %s0 = inlined_call_operand.vmem [shape: f32[8,32], index: 0, kind: input, shape index: {}]
  %s1 = inlined_call_operand.vmem [shape: f32[1,256], index: 1, kind: output, shape index: {}]
  $region1: #{tile.38} parent=0
    #allocation0 [shape = 'u8[8192]{0}', space=vmem, size = 0x2000, scoped, tag = 'scoped mem for output reshape']
    %s2 = smov 3
    %v3 = vld [vmem:[%s0] ss:$4 sm:%s2]
    %vm4 = vcmask 261120
    %5 = vst.msk [vmem:[#allocation0] ss:$8 sm:$0x3] %vm4, %v3
    %s6 = scalar_lea.vmem %s0, 3
    %s7 = smov 3
    %v8 = vld [vmem:[%s6] ss:$4 sm:%s7]
    %9 = vrot.lane.b32.xlu0 %v8, 96
    %v10 = vpop.permute.xlu0 %9
    %vm11 = vcmask 1048320
    %12 = vst.msk [vmem:[#allocation0] ss:$8 sm:$0x3] %vm11, %v10
    %s13 = scalar_lea.vmem %s0, 2
    %s14 = smov 3
    %v15 = vld [vmem:[%s13] ss:$4 sm:%s14]
    %16 = vrot.lane.b32.xlu0 %v15, 64
    %v17 = vpop.permute.xlu0 %16
    %vm18 = vcmask 785920
    %19 = vst.msk [vmem:[#allocation0] ss:$8 sm:$0x3] %vm18, %v17
    %s20 = scalar_lea.vmem %s0, 1
    %s21 = smov 3
    %v22 = vld [vmem:[%s20] ss:$4 sm:%s21]
    %23 = vrot.lane.b32.xlu0 %v22, 32
    %v24 = vpop.permute.xlu0 %23
    %vm25 = vcmask 523520
    %26 = vst.msk [vmem:[#allocation0] ss:$8 sm:$0x3] %vm25, %v24
    %s28 = sshll.u32 1, 1
    %s29 = ssub.s32 %s28, 1
    %v31 = vld [vmem:[#allocation0] sm:%s29]
    %s32 = sshll.u32 1, 1
    %s33 = ssub.s32 %s32, 1
    %34 = vst [vmem:[%s1] sm:%s33] %v31
    %s35 = scalar_lea.vmem [#allocation0], 8
    %v36 = vld [vmem:[%s35] sm:%s29]
    %s37 = sshll.u32 1, 1
    %s38 = ssub.s32 %s37, 1
    %s39 = scalar_lea.vmem %s1, 1
    %40 = vst [vmem:[%s39] sm:%s38] %v36

// kernel: tile.27
$region0: #{tile.27}
  #allocation0 [shape = 's32[1]{0}', space=sflag, size = 0x4, scoped, tag = 'scoped memory for tile.27']
  %s0 = inlined_call_operand.vmem [shape: f32[16], index: 0, kind: input, shape index: {}]
  %s1 = inlined_call_operand.vmem [shape: f32[16,16], index: 1, kind: output, shape index: {}]
  // Predicated region
  $region2: #{tile.27} parent=0 // pred_check
    _
  $region3: #{tile.27} parent=0 // pred_check_branch
    %3 = sbr.rel (0) target = $region5
  $region4: #{tile.27} parent=0 // pred_region
    _
  $region5: #{tile.27} parent=0 // pred_fallthru
    _
  %v4 = vld [vmem:[%s0] ss:$0 sm:$0xff]
  %5 = vst [vmem:[%s1] sm:$0xff] %v4
  %s6 = scalar_lea.vmem %s1, 8
  %7 = vst [vmem:[%s6] sm:$0xff] %v4

// kernel: tile.28
$region0: #{tile.28}
  %s0 = inlined_call_operand.vmem [shape: f32[16,16], index: 0, kind: input, shape index: {}]
  %s1 = inlined_call_operand.vmem [shape: f32[1,256], index: 1, kind: output, shape index: {}]
  $region1: #{tile.28} parent=0
    #allocation0 [shape = 'u8[8192]{0}', space=vmem, size = 0x2000, scoped, tag = 'scoped mem for output reshape']
    %s2 = smov 3
    %v3 = vld [vmem:[%s0] ss:$8 sm:%s2]
    %vm4 = vcmask 130048
    %5 = vst.msk [vmem:[#allocation0] ss:$8 sm:$0x3] %vm4, %v3
    %s6 = scalar_lea.vmem %s0, 7
    %s7 = smov 3
    %v8 = vld [vmem:[%s6] ss:$8 sm:%s7]
    %9 = vrot.lane.b32.xlu0 %v8, 112
    %v10 = vpop.permute.xlu0 %9
    %vm11 = vcmask 1048448
    %12 = vst.msk [vmem:[#allocation0] ss:$8 sm:$0x3] %vm11, %v10
    %s13 = scalar_lea.vmem %s0, 6
    %s14 = smov 3
    %v15 = vld [vmem:[%s13] ss:$8 sm:%s14]
    %16 = vrot.lane.b32.xlu0 %v15, 96
    %v17 = vpop.permute.xlu0 %16
    %vm18 = vcmask 917248
    %19 = vst.msk [vmem:[#allocation0] ss:$8 sm:$0x3] %vm18, %v17
    %s20 = scalar_lea.vmem %s0, 5
    %s21 = smov 3
    %v22 = vld [vmem:[%s20] ss:$8 sm:%s21]
    %23 = vrot.lane.b32.xlu0 %v22, 80
    %v24 = vpop.permute.xlu0 %23
    %vm25 = vcmask 786048
    %26 = vst.msk [vmem:[#allocation0] ss:$8 sm:$0x3] %vm25, %v24
    %s27 = scalar_lea.vmem %s0, 4
    %s28 = smov 3
    %v29 = vld [vmem:[%s27] ss:$8 sm:%s28]
    %30 = vrot.lane.b32.xlu0 %v29, 64
    %v31 = vpop.permute.xlu0 %30
    %vm32 = vcmask 654848
    %33 = vst.msk [vmem:[#allocation0] ss:$8 sm:$0x3] %vm32, %v31
    %s34 = scalar_lea.vmem %s0, 3
    %s35 = smov 3
    %v36 = vld [vmem:[%s34] ss:$8 sm:%s35]
    %37 = vrot.lane.b32.xlu0 %v36, 48
    %v38 = vpop.permute.xlu0 %37
    %vm39 = vcmask 523648
    %40 = vst.msk [vmem:[#allocation0] ss:$8 sm:$0x3] %vm39, %v38
    %s41 = scalar_lea.vmem %s0, 2
    %s42 = smov 3
    %v43 = vld [vmem:[%s41] ss:$8 sm:%s42]
    %44 = vrot.lane.b32.xlu0 %v43, 32
    %v45 = vpop.permute.xlu0 %44
    %vm46 = vcmask 392448
    %47 = vst.msk [vmem:[#allocation0] ss:$8 sm:$0x3] %vm46, %v45
    %s48 = scalar_lea.vmem %s0, 1
    %s49 = smov 3
    %v50 = vld [vmem:[%s48] ss:$8 sm:%s49]
    %51 = vrot.lane.b32.xlu0 %v50, 16
    %v52 = vpop.permute.xlu0 %51
    %vm53 = vcmask 261248
    %54 = vst.msk [vmem:[#allocation0] ss:$8 sm:$0x3] %vm53, %v52
    %s56 = sshll.u32 1, 1
    %s57 = ssub.s32 %s56, 1
    %v59 = vld [vmem:[#allocation0] sm:%s57]
    %s60 = sshll.u32 1, 1
    %s61 = ssub.s32 %s60, 1
    %62 = vst [vmem:[%s1] sm:%s61] %v59
    %s63 = scalar_lea.vmem [#allocation0], 8
    %v64 = vld [vmem:[%s63] sm:%s57]
    %s65 = sshll.u32 1, 1
    %s66 = ssub.s32 %s65, 1
    %s67 = scalar_lea.vmem %s1, 1
    %68 = vst [vmem:[%s67] sm:%s66] %v64

// kernel: generalized_rcnn_forward.1
$region0: #{generalized_rcnn_forward.1}
  #allocation0 [shape = 'u32[]', space=smem, size = 0x4, offset = 0x4, fixed_abs, tag = 'smem constant byte address 0x4 - core index']
  #allocation1 [shape = 'u32[144,128]{1,0:T(1,128)}', space=vmem, size = 0x12000, scoped, tag = 'internal scratch']
  %s0 = inlined_call_operand.vmem [shape: bf16[32,64], index: 0, kind: input, shape index: {}]
  %s1 = inlined_call_operand.vmem [shape: bf16[3,32,32], index: 1, kind: input, shape index: {}]
  %s2 = inlined_call_operand.vmem [shape: bf16[3,64,256], index: 2, kind: input, shape index: {}]
  %s3 = inlined_call_operand.vmem [shape: f32[1,256], index: 3, kind: input, shape index: {}]
  %s4 = inlined_call_operand.vmem [shape: bf16[3,16,32], index: 4, kind: input, shape index: {}]
  %s5 = inlined_call_operand.vmem [shape: bf16[3,256,256], index: 5, kind: input, shape index: {}]
  %s6 = inlined_call_operand.vmem [shape: f32[1,256], index: 6, kind: input, shape index: {}]
  %s7 = inlined_call_operand.vmem [shape: bf16[3,16,16], index: 7, kind: input, shape index: {}]
  %s8 = inlined_call_operand.vmem [shape: bf16[3,256,256], index: 8, kind: input, shape index: {}]
  %s9 = inlined_call_operand.vmem [shape: f32[1,256], index: 9, kind: input, shape index: {}]
  %s10 = inlined_call_operand.vmem [shape: bf16[3,256,256], index: 10, kind: input, shape index: {}]
  %s11 = inlined_call_operand.vmem [shape: f32[1,256], index: 11, kind: input, shape index: {}]
  %s12 = inlined_call_operand.vmem [shape: bf16[256,128], index: 12, kind: input, shape index: {}]
  %s13 = inlined_call_operand.vmem [shape: f32[1,128], index: 13, kind: input, shape index: {}]
  %s14 = inlined_call_operand.vmem [shape: f32[16,96], index: 14, kind: input, shape index: {}]
  %s15 = inlined_call_operand.vmem [shape: f32[16,128], index: 15, kind: output, shape index: {}]
  %s16 = sld [smem:[#allocation0]]
  $region70: #{generalized_rcnn_forward.1} parent=0
    _
  %s18 = ssub.s32 1, %s16
  %s19 = scalar_select 0, %s18, %s16
  // Predicated region
  $region2: #{generalized_rcnn_forward.1} parent=0 // pred_check
    _
  $region3: #{generalized_rcnn_forward.1} parent=0 // pred_check_branch
    %21 = sbr.rel (0) target = $region5
  $region4: #{generalized_rcnn_forward.1} parent=0 // pred_region
    _
  $region5: #{generalized_rcnn_forward.1} parent=0 // pred_fallthru
    _
  // Predicated region
  $region6: #{generalized_rcnn_forward.1} parent=0 // pred_check
    _
  $region7: #{generalized_rcnn_forward.1} parent=0 // pred_check_branch
    %23 = sbr.rel (0) target = $region9
  $region8: #{generalized_rcnn_forward.1} parent=0 // pred_region
    _
  $region9: #{generalized_rcnn_forward.1} parent=0 // pred_fallthru
    _
  // Predicated region
  $region10: #{generalized_rcnn_forward.1} parent=0 // pred_check
    _
  $region11: #{generalized_rcnn_forward.1} parent=0 // pred_check_branch
    %25 = sbr.rel (0) target = $region13
  $region12: #{generalized_rcnn_forward.1} parent=0 // pred_region
    _
  $region13: #{generalized_rcnn_forward.1} parent=0 // pred_fallthru
    _
  // Predicated region
  $region14: #{generalized_rcnn_forward.1} parent=0 // pred_check
    _
  $region15: #{generalized_rcnn_forward.1} parent=0 // pred_check_branch
    %27 = sbr.rel (0) target = $region17
  $region16: #{generalized_rcnn_forward.1} parent=0 // pred_region
    _
  $region17: #{generalized_rcnn_forward.1} parent=0 // pred_fallthru
    _
  // Predicated region
  $region18: #{generalized_rcnn_forward.1} parent=0 // pred_check
    _
  $region19: #{generalized_rcnn_forward.1} parent=0 // pred_check_branch
    %29 = sbr.rel (0) target = $region21
  $region20: #{generalized_rcnn_forward.1} parent=0 // pred_region
    _
  $region21: #{generalized_rcnn_forward.1} parent=0 // pred_fallthru
    _
  // Predicated region
  $region22: #{generalized_rcnn_forward.1} parent=0 // pred_check
    _
  $region23: #{generalized_rcnn_forward.1} parent=0 // pred_check_branch
    %31 = sbr.rel (0) target = $region25
  $region24: #{generalized_rcnn_forward.1} parent=0 // pred_region
    _
  $region25: #{generalized_rcnn_forward.1} parent=0 // pred_fallthru
    _
  // Predicated region
  $region26: #{generalized_rcnn_forward.1} parent=0 // pred_check
    _
  $region27: #{generalized_rcnn_forward.1} parent=0 // pred_check_branch
    %33 = sbr.rel (0) target = $region29
  $region28: #{generalized_rcnn_forward.1} parent=0 // pred_region
    _
  $region29: #{generalized_rcnn_forward.1} parent=0 // pred_fallthru
    _
  // Predicated region
  $region30: #{generalized_rcnn_forward.1} parent=0 // pred_check
    _
  $region31: #{generalized_rcnn_forward.1} parent=0 // pred_check_branch
    %35 = sbr.rel (0) target = $region33
  $region32: #{generalized_rcnn_forward.1} parent=0 // pred_region
    _
  $region33: #{generalized_rcnn_forward.1} parent=0 // pred_fallthru
    _
  // Predicated region
  $region34: #{generalized_rcnn_forward.1} parent=0 // pred_check
    _
  $region35: #{generalized_rcnn_forward.1} parent=0 // pred_check_branch
    %37 = sbr.rel (0) target = $region37
  $region36: #{generalized_rcnn_forward.1} parent=0 // pred_region
    _
  $region37: #{generalized_rcnn_forward.1} parent=0 // pred_fallthru
    _
  // Predicated region
  $region38: #{generalized_rcnn_forward.1} parent=0 // pred_check
    _
  $region39: #{generalized_rcnn_forward.1} parent=0 // pred_check_branch
    %39 = sbr.rel (0) target = $region41
  $region40: #{generalized_rcnn_forward.1} parent=0 // pred_region
    _
  $region41: #{generalized_rcnn_forward.1} parent=0 // pred_fallthru
    _
  // Predicated region
  $region42: #{generalized_rcnn_forward.1} parent=0 // pred_check
    _
  $region43: #{generalized_rcnn_forward.1} parent=0 // pred_check_branch
    %41 = sbr.rel (0) target = $region45
  $region44: #{generalized_rcnn_forward.1} parent=0 // pred_region
    _
  $region45: #{generalized_rcnn_forward.1} parent=0 // pred_fallthru
    _
  // Predicated region
  $region46: #{generalized_rcnn_forward.1} parent=0 // pred_check
    _
  $region47: #{generalized_rcnn_forward.1} parent=0 // pred_check_branch
    %43 = sbr.rel (0) target = $region49
  $region48: #{generalized_rcnn_forward.1} parent=0 // pred_region
    _
  $region49: #{generalized_rcnn_forward.1} parent=0 // pred_fallthru
    _
  // Predicated region
  $region50: #{generalized_rcnn_forward.1} parent=0 // pred_check
    _
  $region51: #{generalized_rcnn_forward.1} parent=0 // pred_check_branch
    %45 = sbr.rel (0) target = $region53
  $region52: #{generalized_rcnn_forward.1} parent=0 // pred_region
    _
  $region53: #{generalized_rcnn_forward.1} parent=0 // pred_fallthru
    _
  // Predicated region
  $region54: #{generalized_rcnn_forward.1} parent=0 // pred_check
    _
  $region55: #{generalized_rcnn_forward.1} parent=0 // pred_check_branch
    %47 = sbr.rel (0) target = $region57
  $region56: #{generalized_rcnn_forward.1} parent=0 // pred_region
    _
  $region57: #{generalized_rcnn_forward.1} parent=0 // pred_fallthru
    _
  // Predicated region
  $region58: #{generalized_rcnn_forward.1} parent=0 // pred_check
    _
  $region59: #{generalized_rcnn_forward.1} parent=0 // pred_check_branch
    %49 = sbr.rel (0) target = $region61
  $region60: #{generalized_rcnn_forward.1} parent=0 // pred_region
    _
  $region61: #{generalized_rcnn_forward.1} parent=0 // pred_fallthru
    _
  %v51 = vld [vmem:[%s0] sm:$0xf]
  %v52 = vld [vmem:[%s0 + $0x4] sm:$0xf]
  %v53 = vld [vmem:[%s0 + $0x8] sm:$0xf]
  %v54 = vld [vmem:[%s0 + $0xc] sm:$0xf]
  %v55 = vld [vmem:[%s1] sm:$0xf]
  %v56 = vld [vmem:[%s1 + $0x4] sm:$0xf]
  %v57 = vld [vmem:[%s1 + $0x8] sm:$0xf]
  %v58 = vld [vmem:[%s1 + $0xc] sm:$0xf]
  %v63 = vunpack.c.l.b16 %v55
  %v64 = vunpack.c.l.b16 %v56
  %v65 = vunpack.c.l.b16 %v57
  %v66 = vunpack.c.l.b16 %v58
  %v67 = vpack.c.b16 %v64, %v63
  %v68 = vpack.c.b16 %v66, %v65
  %v73 = vunpack.c.l.b16 %v51
  %v74 = vunpack.c.l.b16 %v52
  %v75 = vunpack.c.l.b16 %v53
  %v76 = vunpack.c.l.b16 %v54
  %v77 = vpack.c.b16 %v74, %v73
  %v78 = vpack.c.b16 %v76, %v75
  %vm81 = vcmask 261120
  %v83 = vsel %vm81, %v67, 0
  %v86 = vsel %vm81, %v68, 0
  %88 = vmatprep.subr.bf16.mxu0 0
  %89 = vmatpush1.bf16.msra.mxu0 0
  %90 = vmatprep.subr.bf16.mxu0 0
  %91 = vmatpush1.bf16.msra.mxu0 0
  %92 = vmatprep.subr.bf16.mxu0 0
  %93 = vmatpush1.bf16.msra.mxu0 0
  %94 = vmatprep.subr.bf16.mxu0 0
  %95 = vmatpush1.bf16.msra.mxu0 0
  %96 = vmatprep.subr.bf16.mxu0 0
  %97 = vmatpush1.bf16.msra.mxu0 0
  %98 = vmatprep.subr.bf16.mxu0 0
  %99 = vmatpush1.bf16.msra.mxu0 0
  %100 = vmatprep.subr.bf16.mxu0 0
  %101 = vmatpush1.bf16.msra.mxu0 %v78
  %102 = vmatprep.subr.bf16.mxu0 0
  %103 = vmatpush1.bf16.msra.mxu0 %v77
  %104 = vmatprep.subr.bf16.mxu0 0
  %105 = vmatpush2.bf16.msra.mxu0 0
  %106 = vmatprep.subr.bf16.mxu0 0
  %107 = vmatpush2.bf16.msra.mxu0 0
  %108 = vmatprep.subr.bf16.mxu0 0
  %109 = vmatpush2.bf16.msra.mxu0 0
  %110 = vmatprep.subr.bf16.mxu0 0
  %111 = vmatpush2.bf16.msra.mxu0 0
  %112 = vmatprep.subr.bf16.mxu0 0
  %113 = vmatpush2.bf16.msra.mxu0 0
  %114 = vmatprep.subr.bf16.mxu0 0
  %115 = vmatpush2.bf16.msra.mxu0 0
  %116 = vmatprep.subr.bf16.mxu0 0
  %117 = vmatpush2.bf16.msra.mxu0 0
  %118 = vmatprep.subr.bf16.mxu0 0
  %119 = vmatpush2.bf16.msra.mxu0 0
  %120 = vmatprep.mubr.bf16.mxu0 0
  %121 = vmatmul.mubr.bf16.gmra.mxu0 %v83
  %v122 = vpop.f32.mrf.mxu0
  %v123 = vadd.f32 0.0, %v122
  %v124 = vpop.f32.mrf.mxu0
  %v125 = vpop.f32.mrf.mxu0
  %v126 = vadd.f32 0.0, %v125
  %v127 = vpop.f32.mrf.mxu0
  %128 = vmatprep.mubr.bf16.mxu0 0
  %129 = vmatmul.mubr.bf16.gmra.mxu0 %v86
  %v130 = vpop.f32.mrf.mxu0
  %v131 = vadd.f32 0.0, %v130
  %v132 = vpop.f32.mrf.mxu0
  %v133 = vpop.f32.mrf.mxu0
  %v134 = vadd.f32 0.0, %v133
  %v135 = vpop.f32.mrf.mxu0
  %136 = vdwg.mxu0
  %v137 = vpack.c.bf16 %v126, %v123
  %v138 = vpack.c.bf16 %v134, %v131
  %v139 = vld [vmem:[%s2] sm:$0xff]
  %v140 = vld [vmem:[%s2 + $0x8] sm:$0xff]
  %v141 = vld [vmem:[%s2 + $0x10] sm:$0xff]
  %v142 = vld [vmem:[%s2 + $0x18] sm:$0xff]
  %v143 = vld [vmem:[%s2 + $0x20] sm:$0xff]
  %v144 = vld [vmem:[%s2 + $0x28] sm:$0xff]
  %v145 = vld [vmem:[%s2 + $0x30] sm:$0xff]
  %v146 = vld [vmem:[%s2 + $0x38] sm:$0xff]
  %s147 = scalar_lea.vmem %s1, 16
  %v148 = vld [vmem:[%s147] sm:$0xf]
  %v149 = vld [vmem:[%s147 + $0x4] sm:$0xf]
  %v150 = vld [vmem:[%s147 + $0x8] sm:$0xf]
  %v151 = vld [vmem:[%s147 + $0xc] sm:$0xf]
  %v156 = vunpack.c.l.b16 %v148
  %v157 = vunpack.c.l.b16 %v149
  %v158 = vunpack.c.l.b16 %v150
  %v159 = vunpack.c.l.b16 %v151
  %v160 = vpack.c.b16 %v157, %v156
  %v161 = vpack.c.b16 %v159, %v158
  %v163 = vsel %vm81, %v160, 0
  %v166 = vsel %vm81, %v161, 0
  %168 = vmatprep.subr.bf16.mxu0 0
  %169 = vmatpush1.bf16.msra.mxu0 0
  %170 = vmatprep.subr.bf16.mxu0 0
  %171 = vmatpush1.bf16.msra.mxu0 0
  %172 = vmatprep.subr.bf16.mxu0 0
  %173 = vmatpush1.bf16.msra.mxu0 0
  %174 = vmatprep.subr.bf16.mxu0 0
  %175 = vmatpush1.bf16.msra.mxu0 0
  %176 = vmatprep.subr.bf16.mxu0 0
  %177 = vmatpush1.bf16.msra.mxu0 0
  %178 = vmatprep.subr.bf16.mxu0 0
  %179 = vmatpush1.bf16.msra.mxu0 0
  %180 = vmatprep.subr.bf16.mxu0 0
  %181 = vmatpush1.bf16.msra.mxu0 %v78
  %182 = vmatprep.subr.bf16.mxu0 0
  %183 = vmatpush1.bf16.msra.mxu0 %v77
  %184 = vmatprep.subr.bf16.mxu0 0
  %185 = vmatpush2.bf16.msra.mxu0 0
  %186 = vmatprep.subr.bf16.mxu0 0
  %187 = vmatpush2.bf16.msra.mxu0 0
  %188 = vmatprep.subr.bf16.mxu0 0
  %189 = vmatpush2.bf16.msra.mxu0 0
  %190 = vmatprep.subr.bf16.mxu0 0
  %191 = vmatpush2.bf16.msra.mxu0 0
  %192 = vmatprep.subr.bf16.mxu0 0
  %193 = vmatpush2.bf16.msra.mxu0 0
  %194 = vmatprep.subr.bf16.mxu0 0
  %195 = vmatpush2.bf16.msra.mxu0 0
  %196 = vmatprep.subr.bf16.mxu0 0
  %197 = vmatpush2.bf16.msra.mxu0 0
  %198 = vmatprep.subr.bf16.mxu0 0
  %199 = vmatpush2.bf16.msra.mxu0 0
  %200 = vmatprep.mubr.bf16.mxu0 0
  %201 = vmatmul.mubr.bf16.gmra.mxu0 %v163
  %v202 = vpop.f32.mrf.mxu0
  %v203 = vadd.f32 0.0, %v202
  %v204 = vpop.f32.mrf.mxu0
  %v205 = vpop.f32.mrf.mxu0
  %v206 = vadd.f32 0.0, %v205
  %v207 = vpop.f32.mrf.mxu0
  %208 = vmatprep.mubr.bf16.mxu0 0
  %209 = vmatmul.mubr.bf16.gmra.mxu0 %v166
  %v210 = vpop.f32.mrf.mxu0
  %v211 = vadd.f32 0.0, %v210
  %v212 = vpop.f32.mrf.mxu0
  %v213 = vpop.f32.mrf.mxu0
  %v214 = vadd.f32 0.0, %v213
  %v215 = vpop.f32.mrf.mxu0
  %216 = vdwg.mxu0
  %v217 = vpack.c.bf16 %v206, %v203
  %v218 = vpack.c.bf16 %v214, %v211
  %s219 = scalar_lea.vmem %s2, 64
  %v220 = vld [vmem:[%s219] sm:$0xff]
  %v221 = vld [vmem:[%s219 + $0x8] sm:$0xff]
  %v222 = vld [vmem:[%s219 + $0x10] sm:$0xff]
  %v223 = vld [vmem:[%s219 + $0x18] sm:$0xff]
  %v224 = vld [vmem:[%s219 + $0x20] sm:$0xff]
  %v225 = vld [vmem:[%s219 + $0x28] sm:$0xff]
  %v226 = vld [vmem:[%s219 + $0x30] sm:$0xff]
  %v227 = vld [vmem:[%s219 + $0x38] sm:$0xff]
  %v236 = vunpack.c.l.b16 %v220
  %v237 = vunpack.c.h.b16 %v220
  %v238 = vunpack.c.l.b16 %v221
  %v239 = vunpack.c.h.b16 %v221
  %v240 = vunpack.c.l.b16 %v222
  %v241 = vunpack.c.h.b16 %v222
  %v242 = vunpack.c.l.b16 %v223
  %v243 = vunpack.c.h.b16 %v223
  %v244 = vunpack.c.l.b16 %v224
  %v245 = vunpack.c.h.b16 %v224
  %v246 = vunpack.c.l.b16 %v225
  %v247 = vunpack.c.h.b16 %v225
  %v248 = vunpack.c.l.b16 %v226
  %v249 = vunpack.c.h.b16 %v226
  %v250 = vunpack.c.l.b16 %v227
  %v251 = vunpack.c.h.b16 %v227
  %v252 = vpack.c.b16 %v238, %v236
  %v253 = vpack.c.b16 %v239, %v237
  %v254 = vpack.c.b16 %v242, %v240
  %v255 = vpack.c.b16 %v243, %v241
  %v256 = vpack.c.b16 %v246, %v244
  %v257 = vpack.c.b16 %v247, %v245
  %v258 = vpack.c.b16 %v250, %v248
  %v259 = vpack.c.b16 %v251, %v249
  %vm268 = vcmask 523264
  %v270 = vsel %vm268, %v217, 0
  %v273 = vsel %vm268, %v218, 0
  %275 = vmatprep.subr.bf16.mxu0 0
  %276 = vmatpush1.bf16.msra.mxu0 0
  %277 = vmatprep.subr.bf16.mxu0 0
  %278 = vmatpush1.bf16.msra.mxu0 0
  %279 = vmatprep.subr.bf16.mxu0 0
  %280 = vmatpush1.bf16.msra.mxu0 0
  %281 = vmatprep.subr.bf16.mxu0 0
  %282 = vmatpush1.bf16.msra.mxu0 0
  %283 = vmatprep.subr.bf16.mxu0 %v259
  %284 = vmatpush1.bf16.msra.mxu0 %v258
  %285 = vmatprep.subr.bf16.mxu0 %v257
  %286 = vmatpush1.bf16.msra.mxu0 %v256
  %287 = vmatprep.subr.bf16.mxu0 %v255
  %288 = vmatpush1.bf16.msra.mxu0 %v254
  %289 = vmatprep.subr.bf16.mxu0 %v253
  %290 = vmatpush1.bf16.msra.mxu0 %v252
  %291 = vmatprep.subr.bf16.mxu0 0
  %292 = vmatpush2.bf16.msra.mxu0 0
  %293 = vmatprep.subr.bf16.mxu0 0
  %294 = vmatpush2.bf16.msra.mxu0 0
  %295 = vmatprep.subr.bf16.mxu0 0
  %296 = vmatpush2.bf16.msra.mxu0 0
  %297 = vmatprep.subr.bf16.mxu0 0
  %298 = vmatpush2.bf16.msra.mxu0 0
  %299 = vmatprep.subr.bf16.mxu0 0
  %300 = vmatpush2.bf16.msra.mxu0 0
  %301 = vmatprep.subr.bf16.mxu0 0
  %302 = vmatpush2.bf16.msra.mxu0 0
  %303 = vmatprep.subr.bf16.mxu0 0
  %304 = vmatpush2.bf16.msra.mxu0 0
  %305 = vmatprep.subr.bf16.mxu0 0
  %306 = vmatpush2.bf16.msra.mxu0 0
  %307 = vmatprep.mubr.bf16.mxu0 0
  %308 = vmatmul.mubr.bf16.gmra.mxu0 %v270
  %v309 = vpop.f32.mrf.mxu0
  %v310 = vadd.f32 0.0, %v309
  %v311 = vpop.f32.mrf.mxu0
  %v312 = vadd.f32 0.0, %v311
  %v313 = vpop.f32.mrf.mxu0
  %v314 = vadd.f32 0.0, %v313
  %v315 = vpop.f32.mrf.mxu0
  %v316 = vadd.f32 0.0, %v315
  %317 = vmatprep.mubr.bf16.mxu0 0
  %318 = vmatmul.mubr.bf16.gmra.mxu0 %v273
  %v319 = vpop.f32.mrf.mxu0
  %v320 = vadd.f32 0.0, %v319
  %v321 = vpop.f32.mrf.mxu0
  %v322 = vadd.f32 0.0, %v321
  %v323 = vpop.f32.mrf.mxu0
  %v324 = vadd.f32 0.0, %v323
  %v325 = vpop.f32.mrf.mxu0
  %v326 = vadd.f32 0.0, %v325
  %327 = vdwg.mxu0
  %v336 = vunpack.c.l.b16 %v139
  %v337 = vunpack.c.h.b16 %v139
  %v338 = vunpack.c.l.b16 %v140
  %v339 = vunpack.c.h.b16 %v140
  %v340 = vunpack.c.l.b16 %v141
  %v341 = vunpack.c.h.b16 %v141
  %v342 = vunpack.c.l.b16 %v142
  %v343 = vunpack.c.h.b16 %v142
  %v344 = vunpack.c.l.b16 %v143
  %v345 = vunpack.c.h.b16 %v143
  %v346 = vunpack.c.l.b16 %v144
  %v347 = vunpack.c.h.b16 %v144
  %v348 = vunpack.c.l.b16 %v145
  %v349 = vunpack.c.h.b16 %v145
  %v350 = vunpack.c.l.b16 %v146
  %v351 = vunpack.c.h.b16 %v146
  %v352 = vpack.c.b16 %v338, %v336
  %v353 = vpack.c.b16 %v339, %v337
  %v354 = vpack.c.b16 %v342, %v340
  %v355 = vpack.c.b16 %v343, %v341
  %v356 = vpack.c.b16 %v346, %v344
  %v357 = vpack.c.b16 %v347, %v345
  %v358 = vpack.c.b16 %v350, %v348
  %v359 = vpack.c.b16 %v351, %v349
  %v369 = vsel %vm268, %v137, 0
  %v372 = vsel %vm268, %v138, 0
  %374 = vmatprep.subr.bf16.mxu0 0
  %375 = vmatpush1.bf16.msra.mxu0 0
  %376 = vmatprep.subr.bf16.mxu0 0
  %377 = vmatpush1.bf16.msra.mxu0 0
  %378 = vmatprep.subr.bf16.mxu0 0
  %379 = vmatpush1.bf16.msra.mxu0 0
  %380 = vmatprep.subr.bf16.mxu0 0
  %381 = vmatpush1.bf16.msra.mxu0 0
  %382 = vmatprep.subr.bf16.mxu0 %v359
  %383 = vmatpush1.bf16.msra.mxu0 %v358
  %384 = vmatprep.subr.bf16.mxu0 %v357
  %385 = vmatpush1.bf16.msra.mxu0 %v356
  %386 = vmatprep.subr.bf16.mxu0 %v355
  %387 = vmatpush1.bf16.msra.mxu0 %v354
  %388 = vmatprep.subr.bf16.mxu0 %v353
  %389 = vmatpush1.bf16.msra.mxu0 %v352
  %390 = vmatprep.subr.bf16.mxu0 0
  %391 = vmatpush2.bf16.msra.mxu0 0
  %392 = vmatprep.subr.bf16.mxu0 0
  %393 = vmatpush2.bf16.msra.mxu0 0
  %394 = vmatprep.subr.bf16.mxu0 0
  %395 = vmatpush2.bf16.msra.mxu0 0
  %396 = vmatprep.subr.bf16.mxu0 0
  %397 = vmatpush2.bf16.msra.mxu0 0
  %398 = vmatprep.subr.bf16.mxu0 0
  %399 = vmatpush2.bf16.msra.mxu0 0
  %400 = vmatprep.subr.bf16.mxu0 0
  %401 = vmatpush2.bf16.msra.mxu0 0
  %402 = vmatprep.subr.bf16.mxu0 0
  %403 = vmatpush2.bf16.msra.mxu0 0
  %404 = vmatprep.subr.bf16.mxu0 0
  %405 = vmatpush2.bf16.msra.mxu0 0
  %406 = vmatprep.mubr.bf16.mxu0 0
  %407 = vmatmul.mubr.bf16.gmra.mxu0 %v369
  %v408 = vpop.f32.mrf.mxu0
  %v409 = vadd.f32 %v310, %v408
  %v410 = vpop.f32.mrf.mxu0
  %v411 = vadd.f32 %v312, %v410
  %v412 = vpop.f32.mrf.mxu0
  %v413 = vadd.f32 %v314, %v412
  %v414 = vpop.f32.mrf.mxu0
  %v415 = vadd.f32 %v316, %v414
  %416 = vmatprep.mubr.bf16.mxu0 0
  %417 = vmatmul.mubr.bf16.gmra.mxu0 %v372
  %v418 = vpop.f32.mrf.mxu0
  %v419 = vadd.f32 %v320, %v418
  %v420 = vpop.f32.mrf.mxu0
  %v421 = vadd.f32 %v322, %v420
  %v422 = vpop.f32.mrf.mxu0
  %v423 = vadd.f32 %v324, %v422
  %v424 = vpop.f32.mrf.mxu0
  %v425 = vadd.f32 %v326, %v424
  %426 = vdwg.mxu0
  %s427 = scalar_lea.vmem %s1, 32
  %v428 = vld [vmem:[%s427] sm:$0xf]
  %v429 = vld [vmem:[%s427 + $0x4] sm:$0xf]
  %v430 = vld [vmem:[%s427 + $0x8] sm:$0xf]
  %v431 = vld [vmem:[%s427 + $0xc] sm:$0xf]
  %v436 = vunpack.c.l.b16 %v428
  %v437 = vunpack.c.l.b16 %v429
  %v438 = vunpack.c.l.b16 %v430
  %v439 = vunpack.c.l.b16 %v431
  %v440 = vpack.c.b16 %v437, %v436
  %v441 = vpack.c.b16 %v439, %v438
  %v443 = vsel %vm81, %v440, 0
  %v446 = vsel %vm81, %v441, 0
  %448 = vmatprep.subr.bf16.mxu0 0
  %449 = vmatpush1.bf16.msra.mxu0 0
  %450 = vmatprep.subr.bf16.mxu0 0
  %451 = vmatpush1.bf16.msra.mxu0 0
  %452 = vmatprep.subr.bf16.mxu0 0
  %453 = vmatpush1.bf16.msra.mxu0 0
  %454 = vmatprep.subr.bf16.mxu0 0
  %455 = vmatpush1.bf16.msra.mxu0 0
  %456 = vmatprep.subr.bf16.mxu0 0
  %457 = vmatpush1.bf16.msra.mxu0 0
  %458 = vmatprep.subr.bf16.mxu0 0
  %459 = vmatpush1.bf16.msra.mxu0 0
  %460 = vmatprep.subr.bf16.mxu0 0
  %461 = vmatpush1.bf16.msra.mxu0 %v78
  %462 = vmatprep.subr.bf16.mxu0 0
  %463 = vmatpush1.bf16.msra.mxu0 %v77
  %464 = vmatprep.subr.bf16.mxu0 0
  %465 = vmatpush2.bf16.msra.mxu0 0
  %466 = vmatprep.subr.bf16.mxu0 0
  %467 = vmatpush2.bf16.msra.mxu0 0
  %468 = vmatprep.subr.bf16.mxu0 0
  %469 = vmatpush2.bf16.msra.mxu0 0
  %470 = vmatprep.subr.bf16.mxu0 0
  %471 = vmatpush2.bf16.msra.mxu0 0
  %472 = vmatprep.subr.bf16.mxu0 0
  %473 = vmatpush2.bf16.msra.mxu0 0
  %474 = vmatprep.subr.bf16.mxu0 0
  %475 = vmatpush2.bf16.msra.mxu0 0
  %476 = vmatprep.subr.bf16.mxu0 0
  %477 = vmatpush2.bf16.msra.mxu0 0
  %478 = vmatprep.subr.bf16.mxu0 0
  %479 = vmatpush2.bf16.msra.mxu0 0
  %480 = vmatprep.mubr.bf16.mxu0 0
  %481 = vmatmul.mubr.bf16.gmra.mxu0 %v443
  %v482 = vpop.f32.mrf.mxu0
  %v483 = vadd.f32 0.0, %v482
  %v484 = vpop.f32.mrf.mxu0
  %v485 = vpop.f32.mrf.mxu0
  %v486 = vadd.f32 0.0, %v485
  %v487 = vpop.f32.mrf.mxu0
  %488 = vmatprep.mubr.bf16.mxu0 0
  %489 = vmatmul.mubr.bf16.gmra.mxu0 %v446
  %v490 = vpop.f32.mrf.mxu0
  %v491 = vadd.f32 0.0, %v490
  %v492 = vpop.f32.mrf.mxu0
  %v493 = vpop.f32.mrf.mxu0
  %v494 = vadd.f32 0.0, %v493
  %v495 = vpop.f32.mrf.mxu0
  %496 = vdwg.mxu0
  %v497 = vpack.c.bf16 %v486, %v483
  %v498 = vpack.c.bf16 %v494, %v491
  %s499 = scalar_lea.vmem %s2, 128
  %v500 = vld [vmem:[%s499] sm:$0xff]
  %v501 = vld [vmem:[%s499 + $0x8] sm:$0xff]
  %v502 = vld [vmem:[%s499 + $0x10] sm:$0xff]
  %v503 = vld [vmem:[%s499 + $0x18] sm:$0xff]
  %v504 = vld [vmem:[%s499 + $0x20] sm:$0xff]
  %v505 = vld [vmem:[%s499 + $0x28] sm:$0xff]
  %v506 = vld [vmem:[%s499 + $0x30] sm:$0xff]
  %v507 = vld [vmem:[%s499 + $0x38] sm:$0xff]
  %v516 = vunpack.c.l.b16 %v500
  %v517 = vunpack.c.h.b16 %v500
  %v518 = vunpack.c.l.b16 %v501
  %v519 = vunpack.c.h.b16 %v501
  %v520 = vunpack.c.l.b16 %v502
  %v521 = vunpack.c.h.b16 %v502
  %v522 = vunpack.c.l.b16 %v503
  %v523 = vunpack.c.h.b16 %v503
  %v524 = vunpack.c.l.b16 %v504
  %v525 = vunpack.c.h.b16 %v504
  %v526 = vunpack.c.l.b16 %v505
  %v527 = vunpack.c.h.b16 %v505
  %v528 = vunpack.c.l.b16 %v506
  %v529 = vunpack.c.h.b16 %v506
  %v530 = vunpack.c.l.b16 %v507
  %v531 = vunpack.c.h.b16 %v507
  %v532 = vpack.c.b16 %v518, %v516
  %v533 = vpack.c.b16 %v519, %v517
  %v534 = vpack.c.b16 %v522, %v520
  %v535 = vpack.c.b16 %v523, %v521
  %v536 = vpack.c.b16 %v526, %v524
  %v537 = vpack.c.b16 %v527, %v525
  %v538 = vpack.c.b16 %v530, %v528
  %v539 = vpack.c.b16 %v531, %v529
  %v549 = vsel %vm268, %v497, 0
  %v552 = vsel %vm268, %v498, 0
  %554 = vmatprep.subr.bf16.mxu0 0
  %555 = vmatpush1.bf16.msra.mxu0 0
  %556 = vmatprep.subr.bf16.mxu0 0
  %557 = vmatpush1.bf16.msra.mxu0 0
  %558 = vmatprep.subr.bf16.mxu0 0
  %559 = vmatpush1.bf16.msra.mxu0 0
  %560 = vmatprep.subr.bf16.mxu0 0
  %561 = vmatpush1.bf16.msra.mxu0 0
  %562 = vmatprep.subr.bf16.mxu0 %v539
  %563 = vmatpush1.bf16.msra.mxu0 %v538
  %564 = vmatprep.subr.bf16.mxu0 %v537
  %565 = vmatpush1.bf16.msra.mxu0 %v536
  %566 = vmatprep.subr.bf16.mxu0 %v535
  %567 = vmatpush1.bf16.msra.mxu0 %v534
  %568 = vmatprep.subr.bf16.mxu0 %v533
  %569 = vmatpush1.bf16.msra.mxu0 %v532
  %570 = vmatprep.subr.bf16.mxu0 0
  %571 = vmatpush2.bf16.msra.mxu0 0
  %572 = vmatprep.subr.bf16.mxu0 0
  %573 = vmatpush2.bf16.msra.mxu0 0
  %574 = vmatprep.subr.bf16.mxu0 0
  %575 = vmatpush2.bf16.msra.mxu0 0
  %576 = vmatprep.subr.bf16.mxu0 0
  %577 = vmatpush2.bf16.msra.mxu0 0
  %578 = vmatprep.subr.bf16.mxu0 0
  %579 = vmatpush2.bf16.msra.mxu0 0
  %580 = vmatprep.subr.bf16.mxu0 0
  %581 = vmatpush2.bf16.msra.mxu0 0
  %582 = vmatprep.subr.bf16.mxu0 0
  %583 = vmatpush2.bf16.msra.mxu0 0
  %584 = vmatprep.subr.bf16.mxu0 0
  %585 = vmatpush2.bf16.msra.mxu0 0
  %586 = vmatprep.mubr.bf16.mxu0 0
  %587 = vmatmul.mubr.bf16.gmra.mxu0 %v549
  %v588 = vpop.f32.mrf.mxu0
  %v589 = vadd.f32 0.0, %v588
  %v590 = vpop.f32.mrf.mxu0
  %v591 = vadd.f32 0.0, %v590
  %v592 = vpop.f32.mrf.mxu0
  %v593 = vadd.f32 0.0, %v592
  %v594 = vpop.f32.mrf.mxu0
  %v595 = vadd.f32 0.0, %v594
  %596 = vmatprep.mubr.bf16.mxu0 0
  %597 = vmatmul.mubr.bf16.gmra.mxu0 %v552
  %v598 = vpop.f32.mrf.mxu0
  %v599 = vadd.f32 0.0, %v598
  %v600 = vpop.f32.mrf.mxu0
  %v601 = vadd.f32 0.0, %v600
  %v602 = vpop.f32.mrf.mxu0
  %v603 = vadd.f32 0.0, %v602
  %v604 = vpop.f32.mrf.mxu0
  %v605 = vadd.f32 0.0, %v604
  %606 = vdwg.mxu0
  %v607 = vadd.f32 %v409, %v589
  %v608 = vadd.f32 %v411, %v591
  %v609 = vadd.f32 %v413, %v593
  %v610 = vadd.f32 %v415, %v595
  %v611 = vadd.f32 %v419, %v599
  %v612 = vadd.f32 %v421, %v601
  %v613 = vadd.f32 %v423, %v603
  %v614 = vadd.f32 %v425, %v605
  %v615 = vld [vmem:[%s3] sm:$0x3]
  %v617 = vlaneseq
  %v618 = vshrl.u32 %v617, 7
  %v619 = vsub.s32 0, %v618
  %v620 = vrot.slane %v615, %v619
  %v621 = vlaneseq
  %v622 = vshrl.u32 %v621, 7
  %v623 = vsub.s32 1, %v622
  %v624 = vrot.slane %v615, %v623
  %v627 = vadd.f32 %v607, %v620
  %v628 = vadd.f32 %v608, %v624
  %v629 = vadd.f32 %v609, %v620
  %v630 = vadd.f32 %v610, %v624
  %v631 = vadd.f32 %v611, %v620
  %v632 = vadd.f32 %v612, %v624
  %v633 = vadd.f32 %v613, %v620
  %v634 = vadd.f32 %v614, %v624
  %v635 = vmax.f32 %v627, 0.0
  %v636 = vmax.f32 %v628, 0.0
  %v637 = vmax.f32 %v629, 0.0
  %v638 = vmax.f32 %v630, 0.0
  %v639 = vmax.f32 %v631, 0.0
  %v640 = vmax.f32 %v632, 0.0
  %v641 = vmax.f32 %v633, 0.0
  %v642 = vmax.f32 %v634, 0.0
  %v643 = vpack.c.bf16 %v637, %v635
  %v644 = vpack.c.bf16 %v638, %v636
  %v645 = vpack.c.bf16 %v641, %v639
  %v646 = vpack.c.bf16 %v642, %v640
  %v647 = vld [vmem:[%s4] sm:$0xf]
  %v648 = vld [vmem:[%s4 + $0x4] sm:$0xf]
  %v651 = vunpack.c.l.b16 %v647
  %v652 = vunpack.c.l.b16 %v648
  %v653 = vpack.c.b16 %v652, %v651
  %v655 = vsel %vm81, %v653, 0
  %657 = vmatprep.subr.bf16.mxu0 0
  %658 = vmatpush1.bf16.msra.mxu0 0
  %659 = vmatprep.subr.bf16.mxu0 0
  %660 = vmatpush1.bf16.msra.mxu0 0
  %661 = vmatprep.subr.bf16.mxu0 0
  %662 = vmatpush1.bf16.msra.mxu0 0
  %663 = vmatprep.subr.bf16.mxu0 0
  %664 = vmatpush1.bf16.msra.mxu0 0
  %665 = vmatprep.subr.bf16.mxu0 0
  %666 = vmatpush1.bf16.msra.mxu0 0
  %667 = vmatprep.subr.bf16.mxu0 0
  %668 = vmatpush1.bf16.msra.mxu0 0
  %669 = vmatprep.subr.bf16.mxu0 %v646
  %670 = vmatpush1.bf16.msra.mxu0 %v645
  %671 = vmatprep.subr.bf16.mxu0 %v644
  %672 = vmatpush1.bf16.msra.mxu0 %v643
  %673 = vmatprep.subr.bf16.mxu0 0
  %674 = vmatpush2.bf16.msra.mxu0 0
  %675 = vmatprep.subr.bf16.mxu0 0
  %676 = vmatpush2.bf16.msra.mxu0 0
  %677 = vmatprep.subr.bf16.mxu0 0
  %678 = vmatpush2.bf16.msra.mxu0 0
  %679 = vmatprep.subr.bf16.mxu0 0
  %680 = vmatpush2.bf16.msra.mxu0 0
  %681 = vmatprep.subr.bf16.mxu0 0
  %682 = vmatpush2.bf16.msra.mxu0 0
  %683 = vmatprep.subr.bf16.mxu0 0
  %684 = vmatpush2.bf16.msra.mxu0 0
  %685 = vmatprep.subr.bf16.mxu0 0
  %686 = vmatpush2.bf16.msra.mxu0 0
  %687 = vmatprep.subr.bf16.mxu0 0
  %688 = vmatpush2.bf16.msra.mxu0 0
  %689 = vmatprep.mubr.bf16.mxu0 0
  %690 = vmatmul.mubr.bf16.gmra.mxu0 %v655
  %v691 = vpop.f32.mrf.mxu0
  %v692 = vadd.f32 0.0, %v691
  %v693 = vpop.f32.mrf.mxu0
  %v694 = vadd.f32 0.0, %v693
  %v695 = vpop.f32.mrf.mxu0
  %v696 = vadd.f32 0.0, %v695
  %v697 = vpop.f32.mrf.mxu0
  %v698 = vadd.f32 0.0, %v697
  %699 = vdwg.mxu0
  %v700 = vpack.c.bf16 %v696, %v692
  %v701 = vpack.c.bf16 %v698, %v694
  %v702 = vld [vmem:[%s5] sm:$0xff]
  %v703 = vld [vmem:[%s5 + $0x8] sm:$0xff]
  %v704 = vld [vmem:[%s5 + $0x10] sm:$0xff]
  %v705 = vld [vmem:[%s5 + $0x18] sm:$0xff]
  %v706 = vld [vmem:[%s5 + $0x20] sm:$0xff]
  %v707 = vld [vmem:[%s5 + $0x28] sm:$0xff]
  %v708 = vld [vmem:[%s5 + $0x30] sm:$0xff]
  %v709 = vld [vmem:[%s5 + $0x38] sm:$0xff]
  %v710 = vld [vmem:[%s5 + $0x40] sm:$0xff]
  %v711 = vld [vmem:[%s5 + $0x48] sm:$0xff]
  %v712 = vld [vmem:[%s5 + $0x50] sm:$0xff]
  %v713 = vld [vmem:[%s5 + $0x58] sm:$0xff]
  %v714 = vld [vmem:[%s5 + $0x60] sm:$0xff]
  %v715 = vld [vmem:[%s5 + $0x68] sm:$0xff]
  %v716 = vld [vmem:[%s5 + $0x70] sm:$0xff]
  %v717 = vld [vmem:[%s5 + $0x78] sm:$0xff]
  %v718 = vld [vmem:[%s5 + $0x80] sm:$0xff]
  %v719 = vld [vmem:[%s5 + $0x88] sm:$0xff]
  %v720 = vld [vmem:[%s5 + $0x90] sm:$0xff]
  %v721 = vld [vmem:[%s5 + $0x98] sm:$0xff]
  %v722 = vld [vmem:[%s5 + $0xa0] sm:$0xff]
  %v723 = vld [vmem:[%s5 + $0xa8] sm:$0xff]
  %v724 = vld [vmem:[%s5 + $0xb0] sm:$0xff]
  %v725 = vld [vmem:[%s5 + $0xb8] sm:$0xff]
  %v726 = vld [vmem:[%s5 + $0xc0] sm:$0xff]
  %v727 = vld [vmem:[%s5 + $0xc8] sm:$0xff]
  %v728 = vld [vmem:[%s5 + $0xd0] sm:$0xff]
  %v729 = vld [vmem:[%s5 + $0xd8] sm:$0xff]
  %v730 = vld [vmem:[%s5 + $0xe0] sm:$0xff]
  %v731 = vld [vmem:[%s5 + $0xe8] sm:$0xff]
  %v732 = vld [vmem:[%s5 + $0xf0] sm:$0xff]
  %v733 = vld [vmem:[%s5 + $0xf8] sm:$0xff]
  %s734 = scalar_lea.vmem %s4, 8
  %v735 = vld [vmem:[%s734] sm:$0xf]
  %v736 = vld [vmem:[%s734 + $0x4] sm:$0xf]
  %v739 = vunpack.c.l.b16 %v735
  %v740 = vunpack.c.l.b16 %v736
  %v741 = vpack.c.b16 %v740, %v739
  %v743 = vsel %vm81, %v741, 0
  %745 = vmatprep.subr.bf16.mxu0 0
  %746 = vmatpush1.bf16.msra.mxu0 0
  %747 = vmatprep.subr.bf16.mxu0 0
  %748 = vmatpush1.bf16.msra.mxu0 0
  %749 = vmatprep.subr.bf16.mxu0 0
  %750 = vmatpush1.bf16.msra.mxu0 0
  %751 = vmatprep.subr.bf16.mxu0 0
  %752 = vmatpush1.bf16.msra.mxu0 0
  %753 = vmatprep.subr.bf16.mxu0 0
  %754 = vmatpush1.bf16.msra.mxu0 0
  %755 = vmatprep.subr.bf16.mxu0 0
  %756 = vmatpush1.bf16.msra.mxu0 0
  %757 = vmatprep.subr.bf16.mxu0 %v646
  %758 = vmatpush1.bf16.msra.mxu0 %v645
  %759 = vmatprep.subr.bf16.mxu0 %v644
  %760 = vmatpush1.bf16.msra.mxu0 %v643
  %761 = vmatprep.subr.bf16.mxu0 0
  %762 = vmatpush2.bf16.msra.mxu0 0
  %763 = vmatprep.subr.bf16.mxu0 0
  %764 = vmatpush2.bf16.msra.mxu0 0
  %765 = vmatprep.subr.bf16.mxu0 0
  %766 = vmatpush2.bf16.msra.mxu0 0
  %767 = vmatprep.subr.bf16.mxu0 0
  %768 = vmatpush2.bf16.msra.mxu0 0
  %769 = vmatprep.subr.bf16.mxu0 0
  %770 = vmatpush2.bf16.msra.mxu0 0
  %771 = vmatprep.subr.bf16.mxu0 0
  %772 = vmatpush2.bf16.msra.mxu0 0
  %773 = vmatprep.subr.bf16.mxu0 0
  %774 = vmatpush2.bf16.msra.mxu0 0
  %775 = vmatprep.subr.bf16.mxu0 0
  %776 = vmatpush2.bf16.msra.mxu0 0
  %777 = vmatprep.mubr.bf16.mxu0 0
  %778 = vmatmul.mubr.bf16.gmra.mxu0 %v743
  %v779 = vpop.f32.mrf.mxu0
  %v780 = vadd.f32 0.0, %v779
  %v781 = vpop.f32.mrf.mxu0
  %v782 = vadd.f32 0.0, %v781
  %v783 = vpop.f32.mrf.mxu0
  %v784 = vadd.f32 0.0, %v783
  %v785 = vpop.f32.mrf.mxu0
  %v786 = vadd.f32 0.0, %v785
  %787 = vdwg.mxu0
  %v788 = vpack.c.bf16 %v784, %v780
  %v789 = vpack.c.bf16 %v786, %v782
  %s790 = scalar_lea.vmem %s5, 256
  %v791 = vld [vmem:[%s790] sm:$0xff]
  %v792 = vld [vmem:[%s790 + $0x8] sm:$0xff]
  %v793 = vld [vmem:[%s790 + $0x10] sm:$0xff]
  %v794 = vld [vmem:[%s790 + $0x18] sm:$0xff]
  %v795 = vld [vmem:[%s790 + $0x20] sm:$0xff]
  %v796 = vld [vmem:[%s790 + $0x28] sm:$0xff]
  %v797 = vld [vmem:[%s790 + $0x30] sm:$0xff]
  %v798 = vld [vmem:[%s790 + $0x38] sm:$0xff]
  %v799 = vld [vmem:[%s790 + $0x40] sm:$0xff]
  %v800 = vld [vmem:[%s790 + $0x48] sm:$0xff]
  %v801 = vld [vmem:[%s790 + $0x50] sm:$0xff]
  %v802 = vld [vmem:[%s790 + $0x58] sm:$0xff]
  %v803 = vld [vmem:[%s790 + $0x60] sm:$0xff]
  %v804 = vld [vmem:[%s790 + $0x68] sm:$0xff]
  %v805 = vld [vmem:[%s790 + $0x70] sm:$0xff]
  %v806 = vld [vmem:[%s790 + $0x78] sm:$0xff]
  %v807 = vld [vmem:[%s790 + $0x80] sm:$0xff]
  %v808 = vld [vmem:[%s790 + $0x88] sm:$0xff]
  %v809 = vld [vmem:[%s790 + $0x90] sm:$0xff]
  %v810 = vld [vmem:[%s790 + $0x98] sm:$0xff]
  %v811 = vld [vmem:[%s790 + $0xa0] sm:$0xff]
  %v812 = vld [vmem:[%s790 + $0xa8] sm:$0xff]
  %v813 = vld [vmem:[%s790 + $0xb0] sm:$0xff]
  %v814 = vld [vmem:[%s790 + $0xb8] sm:$0xff]
  %v815 = vld [vmem:[%s790 + $0xc0] sm:$0xff]
  %v816 = vld [vmem:[%s790 + $0xc8] sm:$0xff]
  %v817 = vld [vmem:[%s790 + $0xd0] sm:$0xff]
  %v818 = vld [vmem:[%s790 + $0xd8] sm:$0xff]
  %v819 = vld [vmem:[%s790 + $0xe0] sm:$0xff]
  %v820 = vld [vmem:[%s790 + $0xe8] sm:$0xff]
  %v821 = vld [vmem:[%s790 + $0xf0] sm:$0xff]
  %v822 = vld [vmem:[%s790 + $0xf8] sm:$0xff]
  %v855 = vunpack.c.l.b16 %v791
  %v856 = vunpack.c.h.b16 %v791
  %v857 = vunpack.c.l.b16 %v792
  %v858 = vunpack.c.h.b16 %v792
  %v859 = vunpack.c.l.b16 %v793
  %v860 = vunpack.c.h.b16 %v793
  %v861 = vunpack.c.l.b16 %v794
  %v862 = vunpack.c.h.b16 %v794
  %v863 = vunpack.c.l.b16 %v795
  %v864 = vunpack.c.h.b16 %v795
  %v865 = vunpack.c.l.b16 %v796
  %v866 = vunpack.c.h.b16 %v796
  %v867 = vunpack.c.l.b16 %v797
  %v868 = vunpack.c.h.b16 %v797
  %v869 = vunpack.c.l.b16 %v798
  %v870 = vunpack.c.h.b16 %v798
  %v871 = vunpack.c.l.b16 %v799
  %v872 = vunpack.c.h.b16 %v799
  %v873 = vunpack.c.l.b16 %v800
  %v874 = vunpack.c.h.b16 %v800
  %v875 = vunpack.c.l.b16 %v801
  %v876 = vunpack.c.h.b16 %v801
  %v877 = vunpack.c.l.b16 %v802
  %v878 = vunpack.c.h.b16 %v802
  %v879 = vunpack.c.l.b16 %v803
  %v880 = vunpack.c.h.b16 %v803
  %v881 = vunpack.c.l.b16 %v804
  %v882 = vunpack.c.h.b16 %v804
  %v883 = vunpack.c.l.b16 %v805
  %v884 = vunpack.c.h.b16 %v805
  %v885 = vunpack.c.l.b16 %v806
  %v886 = vunpack.c.h.b16 %v806
  %v887 = vunpack.c.l.b16 %v807
  %v888 = vunpack.c.h.b16 %v807
  %v889 = vunpack.c.l.b16 %v808
  %v890 = vunpack.c.h.b16 %v808
  %v891 = vunpack.c.l.b16 %v809
  %v892 = vunpack.c.h.b16 %v809
  %v893 = vunpack.c.l.b16 %v810
  %v894 = vunpack.c.h.b16 %v810
  %v895 = vunpack.c.l.b16 %v811
  %v896 = vunpack.c.h.b16 %v811
  %v897 = vunpack.c.l.b16 %v812
  %v898 = vunpack.c.h.b16 %v812
  %v899 = vunpack.c.l.b16 %v813
  %v900 = vunpack.c.h.b16 %v813
  %v901 = vunpack.c.l.b16 %v814
  %v902 = vunpack.c.h.b16 %v814
  %v903 = vunpack.c.l.b16 %v815
  %v904 = vunpack.c.h.b16 %v815
  %v905 = vunpack.c.l.b16 %v816
  %v906 = vunpack.c.h.b16 %v816
  %v907 = vunpack.c.l.b16 %v817
  %v908 = vunpack.c.h.b16 %v817
  %v909 = vunpack.c.l.b16 %v818
  %v910 = vunpack.c.h.b16 %v818
  %v911 = vunpack.c.l.b16 %v819
  %v912 = vunpack.c.h.b16 %v819
  %v913 = vunpack.c.l.b16 %v820
  %v914 = vunpack.c.h.b16 %v820
  %v915 = vunpack.c.l.b16 %v821
  %v916 = vunpack.c.h.b16 %v821
  %v917 = vunpack.c.l.b16 %v822
  %v918 = vunpack.c.h.b16 %v822
  %v919 = vpack.c.b16 %v857, %v855
  %v920 = vpack.c.b16 %v858, %v856
  %v921 = vpack.c.b16 %v861, %v859
  %v922 = vpack.c.b16 %v862, %v860
  %v923 = vpack.c.b16 %v865, %v863
  %v924 = vpack.c.b16 %v866, %v864
  %v925 = vpack.c.b16 %v869, %v867
  %v926 = vpack.c.b16 %v870, %v868
  %v927 = vpack.c.b16 %v873, %v871
  %v928 = vpack.c.b16 %v874, %v872
  %v929 = vpack.c.b16 %v877, %v875
  %v930 = vpack.c.b16 %v878, %v876
  %v931 = vpack.c.b16 %v881, %v879
  %v932 = vpack.c.b16 %v882, %v880
  %v933 = vpack.c.b16 %v885, %v883
  %v934 = vpack.c.b16 %v886, %v884
  %v935 = vpack.c.b16 %v889, %v887
  %v936 = vpack.c.b16 %v890, %v888
  %v937 = vpack.c.b16 %v893, %v891
  %v938 = vpack.c.b16 %v894, %v892
  %v939 = vpack.c.b16 %v897, %v895
  %v940 = vpack.c.b16 %v898, %v896
  %v941 = vpack.c.b16 %v901, %v899
  %v942 = vpack.c.b16 %v902, %v900
  %v943 = vpack.c.b16 %v905, %v903
  %v944 = vpack.c.b16 %v906, %v904
  %v945 = vpack.c.b16 %v909, %v907
  %v946 = vpack.c.b16 %v910, %v908
  %v947 = vpack.c.b16 %v913, %v911
  %v948 = vpack.c.b16 %v914, %v912
  %v949 = vpack.c.b16 %v917, %v915
  %v950 = vpack.c.b16 %v918, %v916
  %983 = vmatprep.subr.bf16.mxu0 %v934
  %984 = vmatpush1.bf16.msra.mxu0 %v933
  %985 = vmatprep.subr.bf16.mxu0 %v932
  %986 = vmatpush1.bf16.msra.mxu0 %v931
  %987 = vmatprep.subr.bf16.mxu0 %v930
  %988 = vmatpush1.bf16.msra.mxu0 %v929
  %989 = vmatprep.subr.bf16.mxu0 %v928
  %990 = vmatpush1.bf16.msra.mxu0 %v927
  %991 = vmatprep.subr.bf16.mxu0 %v926
  %992 = vmatpush1.bf16.msra.mxu0 %v925
  %993 = vmatprep.subr.bf16.mxu0 %v924
  %994 = vmatpush1.bf16.msra.mxu0 %v923
  %995 = vmatprep.subr.bf16.mxu0 %v922
  %996 = vmatpush1.bf16.msra.mxu0 %v921
  %997 = vmatprep.subr.bf16.mxu0 %v920
  %998 = vmatpush1.bf16.msra.mxu0 %v919
  %999 = vmatprep.subr.bf16.mxu0 %v950
  %1000 = vmatpush2.bf16.msra.mxu0 %v949
  %1001 = vmatprep.subr.bf16.mxu0 %v948
  %1002 = vmatpush2.bf16.msra.mxu0 %v947
  %1003 = vmatprep.subr.bf16.mxu0 %v946
  %1004 = vmatpush2.bf16.msra.mxu0 %v945
  %1005 = vmatprep.subr.bf16.mxu0 %v944
  %1006 = vmatpush2.bf16.msra.mxu0 %v943
  %1007 = vmatprep.subr.bf16.mxu0 %v942
  %1008 = vmatpush2.bf16.msra.mxu0 %v941
  %1009 = vmatprep.subr.bf16.mxu0 %v940
  %1010 = vmatpush2.bf16.msra.mxu0 %v939
  %1011 = vmatprep.subr.bf16.mxu0 %v938
  %1012 = vmatpush2.bf16.msra.mxu0 %v937
  %1013 = vmatprep.subr.bf16.mxu0 %v936
  %1014 = vmatpush2.bf16.msra.mxu0 %v935
  %1015 = vmatprep.mubr.bf16.mxu0 %v789
  %1016 = vmatmul.mubr.bf16.gmra.mxu0 %v788
  %v1017 = vpop.f32.mrf.mxu0
  %v1018 = vadd.f32 0.0, %v1017
  %v1019 = vpop.f32.mrf.mxu0
  %v1020 = vadd.f32 0.0, %v1019
  %v1021 = vpop.f32.mrf.mxu0
  %v1022 = vadd.f32 0.0, %v1021
  %v1023 = vpop.f32.mrf.mxu0
  %v1024 = vadd.f32 0.0, %v1023
  %1025 = vdwg.mxu0
  %v1058 = vunpack.c.l.b16 %v702
  %v1059 = vunpack.c.h.b16 %v702
  %v1060 = vunpack.c.l.b16 %v703
  %v1061 = vunpack.c.h.b16 %v703
  %v1062 = vunpack.c.l.b16 %v704
  %v1063 = vunpack.c.h.b16 %v704
  %v1064 = vunpack.c.l.b16 %v705
  %v1065 = vunpack.c.h.b16 %v705
  %v1066 = vunpack.c.l.b16 %v706
  %v1067 = vunpack.c.h.b16 %v706
  %v1068 = vunpack.c.l.b16 %v707
  %v1069 = vunpack.c.h.b16 %v707
  %v1070 = vunpack.c.l.b16 %v708
  %v1071 = vunpack.c.h.b16 %v708
  %v1072 = vunpack.c.l.b16 %v709
  %v1073 = vunpack.c.h.b16 %v709
  %v1074 = vunpack.c.l.b16 %v710
  %v1075 = vunpack.c.h.b16 %v710
  %v1076 = vunpack.c.l.b16 %v711
  %v1077 = vunpack.c.h.b16 %v711
  %v1078 = vunpack.c.l.b16 %v712
  %v1079 = vunpack.c.h.b16 %v712
  %v1080 = vunpack.c.l.b16 %v713
  %v1081 = vunpack.c.h.b16 %v713
  %v1082 = vunpack.c.l.b16 %v714
  %v1083 = vunpack.c.h.b16 %v714
  %v1084 = vunpack.c.l.b16 %v715
  %v1085 = vunpack.c.h.b16 %v715
  %v1086 = vunpack.c.l.b16 %v716
  %v1087 = vunpack.c.h.b16 %v716
  %v1088 = vunpack.c.l.b16 %v717
  %v1089 = vunpack.c.h.b16 %v717
  %v1090 = vunpack.c.l.b16 %v718
  %v1091 = vunpack.c.h.b16 %v718
  %v1092 = vunpack.c.l.b16 %v719
  %v1093 = vunpack.c.h.b16 %v719
  %v1094 = vunpack.c.l.b16 %v720
  %v1095 = vunpack.c.h.b16 %v720
  %v1096 = vunpack.c.l.b16 %v721
  %v1097 = vunpack.c.h.b16 %v721
  %v1098 = vunpack.c.l.b16 %v722
  %v1099 = vunpack.c.h.b16 %v722
  %v1100 = vunpack.c.l.b16 %v723
  %v1101 = vunpack.c.h.b16 %v723
  %v1102 = vunpack.c.l.b16 %v724
  %v1103 = vunpack.c.h.b16 %v724
  %v1104 = vunpack.c.l.b16 %v725
  %v1105 = vunpack.c.h.b16 %v725
  %v1106 = vunpack.c.l.b16 %v726
  %v1107 = vunpack.c.h.b16 %v726
  %v1108 = vunpack.c.l.b16 %v727
  %v1109 = vunpack.c.h.b16 %v727
  %v1110 = vunpack.c.l.b16 %v728
  %v1111 = vunpack.c.h.b16 %v728
  %v1112 = vunpack.c.l.b16 %v729
  %v1113 = vunpack.c.h.b16 %v729
  %v1114 = vunpack.c.l.b16 %v730
  %v1115 = vunpack.c.h.b16 %v730
  %v1116 = vunpack.c.l.b16 %v731
  %v1117 = vunpack.c.h.b16 %v731
  %v1118 = vunpack.c.l.b16 %v732
  %v1119 = vunpack.c.h.b16 %v732
  %v1120 = vunpack.c.l.b16 %v733
  %v1121 = vunpack.c.h.b16 %v733
  %v1122 = vpack.c.b16 %v1060, %v1058
  %v1123 = vpack.c.b16 %v1061, %v1059
  %v1124 = vpack.c.b16 %v1064, %v1062
  %v1125 = vpack.c.b16 %v1065, %v1063
  %v1126 = vpack.c.b16 %v1068, %v1066
  %v1127 = vpack.c.b16 %v1069, %v1067
  %v1128 = vpack.c.b16 %v1072, %v1070
  %v1129 = vpack.c.b16 %v1073, %v1071
  %v1130 = vpack.c.b16 %v1076, %v1074
  %v1131 = vpack.c.b16 %v1077, %v1075
  %v1132 = vpack.c.b16 %v1080, %v1078
  %v1133 = vpack.c.b16 %v1081, %v1079
  %v1134 = vpack.c.b16 %v1084, %v1082
  %v1135 = vpack.c.b16 %v1085, %v1083
  %v1136 = vpack.c.b16 %v1088, %v1086
  %v1137 = vpack.c.b16 %v1089, %v1087
  %v1138 = vpack.c.b16 %v1092, %v1090
  %v1139 = vpack.c.b16 %v1093, %v1091
  %v1140 = vpack.c.b16 %v1096, %v1094
  %v1141 = vpack.c.b16 %v1097, %v1095
  %v1142 = vpack.c.b16 %v1100, %v1098
  %v1143 = vpack.c.b16 %v1101, %v1099
  %v1144 = vpack.c.b16 %v1104, %v1102
  %v1145 = vpack.c.b16 %v1105, %v1103
  %v1146 = vpack.c.b16 %v1108, %v1106
  %v1147 = vpack.c.b16 %v1109, %v1107
  %v1148 = vpack.c.b16 %v1112, %v1110
  %v1149 = vpack.c.b16 %v1113, %v1111
  %v1150 = vpack.c.b16 %v1116, %v1114
  %v1151 = vpack.c.b16 %v1117, %v1115
  %v1152 = vpack.c.b16 %v1120, %v1118
  %v1153 = vpack.c.b16 %v1121, %v1119
  %1186 = vmatprep.subr.bf16.mxu0 %v1137
  %1187 = vmatpush1.bf16.msra.mxu0 %v1136
  %1188 = vmatprep.subr.bf16.mxu0 %v1135
  %1189 = vmatpush1.bf16.msra.mxu0 %v1134
  %1190 = vmatprep.subr.bf16.mxu0 %v1133
  %1191 = vmatpush1.bf16.msra.mxu0 %v1132
  %1192 = vmatprep.subr.bf16.mxu0 %v1131
  %1193 = vmatpush1.bf16.msra.mxu0 %v1130
  %1194 = vmatprep.subr.bf16.mxu0 %v1129
  %1195 = vmatpush1.bf16.msra.mxu0 %v1128
  %1196 = vmatprep.subr.bf16.mxu0 %v1127
  %1197 = vmatpush1.bf16.msra.mxu0 %v1126
  %1198 = vmatprep.subr.bf16.mxu0 %v1125
  %1199 = vmatpush1.bf16.msra.mxu0 %v1124
  %1200 = vmatprep.subr.bf16.mxu0 %v1123
  %1201 = vmatpush1.bf16.msra.mxu0 %v1122
  %1202 = vmatprep.subr.bf16.mxu0 %v1153
  %1203 = vmatpush2.bf16.msra.mxu0 %v1152
  %1204 = vmatprep.subr.bf16.mxu0 %v1151
  %1205 = vmatpush2.bf16.msra.mxu0 %v1150
  %1206 = vmatprep.subr.bf16.mxu0 %v1149
  %1207 = vmatpush2.bf16.msra.mxu0 %v1148
  %1208 = vmatprep.subr.bf16.mxu0 %v1147
  %1209 = vmatpush2.bf16.msra.mxu0 %v1146
  %1210 = vmatprep.subr.bf16.mxu0 %v1145
  %1211 = vmatpush2.bf16.msra.mxu0 %v1144
  %1212 = vmatprep.subr.bf16.mxu0 %v1143
  %1213 = vmatpush2.bf16.msra.mxu0 %v1142
  %1214 = vmatprep.subr.bf16.mxu0 %v1141
  %1215 = vmatpush2.bf16.msra.mxu0 %v1140
  %1216 = vmatprep.subr.bf16.mxu0 %v1139
  %1217 = vmatpush2.bf16.msra.mxu0 %v1138
  %1218 = vmatprep.mubr.bf16.mxu0 %v701
  %1219 = vmatmul.mubr.bf16.gmra.mxu0 %v700
  %v1220 = vpop.f32.mrf.mxu0
  %v1221 = vadd.f32 %v1018, %v1220
  %v1222 = vpop.f32.mrf.mxu0
  %v1223 = vadd.f32 %v1020, %v1222
  %v1224 = vpop.f32.mrf.mxu0
  %v1225 = vadd.f32 %v1022, %v1224
  %v1226 = vpop.f32.mrf.mxu0
  %v1227 = vadd.f32 %v1024, %v1226
  %1228 = vdwg.mxu0
  %s1229 = scalar_lea.vmem %s4, 16
  %v1230 = vld [vmem:[%s1229] sm:$0xf]
  %v1231 = vld [vmem:[%s1229 + $0x4] sm:$0xf]
  %v1234 = vunpack.c.l.b16 %v1230
  %v1235 = vunpack.c.l.b16 %v1231
  %v1236 = vpack.c.b16 %v1235, %v1234
  %v1238 = vsel %vm81, %v1236, 0
  %1240 = vmatprep.subr.bf16.mxu0 0
  %1241 = vmatpush1.bf16.msra.mxu0 0
  %1242 = vmatprep.subr.bf16.mxu0 0
  %1243 = vmatpush1.bf16.msra.mxu0 0
  %1244 = vmatprep.subr.bf16.mxu0 0
  %1245 = vmatpush1.bf16.msra.mxu0 0
  %1246 = vmatprep.subr.bf16.mxu0 0
  %1247 = vmatpush1.bf16.msra.mxu0 0
  %1248 = vmatprep.subr.bf16.mxu0 0
  %1249 = vmatpush1.bf16.msra.mxu0 0
  %1250 = vmatprep.subr.bf16.mxu0 0
  %1251 = vmatpush1.bf16.msra.mxu0 0
  %1252 = vmatprep.subr.bf16.mxu0 %v646
  %1253 = vmatpush1.bf16.msra.mxu0 %v645
  %1254 = vmatprep.subr.bf16.mxu0 %v644
  %1255 = vmatpush1.bf16.msra.mxu0 %v643
  %1256 = vmatprep.subr.bf16.mxu0 0
  %1257 = vmatpush2.bf16.msra.mxu0 0
  %1258 = vmatprep.subr.bf16.mxu0 0
  %1259 = vmatpush2.bf16.msra.mxu0 0
  %1260 = vmatprep.subr.bf16.mxu0 0
  %1261 = vmatpush2.bf16.msra.mxu0 0
  %1262 = vmatprep.subr.bf16.mxu0 0
  %1263 = vmatpush2.bf16.msra.mxu0 0
  %1264 = vmatprep.subr.bf16.mxu0 0
  %1265 = vmatpush2.bf16.msra.mxu0 0
  %1266 = vmatprep.subr.bf16.mxu0 0
  %1267 = vmatpush2.bf16.msra.mxu0 0
  %1268 = vmatprep.subr.bf16.mxu0 0
  %1269 = vmatpush2.bf16.msra.mxu0 0
  %1270 = vmatprep.subr.bf16.mxu0 0
  %1271 = vmatpush2.bf16.msra.mxu0 0
  %1272 = vmatprep.mubr.bf16.mxu0 0
  %1273 = vmatmul.mubr.bf16.gmra.mxu0 %v1238
  %v1274 = vpop.f32.mrf.mxu0
  %v1275 = vadd.f32 0.0, %v1274
  %v1276 = vpop.f32.mrf.mxu0
  %v1277 = vadd.f32 0.0, %v1276
  %v1278 = vpop.f32.mrf.mxu0
  %v1279 = vadd.f32 0.0, %v1278
  %v1280 = vpop.f32.mrf.mxu0
  %v1281 = vadd.f32 0.0, %v1280
  %1282 = vdwg.mxu0
  %v1283 = vpack.c.bf16 %v1279, %v1275
  %v1284 = vpack.c.bf16 %v1281, %v1277
  %s1285 = scalar_lea.vmem %s5, 512
  %v1286 = vld [vmem:[%s1285] sm:$0xff]
  %v1287 = vld [vmem:[%s1285 + $0x8] sm:$0xff]
  %v1288 = vld [vmem:[%s1285 + $0x10] sm:$0xff]
  %v1289 = vld [vmem:[%s1285 + $0x18] sm:$0xff]
  %v1290 = vld [vmem:[%s1285 + $0x20] sm:$0xff]
  %v1291 = vld [vmem:[%s1285 + $0x28] sm:$0xff]
  %v1292 = vld [vmem:[%s1285 + $0x30] sm:$0xff]
  %v1293 = vld [vmem:[%s1285 + $0x38] sm:$0xff]
  %v1294 = vld [vmem:[%s1285 + $0x40] sm:$0xff]
  %v1295 = vld [vmem:[%s1285 + $0x48] sm:$0xff]
  %v1296 = vld [vmem:[%s1285 + $0x50] sm:$0xff]
  %v1297 = vld [vmem:[%s1285 + $0x58] sm:$0xff]
  %v1298 = vld [vmem:[%s1285 + $0x60] sm:$0xff]
  %v1299 = vld [vmem:[%s1285 + $0x68] sm:$0xff]
  %v1300 = vld [vmem:[%s1285 + $0x70] sm:$0xff]
  %v1301 = vld [vmem:[%s1285 + $0x78] sm:$0xff]
  %v1302 = vld [vmem:[%s1285 + $0x80] sm:$0xff]
  %v1303 = vld [vmem:[%s1285 + $0x88] sm:$0xff]
  %v1304 = vld [vmem:[%s1285 + $0x90] sm:$0xff]
  %v1305 = vld [vmem:[%s1285 + $0x98] sm:$0xff]
  %v1306 = vld [vmem:[%s1285 + $0xa0] sm:$0xff]
  %v1307 = vld [vmem:[%s1285 + $0xa8] sm:$0xff]
  %v1308 = vld [vmem:[%s1285 + $0xb0] sm:$0xff]
  %v1309 = vld [vmem:[%s1285 + $0xb8] sm:$0xff]
  %v1310 = vld [vmem:[%s1285 + $0xc0] sm:$0xff]
  %v1311 = vld [vmem:[%s1285 + $0xc8] sm:$0xff]
  %v1312 = vld [vmem:[%s1285 + $0xd0] sm:$0xff]
  %v1313 = vld [vmem:[%s1285 + $0xd8] sm:$0xff]
  %v1314 = vld [vmem:[%s1285 + $0xe0] sm:$0xff]
  %v1315 = vld [vmem:[%s1285 + $0xe8] sm:$0xff]
  %v1316 = vld [vmem:[%s1285 + $0xf0] sm:$0xff]
  %v1317 = vld [vmem:[%s1285 + $0xf8] sm:$0xff]
  %v1350 = vunpack.c.l.b16 %v1286
  %v1351 = vunpack.c.h.b16 %v1286
  %v1352 = vunpack.c.l.b16 %v1287
  %v1353 = vunpack.c.h.b16 %v1287
  %v1354 = vunpack.c.l.b16 %v1288
  %v1355 = vunpack.c.h.b16 %v1288
  %v1356 = vunpack.c.l.b16 %v1289
  %v1357 = vunpack.c.h.b16 %v1289
  %v1358 = vunpack.c.l.b16 %v1290
  %v1359 = vunpack.c.h.b16 %v1290
  %v1360 = vunpack.c.l.b16 %v1291
  %v1361 = vunpack.c.h.b16 %v1291
  %v1362 = vunpack.c.l.b16 %v1292
  %v1363 = vunpack.c.h.b16 %v1292
  %v1364 = vunpack.c.l.b16 %v1293
  %v1365 = vunpack.c.h.b16 %v1293
  %v1366 = vunpack.c.l.b16 %v1294
  %v1367 = vunpack.c.h.b16 %v1294
  %v1368 = vunpack.c.l.b16 %v1295
  %v1369 = vunpack.c.h.b16 %v1295
  %v1370 = vunpack.c.l.b16 %v1296
  %v1371 = vunpack.c.h.b16 %v1296
  %v1372 = vunpack.c.l.b16 %v1297
  %v1373 = vunpack.c.h.b16 %v1297
  %v1374 = vunpack.c.l.b16 %v1298
  %v1375 = vunpack.c.h.b16 %v1298
  %v1376 = vunpack.c.l.b16 %v1299
  %v1377 = vunpack.c.h.b16 %v1299
  %v1378 = vunpack.c.l.b16 %v1300
  %v1379 = vunpack.c.h.b16 %v1300
  %v1380 = vunpack.c.l.b16 %v1301
  %v1381 = vunpack.c.h.b16 %v1301
  %v1382 = vunpack.c.l.b16 %v1302
  %v1383 = vunpack.c.h.b16 %v1302
  %v1384 = vunpack.c.l.b16 %v1303
  %v1385 = vunpack.c.h.b16 %v1303
  %v1386 = vunpack.c.l.b16 %v1304
  %v1387 = vunpack.c.h.b16 %v1304
  %v1388 = vunpack.c.l.b16 %v1305
  %v1389 = vunpack.c.h.b16 %v1305
  %v1390 = vunpack.c.l.b16 %v1306
  %v1391 = vunpack.c.h.b16 %v1306
  %v1392 = vunpack.c.l.b16 %v1307
  %v1393 = vunpack.c.h.b16 %v1307
  %v1394 = vunpack.c.l.b16 %v1308
  %v1395 = vunpack.c.h.b16 %v1308
  %v1396 = vunpack.c.l.b16 %v1309
  %v1397 = vunpack.c.h.b16 %v1309
  %v1398 = vunpack.c.l.b16 %v1310
  %v1399 = vunpack.c.h.b16 %v1310
  %v1400 = vunpack.c.l.b16 %v1311
  %v1401 = vunpack.c.h.b16 %v1311
  %v1402 = vunpack.c.l.b16 %v1312
  %v1403 = vunpack.c.h.b16 %v1312
  %v1404 = vunpack.c.l.b16 %v1313
  %v1405 = vunpack.c.h.b16 %v1313
  %v1406 = vunpack.c.l.b16 %v1314
  %v1407 = vunpack.c.h.b16 %v1314
  %v1408 = vunpack.c.l.b16 %v1315
  %v1409 = vunpack.c.h.b16 %v1315
  %v1410 = vunpack.c.l.b16 %v1316
  %v1411 = vunpack.c.h.b16 %v1316
  %v1412 = vunpack.c.l.b16 %v1317
  %v1413 = vunpack.c.h.b16 %v1317
  %v1414 = vpack.c.b16 %v1352, %v1350
  %v1415 = vpack.c.b16 %v1353, %v1351
  %v1416 = vpack.c.b16 %v1356, %v1354
  %v1417 = vpack.c.b16 %v1357, %v1355
  %v1418 = vpack.c.b16 %v1360, %v1358
  %v1419 = vpack.c.b16 %v1361, %v1359
  %v1420 = vpack.c.b16 %v1364, %v1362
  %v1421 = vpack.c.b16 %v1365, %v1363
  %v1422 = vpack.c.b16 %v1368, %v1366
  %v1423 = vpack.c.b16 %v1369, %v1367
  %v1424 = vpack.c.b16 %v1372, %v1370
  %v1425 = vpack.c.b16 %v1373, %v1371
  %v1426 = vpack.c.b16 %v1376, %v1374
  %v1427 = vpack.c.b16 %v1377, %v1375
  %v1428 = vpack.c.b16 %v1380, %v1378
  %v1429 = vpack.c.b16 %v1381, %v1379
  %v1430 = vpack.c.b16 %v1384, %v1382
  %v1431 = vpack.c.b16 %v1385, %v1383
  %v1432 = vpack.c.b16 %v1388, %v1386
  %v1433 = vpack.c.b16 %v1389, %v1387
  %v1434 = vpack.c.b16 %v1392, %v1390
  %v1435 = vpack.c.b16 %v1393, %v1391
  %v1436 = vpack.c.b16 %v1396, %v1394
  %v1437 = vpack.c.b16 %v1397, %v1395
  %v1438 = vpack.c.b16 %v1400, %v1398
  %v1439 = vpack.c.b16 %v1401, %v1399
  %v1440 = vpack.c.b16 %v1404, %v1402
  %v1441 = vpack.c.b16 %v1405, %v1403
  %v1442 = vpack.c.b16 %v1408, %v1406
  %v1443 = vpack.c.b16 %v1409, %v1407
  %v1444 = vpack.c.b16 %v1412, %v1410
  %v1445 = vpack.c.b16 %v1413, %v1411
  %1478 = vmatprep.subr.bf16.mxu0 %v1429
  %1479 = vmatpush1.bf16.msra.mxu0 %v1428
  %1480 = vmatprep.subr.bf16.mxu0 %v1427
  %1481 = vmatpush1.bf16.msra.mxu0 %v1426
  %1482 = vmatprep.subr.bf16.mxu0 %v1425
  %1483 = vmatpush1.bf16.msra.mxu0 %v1424
  %1484 = vmatprep.subr.bf16.mxu0 %v1423
  %1485 = vmatpush1.bf16.msra.mxu0 %v1422
  %1486 = vmatprep.subr.bf16.mxu0 %v1421
  %1487 = vmatpush1.bf16.msra.mxu0 %v1420
  %1488 = vmatprep.subr.bf16.mxu0 %v1419
  %1489 = vmatpush1.bf16.msra.mxu0 %v1418
  %1490 = vmatprep.subr.bf16.mxu0 %v1417
  %1491 = vmatpush1.bf16.msra.mxu0 %v1416
  %1492 = vmatprep.subr.bf16.mxu0 %v1415
  %1493 = vmatpush1.bf16.msra.mxu0 %v1414
  %1494 = vmatprep.subr.bf16.mxu0 %v1445
  %1495 = vmatpush2.bf16.msra.mxu0 %v1444
  %1496 = vmatprep.subr.bf16.mxu0 %v1443
  %1497 = vmatpush2.bf16.msra.mxu0 %v1442
  %1498 = vmatprep.subr.bf16.mxu0 %v1441
  %1499 = vmatpush2.bf16.msra.mxu0 %v1440
  %1500 = vmatprep.subr.bf16.mxu0 %v1439
  %1501 = vmatpush2.bf16.msra.mxu0 %v1438
  %1502 = vmatprep.subr.bf16.mxu0 %v1437
  %1503 = vmatpush2.bf16.msra.mxu0 %v1436
  %1504 = vmatprep.subr.bf16.mxu0 %v1435
  %1505 = vmatpush2.bf16.msra.mxu0 %v1434
  %1506 = vmatprep.subr.bf16.mxu0 %v1433
  %1507 = vmatpush2.bf16.msra.mxu0 %v1432
  %1508 = vmatprep.subr.bf16.mxu0 %v1431
  %1509 = vmatpush2.bf16.msra.mxu0 %v1430
  %1510 = vmatprep.mubr.bf16.mxu0 %v1284
  %1511 = vmatmul.mubr.bf16.gmra.mxu0 %v1283
  %v1512 = vpop.f32.mrf.mxu0
  %v1513 = vadd.f32 0.0, %v1512
  %v1514 = vpop.f32.mrf.mxu0
  %v1515 = vadd.f32 0.0, %v1514
  %v1516 = vpop.f32.mrf.mxu0
  %v1517 = vadd.f32 0.0, %v1516
  %v1518 = vpop.f32.mrf.mxu0
  %v1519 = vadd.f32 0.0, %v1518
  %1520 = vdwg.mxu0
  %v1521 = vadd.f32 %v1221, %v1513
  %v1522 = vadd.f32 %v1223, %v1515
  %v1523 = vadd.f32 %v1225, %v1517
  %v1524 = vadd.f32 %v1227, %v1519
  %v1525 = vld [vmem:[%s6] sm:$0x3]
  %v1527 = vlaneseq
  %v1528 = vshrl.u32 %v1527, 7
  %v1529 = vsub.s32 0, %v1528
  %v1530 = vrot.slane %v1525, %v1529
  %v1531 = vlaneseq
  %v1532 = vshrl.u32 %v1531, 7
  %v1533 = vsub.s32 1, %v1532
  %v1534 = vrot.slane %v1525, %v1533
  %v1537 = vadd.f32 %v1521, %v1530
  %v1538 = vadd.f32 %v1522, %v1534
  %v1539 = vadd.f32 %v1523, %v1530
  %v1540 = vadd.f32 %v1524, %v1534
  %v1541 = vmax.f32 %v1537, 0.0
  %v1542 = vmax.f32 %v1538, 0.0
  %v1543 = vmax.f32 %v1539, 0.0
  %v1544 = vmax.f32 %v1540, 0.0
  %v1545 = vpack.c.bf16 %v1543, %v1541
  %v1546 = vpack.c.bf16 %v1544, %v1542
  %v1547 = vld [vmem:[%s7] sm:$0xf]
  %v1548 = vld [vmem:[%s7 + $0x4] sm:$0xf]
  %v1551 = vunpack.c.l.b16 %v1547
  %v1552 = vunpack.c.l.b16 %v1548
  %v1553 = vpack.c.b16 %v1552, %v1551
  %vm1554 = vcmask 130048
  %v1556 = vsel %vm1554, %v1553, 0
  %1558 = vmatprep.subr.bf16.mxu0 0
  %1559 = vmatpush1.bf16.msra.mxu0 0
  %1560 = vmatprep.subr.bf16.mxu0 0
  %1561 = vmatpush1.bf16.msra.mxu0 0
  %1562 = vmatprep.subr.bf16.mxu0 0
  %1563 = vmatpush1.bf16.msra.mxu0 0
  %1564 = vmatprep.subr.bf16.mxu0 0
  %1565 = vmatpush1.bf16.msra.mxu0 0
  %1566 = vmatprep.subr.bf16.mxu0 0
  %1567 = vmatpush1.bf16.msra.mxu0 0
  %1568 = vmatprep.subr.bf16.mxu0 0
  %1569 = vmatpush1.bf16.msra.mxu0 0
  %1570 = vmatprep.subr.bf16.mxu0 0
  %1571 = vmatpush1.bf16.msra.mxu0 0
  %1572 = vmatprep.subr.bf16.mxu0 %v1546
  %1573 = vmatpush1.bf16.msra.mxu0 %v1545
  %1574 = vmatprep.subr.bf16.mxu0 0
  %1575 = vmatpush2.bf16.msra.mxu0 0
  %1576 = vmatprep.subr.bf16.mxu0 0
  %1577 = vmatpush2.bf16.msra.mxu0 0
  %1578 = vmatprep.subr.bf16.mxu0 0
  %1579 = vmatpush2.bf16.msra.mxu0 0
  %1580 = vmatprep.subr.bf16.mxu0 0
  %1581 = vmatpush2.bf16.msra.mxu0 0
  %1582 = vmatprep.subr.bf16.mxu0 0
  %1583 = vmatpush2.bf16.msra.mxu0 0
  %1584 = vmatprep.subr.bf16.mxu0 0
  %1585 = vmatpush2.bf16.msra.mxu0 0
  %1586 = vmatprep.subr.bf16.mxu0 0
  %1587 = vmatpush2.bf16.msra.mxu0 0
  %1588 = vmatprep.subr.bf16.mxu0 0
  %1589 = vmatpush2.bf16.msra.mxu0 0
  %1590 = vmatprep.mubr.bf16.mxu0 0
  %1591 = vmatmul.mubr.bf16.gmra.mxu0 %v1556
  %v1592 = vpop.f32.mrf.mxu0
  %v1593 = vadd.f32 0.0, %v1592
  %v1594 = vpop.f32.mrf.mxu0
  %v1595 = vadd.f32 0.0, %v1594
  %v1596 = vpop.f32.mrf.mxu0
  %v1597 = vadd.f32 0.0, %v1596
  %v1598 = vpop.f32.mrf.mxu0
  %v1599 = vadd.f32 0.0, %v1598
  %1600 = vdwg.mxu0
  %v1601 = vpack.c.bf16 %v1597, %v1593
  %v1602 = vpack.c.bf16 %v1599, %v1595
  %v1603 = vld [vmem:[%s8] sm:$0xff]
  %v1604 = vld [vmem:[%s8 + $0x8] sm:$0xff]
  %v1605 = vld [vmem:[%s8 + $0x10] sm:$0xff]
  %v1606 = vld [vmem:[%s8 + $0x18] sm:$0xff]
  %v1607 = vld [vmem:[%s8 + $0x20] sm:$0xff]
  %v1608 = vld [vmem:[%s8 + $0x28] sm:$0xff]
  %v1609 = vld [vmem:[%s8 + $0x30] sm:$0xff]
  %v1610 = vld [vmem:[%s8 + $0x38] sm:$0xff]
  %v1611 = vld [vmem:[%s8 + $0x40] sm:$0xff]
  %v1612 = vld [vmem:[%s8 + $0x48] sm:$0xff]
  %v1613 = vld [vmem:[%s8 + $0x50] sm:$0xff]
  %v1614 = vld [vmem:[%s8 + $0x58] sm:$0xff]
  %v1615 = vld [vmem:[%s8 + $0x60] sm:$0xff]
  %v1616 = vld [vmem:[%s8 + $0x68] sm:$0xff]
  %v1617 = vld [vmem:[%s8 + $0x70] sm:$0xff]
  %v1618 = vld [vmem:[%s8 + $0x78] sm:$0xff]
  %v1619 = vld [vmem:[%s8 + $0x80] sm:$0xff]
  %v1620 = vld [vmem:[%s8 + $0x88] sm:$0xff]
  %v1621 = vld [vmem:[%s8 + $0x90] sm:$0xff]
  %v1622 = vld [vmem:[%s8 + $0x98] sm:$0xff]
  %v1623 = vld [vmem:[%s8 + $0xa0] sm:$0xff]
  %v1624 = vld [vmem:[%s8 + $0xa8] sm:$0xff]
  %v1625 = vld [vmem:[%s8 + $0xb0] sm:$0xff]
  %v1626 = vld [vmem:[%s8 + $0xb8] sm:$0xff]
  %v1627 = vld [vmem:[%s8 + $0xc0] sm:$0xff]
  %v1628 = vld [vmem:[%s8 + $0xc8] sm:$0xff]
  %v1629 = vld [vmem:[%s8 + $0xd0] sm:$0xff]
  %v1630 = vld [vmem:[%s8 + $0xd8] sm:$0xff]
  %v1631 = vld [vmem:[%s8 + $0xe0] sm:$0xff]
  %v1632 = vld [vmem:[%s8 + $0xe8] sm:$0xff]
  %v1633 = vld [vmem:[%s8 + $0xf0] sm:$0xff]
  %v1634 = vld [vmem:[%s8 + $0xf8] sm:$0xff]
  %s1635 = scalar_lea.vmem %s7, 8
  %v1636 = vld [vmem:[%s1635] sm:$0xf]
  %v1637 = vld [vmem:[%s1635 + $0x4] sm:$0xf]
  %v1640 = vunpack.c.l.b16 %v1636
  %v1641 = vunpack.c.l.b16 %v1637
  %v1642 = vpack.c.b16 %v1641, %v1640
  %v1644 = vsel %vm1554, %v1642, 0
  %1646 = vmatprep.subr.bf16.mxu0 0
  %1647 = vmatpush1.bf16.msra.mxu0 0
  %1648 = vmatprep.subr.bf16.mxu0 0
  %1649 = vmatpush1.bf16.msra.mxu0 0
  %1650 = vmatprep.subr.bf16.mxu0 0
  %1651 = vmatpush1.bf16.msra.mxu0 0
  %1652 = vmatprep.subr.bf16.mxu0 0
  %1653 = vmatpush1.bf16.msra.mxu0 0
  %1654 = vmatprep.subr.bf16.mxu0 0
  %1655 = vmatpush1.bf16.msra.mxu0 0
  %1656 = vmatprep.subr.bf16.mxu0 0
  %1657 = vmatpush1.bf16.msra.mxu0 0
  %1658 = vmatprep.subr.bf16.mxu0 0
  %1659 = vmatpush1.bf16.msra.mxu0 0
  %1660 = vmatprep.subr.bf16.mxu0 %v1546
  %1661 = vmatpush1.bf16.msra.mxu0 %v1545
  %1662 = vmatprep.subr.bf16.mxu0 0
  %1663 = vmatpush2.bf16.msra.mxu0 0
  %1664 = vmatprep.subr.bf16.mxu0 0
  %1665 = vmatpush2.bf16.msra.mxu0 0
  %1666 = vmatprep.subr.bf16.mxu0 0
  %1667 = vmatpush2.bf16.msra.mxu0 0
  %1668 = vmatprep.subr.bf16.mxu0 0
  %1669 = vmatpush2.bf16.msra.mxu0 0
  %1670 = vmatprep.subr.bf16.mxu0 0
  %1671 = vmatpush2.bf16.msra.mxu0 0
  %1672 = vmatprep.subr.bf16.mxu0 0
  %1673 = vmatpush2.bf16.msra.mxu0 0
  %1674 = vmatprep.subr.bf16.mxu0 0
  %1675 = vmatpush2.bf16.msra.mxu0 0
  %1676 = vmatprep.subr.bf16.mxu0 0
  %1677 = vmatpush2.bf16.msra.mxu0 0
  %1678 = vmatprep.mubr.bf16.mxu0 0
  %1679 = vmatmul.mubr.bf16.gmra.mxu0 %v1644
  %v1680 = vpop.f32.mrf.mxu0
  %v1681 = vadd.f32 0.0, %v1680
  %v1682 = vpop.f32.mrf.mxu0
  %v1683 = vadd.f32 0.0, %v1682
  %v1684 = vpop.f32.mrf.mxu0
  %v1685 = vadd.f32 0.0, %v1684
  %v1686 = vpop.f32.mrf.mxu0
  %v1687 = vadd.f32 0.0, %v1686
  %1688 = vdwg.mxu0
  %v1689 = vpack.c.bf16 %v1685, %v1681
  %v1690 = vpack.c.bf16 %v1687, %v1683
  %s1691 = scalar_lea.vmem %s8, 256
  %v1692 = vld [vmem:[%s1691] sm:$0xff]
  %v1693 = vld [vmem:[%s1691 + $0x8] sm:$0xff]
  %v1694 = vld [vmem:[%s1691 + $0x10] sm:$0xff]
  %v1695 = vld [vmem:[%s1691 + $0x18] sm:$0xff]
  %v1696 = vld [vmem:[%s1691 + $0x20] sm:$0xff]
  %v1697 = vld [vmem:[%s1691 + $0x28] sm:$0xff]
  %v1698 = vld [vmem:[%s1691 + $0x30] sm:$0xff]
  %v1699 = vld [vmem:[%s1691 + $0x38] sm:$0xff]
  %v1700 = vld [vmem:[%s1691 + $0x40] sm:$0xff]
  %v1701 = vld [vmem:[%s1691 + $0x48] sm:$0xff]
  %v1702 = vld [vmem:[%s1691 + $0x50] sm:$0xff]
  %v1703 = vld [vmem:[%s1691 + $0x58] sm:$0xff]
  %v1704 = vld [vmem:[%s1691 + $0x60] sm:$0xff]
  %v1705 = vld [vmem:[%s1691 + $0x68] sm:$0xff]
  %v1706 = vld [vmem:[%s1691 + $0x70] sm:$0xff]
  %v1707 = vld [vmem:[%s1691 + $0x78] sm:$0xff]
  %v1708 = vld [vmem:[%s1691 + $0x80] sm:$0xff]
  %v1709 = vld [vmem:[%s1691 + $0x88] sm:$0xff]
  %v1710 = vld [vmem:[%s1691 + $0x90] sm:$0xff]
  %v1711 = vld [vmem:[%s1691 + $0x98] sm:$0xff]
  %v1712 = vld [vmem:[%s1691 + $0xa0] sm:$0xff]
  %v1713 = vld [vmem:[%s1691 + $0xa8] sm:$0xff]
  %v1714 = vld [vmem:[%s1691 + $0xb0] sm:$0xff]
  %v1715 = vld [vmem:[%s1691 + $0xb8] sm:$0xff]
  %v1716 = vld [vmem:[%s1691 + $0xc0] sm:$0xff]
  %v1717 = vld [vmem:[%s1691 + $0xc8] sm:$0xff]
  %v1718 = vld [vmem:[%s1691 + $0xd0] sm:$0xff]
  %v1719 = vld [vmem:[%s1691 + $0xd8] sm:$0xff]
  %v1720 = vld [vmem:[%s1691 + $0xe0] sm:$0xff]
  %v1721 = vld [vmem:[%s1691 + $0xe8] sm:$0xff]
  %v1722 = vld [vmem:[%s1691 + $0xf0] sm:$0xff]
  %v1723 = vld [vmem:[%s1691 + $0xf8] sm:$0xff]
  %v1756 = vunpack.c.l.b16 %v1692
  %v1757 = vunpack.c.h.b16 %v1692
  %v1758 = vunpack.c.l.b16 %v1693
  %v1759 = vunpack.c.h.b16 %v1693
  %v1760 = vunpack.c.l.b16 %v1694
  %v1761 = vunpack.c.h.b16 %v1694
  %v1762 = vunpack.c.l.b16 %v1695
  %v1763 = vunpack.c.h.b16 %v1695
  %v1764 = vunpack.c.l.b16 %v1696
  %v1765 = vunpack.c.h.b16 %v1696
  %v1766 = vunpack.c.l.b16 %v1697
  %v1767 = vunpack.c.h.b16 %v1697
  %v1768 = vunpack.c.l.b16 %v1698
  %v1769 = vunpack.c.h.b16 %v1698
  %v1770 = vunpack.c.l.b16 %v1699
  %v1771 = vunpack.c.h.b16 %v1699
  %v1772 = vunpack.c.l.b16 %v1700
  %v1773 = vunpack.c.h.b16 %v1700
  %v1774 = vunpack.c.l.b16 %v1701
  %v1775 = vunpack.c.h.b16 %v1701
  %v1776 = vunpack.c.l.b16 %v1702
  %v1777 = vunpack.c.h.b16 %v1702
  %v1778 = vunpack.c.l.b16 %v1703
  %v1779 = vunpack.c.h.b16 %v1703
  %v1780 = vunpack.c.l.b16 %v1704
  %v1781 = vunpack.c.h.b16 %v1704
  %v1782 = vunpack.c.l.b16 %v1705
  %v1783 = vunpack.c.h.b16 %v1705
  %v1784 = vunpack.c.l.b16 %v1706
  %v1785 = vunpack.c.h.b16 %v1706
  %v1786 = vunpack.c.l.b16 %v1707
  %v1787 = vunpack.c.h.b16 %v1707
  %v1788 = vunpack.c.l.b16 %v1708
  %v1789 = vunpack.c.h.b16 %v1708
  %v1790 = vunpack.c.l.b16 %v1709
  %v1791 = vunpack.c.h.b16 %v1709
  %v1792 = vunpack.c.l.b16 %v1710
  %v1793 = vunpack.c.h.b16 %v1710
  %v1794 = vunpack.c.l.b16 %v1711
  %v1795 = vunpack.c.h.b16 %v1711
  %v1796 = vunpack.c.l.b16 %v1712
  %v1797 = vunpack.c.h.b16 %v1712
  %v1798 = vunpack.c.l.b16 %v1713
  %v1799 = vunpack.c.h.b16 %v1713
  %v1800 = vunpack.c.l.b16 %v1714
  %v1801 = vunpack.c.h.b16 %v1714
  %v1802 = vunpack.c.l.b16 %v1715
  %v1803 = vunpack.c.h.b16 %v1715
  %v1804 = vunpack.c.l.b16 %v1716
  %v1805 = vunpack.c.h.b16 %v1716
  %v1806 = vunpack.c.l.b16 %v1717
  %v1807 = vunpack.c.h.b16 %v1717
  %v1808 = vunpack.c.l.b16 %v1718
  %v1809 = vunpack.c.h.b16 %v1718
  %v1810 = vunpack.c.l.b16 %v1719
  %v1811 = vunpack.c.h.b16 %v1719
  %v1812 = vunpack.c.l.b16 %v1720
  %v1813 = vunpack.c.h.b16 %v1720
  %v1814 = vunpack.c.l.b16 %v1721
  %v1815 = vunpack.c.h.b16 %v1721
  %v1816 = vunpack.c.l.b16 %v1722
  %v1817 = vunpack.c.h.b16 %v1722
  %v1818 = vunpack.c.l.b16 %v1723
  %v1819 = vunpack.c.h.b16 %v1723
  %v1820 = vpack.c.b16 %v1758, %v1756
  %v1821 = vpack.c.b16 %v1759, %v1757
  %v1822 = vpack.c.b16 %v1762, %v1760
  %v1823 = vpack.c.b16 %v1763, %v1761
  %v1824 = vpack.c.b16 %v1766, %v1764
  %v1825 = vpack.c.b16 %v1767, %v1765
  %v1826 = vpack.c.b16 %v1770, %v1768
  %v1827 = vpack.c.b16 %v1771, %v1769
  %v1828 = vpack.c.b16 %v1774, %v1772
  %v1829 = vpack.c.b16 %v1775, %v1773
  %v1830 = vpack.c.b16 %v1778, %v1776
  %v1831 = vpack.c.b16 %v1779, %v1777
  %v1832 = vpack.c.b16 %v1782, %v1780
  %v1833 = vpack.c.b16 %v1783, %v1781
  %v1834 = vpack.c.b16 %v1786, %v1784
  %v1835 = vpack.c.b16 %v1787, %v1785
  %v1836 = vpack.c.b16 %v1790, %v1788
  %v1837 = vpack.c.b16 %v1791, %v1789
  %v1838 = vpack.c.b16 %v1794, %v1792
  %v1839 = vpack.c.b16 %v1795, %v1793
  %v1840 = vpack.c.b16 %v1798, %v1796
  %v1841 = vpack.c.b16 %v1799, %v1797
  %v1842 = vpack.c.b16 %v1802, %v1800
  %v1843 = vpack.c.b16 %v1803, %v1801
  %v1844 = vpack.c.b16 %v1806, %v1804
  %v1845 = vpack.c.b16 %v1807, %v1805
  %v1846 = vpack.c.b16 %v1810, %v1808
  %v1847 = vpack.c.b16 %v1811, %v1809
  %v1848 = vpack.c.b16 %v1814, %v1812
  %v1849 = vpack.c.b16 %v1815, %v1813
  %v1850 = vpack.c.b16 %v1818, %v1816
  %v1851 = vpack.c.b16 %v1819, %v1817
  %1884 = vmatprep.subr.bf16.mxu0 %v1835
  %1885 = vmatpush1.bf16.msra.mxu0 %v1834
  %1886 = vmatprep.subr.bf16.mxu0 %v1833
  %1887 = vmatpush1.bf16.msra.mxu0 %v1832
  %1888 = vmatprep.subr.bf16.mxu0 %v1831
  %1889 = vmatpush1.bf16.msra.mxu0 %v1830
  %1890 = vmatprep.subr.bf16.mxu0 %v1829
  %1891 = vmatpush1.bf16.msra.mxu0 %v1828
  %1892 = vmatprep.subr.bf16.mxu0 %v1827
  %1893 = vmatpush1.bf16.msra.mxu0 %v1826
  %1894 = vmatprep.subr.bf16.mxu0 %v1825
  %1895 = vmatpush1.bf16.msra.mxu0 %v1824
  %1896 = vmatprep.subr.bf16.mxu0 %v1823
  %1897 = vmatpush1.bf16.msra.mxu0 %v1822
  %1898 = vmatprep.subr.bf16.mxu0 %v1821
  %1899 = vmatpush1.bf16.msra.mxu0 %v1820
  %1900 = vmatprep.subr.bf16.mxu0 %v1851
  %1901 = vmatpush2.bf16.msra.mxu0 %v1850
  %1902 = vmatprep.subr.bf16.mxu0 %v1849
  %1903 = vmatpush2.bf16.msra.mxu0 %v1848
  %1904 = vmatprep.subr.bf16.mxu0 %v1847
  %1905 = vmatpush2.bf16.msra.mxu0 %v1846
  %1906 = vmatprep.subr.bf16.mxu0 %v1845
  %1907 = vmatpush2.bf16.msra.mxu0 %v1844
  %1908 = vmatprep.subr.bf16.mxu0 %v1843
  %1909 = vmatpush2.bf16.msra.mxu0 %v1842
  %1910 = vmatprep.subr.bf16.mxu0 %v1841
  %1911 = vmatpush2.bf16.msra.mxu0 %v1840
  %1912 = vmatprep.subr.bf16.mxu0 %v1839
  %1913 = vmatpush2.bf16.msra.mxu0 %v1838
  %1914 = vmatprep.subr.bf16.mxu0 %v1837
  %1915 = vmatpush2.bf16.msra.mxu0 %v1836
  %1916 = vmatprep.mubr.bf16.mxu0 %v1690
  %1917 = vmatmul.mubr.bf16.gmra.mxu0 %v1689
  %v1918 = vpop.f32.mrf.mxu0
  %v1919 = vadd.f32 0.0, %v1918
  %v1920 = vpop.f32.mrf.mxu0
  %v1921 = vadd.f32 0.0, %v1920
  %v1922 = vpop.f32.mrf.mxu0
  %v1923 = vadd.f32 0.0, %v1922
  %v1924 = vpop.f32.mrf.mxu0
  %v1925 = vadd.f32 0.0, %v1924
  %1926 = vdwg.mxu0
  %v1959 = vunpack.c.l.b16 %v1603
  %v1960 = vunpack.c.h.b16 %v1603
  %v1961 = vunpack.c.l.b16 %v1604
  %v1962 = vunpack.c.h.b16 %v1604
  %v1963 = vunpack.c.l.b16 %v1605
  %v1964 = vunpack.c.h.b16 %v1605
  %v1965 = vunpack.c.l.b16 %v1606
  %v1966 = vunpack.c.h.b16 %v1606
  %v1967 = vunpack.c.l.b16 %v1607
  %v1968 = vunpack.c.h.b16 %v1607
  %v1969 = vunpack.c.l.b16 %v1608
  %v1970 = vunpack.c.h.b16 %v1608
  %v1971 = vunpack.c.l.b16 %v1609
  %v1972 = vunpack.c.h.b16 %v1609
  %v1973 = vunpack.c.l.b16 %v1610
  %v1974 = vunpack.c.h.b16 %v1610
  %v1975 = vunpack.c.l.b16 %v1611
  %v1976 = vunpack.c.h.b16 %v1611
  %v1977 = vunpack.c.l.b16 %v1612
  %v1978 = vunpack.c.h.b16 %v1612
  %v1979 = vunpack.c.l.b16 %v1613
  %v1980 = vunpack.c.h.b16 %v1613
  %v1981 = vunpack.c.l.b16 %v1614
  %v1982 = vunpack.c.h.b16 %v1614
  %v1983 = vunpack.c.l.b16 %v1615
  %v1984 = vunpack.c.h.b16 %v1615
  %v1985 = vunpack.c.l.b16 %v1616
  %v1986 = vunpack.c.h.b16 %v1616
  %v1987 = vunpack.c.l.b16 %v1617
  %v1988 = vunpack.c.h.b16 %v1617
  %v1989 = vunpack.c.l.b16 %v1618
  %v1990 = vunpack.c.h.b16 %v1618
  %v1991 = vunpack.c.l.b16 %v1619
  %v1992 = vunpack.c.h.b16 %v1619
  %v1993 = vunpack.c.l.b16 %v1620
  %v1994 = vunpack.c.h.b16 %v1620
  %v1995 = vunpack.c.l.b16 %v1621
  %v1996 = vunpack.c.h.b16 %v1621
  %v1997 = vunpack.c.l.b16 %v1622
  %v1998 = vunpack.c.h.b16 %v1622
  %v1999 = vunpack.c.l.b16 %v1623
  %v2000 = vunpack.c.h.b16 %v1623
  %v2001 = vunpack.c.l.b16 %v1624
  %v2002 = vunpack.c.h.b16 %v1624
  %v2003 = vunpack.c.l.b16 %v1625
  %v2004 = vunpack.c.h.b16 %v1625
  %v2005 = vunpack.c.l.b16 %v1626
  %v2006 = vunpack.c.h.b16 %v1626
  %v2007 = vunpack.c.l.b16 %v1627
  %v2008 = vunpack.c.h.b16 %v1627
  %v2009 = vunpack.c.l.b16 %v1628
  %v2010 = vunpack.c.h.b16 %v1628
  %v2011 = vunpack.c.l.b16 %v1629
  %v2012 = vunpack.c.h.b16 %v1629
  %v2013 = vunpack.c.l.b16 %v1630
  %v2014 = vunpack.c.h.b16 %v1630
  %v2015 = vunpack.c.l.b16 %v1631
  %v2016 = vunpack.c.h.b16 %v1631
  %v2017 = vunpack.c.l.b16 %v1632
  %v2018 = vunpack.c.h.b16 %v1632
  %v2019 = vunpack.c.l.b16 %v1633
  %v2020 = vunpack.c.h.b16 %v1633
  %v2021 = vunpack.c.l.b16 %v1634
  %v2022 = vunpack.c.h.b16 %v1634
  %v2023 = vpack.c.b16 %v1961, %v1959
  %v2024 = vpack.c.b16 %v1962, %v1960
  %v2025 = vpack.c.b16 %v1965, %v1963
  %v2026 = vpack.c.b16 %v1966, %v1964
  %v2027 = vpack.c.b16 %v1969, %v1967
  %v2028 = vpack.c.b16 %v1970, %v1968
  %v2029 = vpack.c.b16 %v1973, %v1971
  %v2030 = vpack.c.b16 %v1974, %v1972
  %v2031 = vpack.c.b16 %v1977, %v1975
  %v2032 = vpack.c.b16 %v1978, %v1976
  %v2033 = vpack.c.b16 %v1981, %v1979
  %v2034 = vpack.c.b16 %v1982, %v1980
  %v2035 = vpack.c.b16 %v1985, %v1983
  %v2036 = vpack.c.b16 %v1986, %v1984
  %v2037 = vpack.c.b16 %v1989, %v1987
  %v2038 = vpack.c.b16 %v1990, %v1988
  %v2039 = vpack.c.b16 %v1993, %v1991
  %v2040 = vpack.c.b16 %v1994, %v1992
  %v2041 = vpack.c.b16 %v1997, %v1995
  %v2042 = vpack.c.b16 %v1998, %v1996
  %v2043 = vpack.c.b16 %v2001, %v1999
  %v2044 = vpack.c.b16 %v2002, %v2000
  %v2045 = vpack.c.b16 %v2005, %v2003
  %v2046 = vpack.c.b16 %v2006, %v2004
  %v2047 = vpack.c.b16 %v2009, %v2007
  %v2048 = vpack.c.b16 %v2010, %v2008
  %v2049 = vpack.c.b16 %v2013, %v2011
  %v2050 = vpack.c.b16 %v2014, %v2012
  %v2051 = vpack.c.b16 %v2017, %v2015
  %v2052 = vpack.c.b16 %v2018, %v2016
  %v2053 = vpack.c.b16 %v2021, %v2019
  %v2054 = vpack.c.b16 %v2022, %v2020
  %2087 = vmatprep.subr.bf16.mxu0 %v2038
  %2088 = vmatpush1.bf16.msra.mxu0 %v2037
  %2089 = vmatprep.subr.bf16.mxu0 %v2036
  %2090 = vmatpush1.bf16.msra.mxu0 %v2035
  %2091 = vmatprep.subr.bf16.mxu0 %v2034
  %2092 = vmatpush1.bf16.msra.mxu0 %v2033
  %2093 = vmatprep.subr.bf16.mxu0 %v2032
  %2094 = vmatpush1.bf16.msra.mxu0 %v2031
  %2095 = vmatprep.subr.bf16.mxu0 %v2030
  %2096 = vmatpush1.bf16.msra.mxu0 %v2029
  %2097 = vmatprep.subr.bf16.mxu0 %v2028
  %2098 = vmatpush1.bf16.msra.mxu0 %v2027
  %2099 = vmatprep.subr.bf16.mxu0 %v2026
  %2100 = vmatpush1.bf16.msra.mxu0 %v2025
  %2101 = vmatprep.subr.bf16.mxu0 %v2024
  %2102 = vmatpush1.bf16.msra.mxu0 %v2023
  %2103 = vmatprep.subr.bf16.mxu0 %v2054
  %2104 = vmatpush2.bf16.msra.mxu0 %v2053
  %2105 = vmatprep.subr.bf16.mxu0 %v2052
  %2106 = vmatpush2.bf16.msra.mxu0 %v2051
  %2107 = vmatprep.subr.bf16.mxu0 %v2050
  %2108 = vmatpush2.bf16.msra.mxu0 %v2049
  %2109 = vmatprep.subr.bf16.mxu0 %v2048
  %2110 = vmatpush2.bf16.msra.mxu0 %v2047
  %2111 = vmatprep.subr.bf16.mxu0 %v2046
  %2112 = vmatpush2.bf16.msra.mxu0 %v2045
  %2113 = vmatprep.subr.bf16.mxu0 %v2044
  %2114 = vmatpush2.bf16.msra.mxu0 %v2043
  %2115 = vmatprep.subr.bf16.mxu0 %v2042
  %2116 = vmatpush2.bf16.msra.mxu0 %v2041
  %2117 = vmatprep.subr.bf16.mxu0 %v2040
  %2118 = vmatpush2.bf16.msra.mxu0 %v2039
  %2119 = vmatprep.mubr.bf16.mxu0 %v1602
  %2120 = vmatmul.mubr.bf16.gmra.mxu0 %v1601
  %v2121 = vpop.f32.mrf.mxu0
  %v2122 = vadd.f32 %v1919, %v2121
  %v2123 = vpop.f32.mrf.mxu0
  %v2124 = vadd.f32 %v1921, %v2123
  %v2125 = vpop.f32.mrf.mxu0
  %v2126 = vadd.f32 %v1923, %v2125
  %v2127 = vpop.f32.mrf.mxu0
  %v2128 = vadd.f32 %v1925, %v2127
  %2129 = vdwg.mxu0
  %s2130 = scalar_lea.vmem %s7, 16
  %v2131 = vld [vmem:[%s2130] sm:$0xf]
  %v2132 = vld [vmem:[%s2130 + $0x4] sm:$0xf]
  %v2135 = vunpack.c.l.b16 %v2131
  %v2136 = vunpack.c.l.b16 %v2132
  %v2137 = vpack.c.b16 %v2136, %v2135
  %v2139 = vsel %vm1554, %v2137, 0
  %2141 = vmatprep.subr.bf16.mxu0 0
  %2142 = vmatpush1.bf16.msra.mxu0 0
  %2143 = vmatprep.subr.bf16.mxu0 0
  %2144 = vmatpush1.bf16.msra.mxu0 0
  %2145 = vmatprep.subr.bf16.mxu0 0
  %2146 = vmatpush1.bf16.msra.mxu0 0
  %2147 = vmatprep.subr.bf16.mxu0 0
  %2148 = vmatpush1.bf16.msra.mxu0 0
  %2149 = vmatprep.subr.bf16.mxu0 0
  %2150 = vmatpush1.bf16.msra.mxu0 0
  %2151 = vmatprep.subr.bf16.mxu0 0
  %2152 = vmatpush1.bf16.msra.mxu0 0
  %2153 = vmatprep.subr.bf16.mxu0 0
  %2154 = vmatpush1.bf16.msra.mxu0 0
  %2155 = vmatprep.subr.bf16.mxu0 %v1546
  %2156 = vmatpush1.bf16.msra.mxu0 %v1545
  %2157 = vmatprep.subr.bf16.mxu0 0
  %2158 = vmatpush2.bf16.msra.mxu0 0
  %2159 = vmatprep.subr.bf16.mxu0 0
  %2160 = vmatpush2.bf16.msra.mxu0 0
  %2161 = vmatprep.subr.bf16.mxu0 0
  %2162 = vmatpush2.bf16.msra.mxu0 0
  %2163 = vmatprep.subr.bf16.mxu0 0
  %2164 = vmatpush2.bf16.msra.mxu0 0
  %2165 = vmatprep.subr.bf16.mxu0 0
  %2166 = vmatpush2.bf16.msra.mxu0 0
  %2167 = vmatprep.subr.bf16.mxu0 0
  %2168 = vmatpush2.bf16.msra.mxu0 0
  %2169 = vmatprep.subr.bf16.mxu0 0
  %2170 = vmatpush2.bf16.msra.mxu0 0
  %2171 = vmatprep.subr.bf16.mxu0 0
  %2172 = vmatpush2.bf16.msra.mxu0 0
  %2173 = vmatprep.mubr.bf16.mxu0 0
  %2174 = vmatmul.mubr.bf16.gmra.mxu0 %v2139
  %v2175 = vpop.f32.mrf.mxu0
  %v2176 = vadd.f32 0.0, %v2175
  %v2177 = vpop.f32.mrf.mxu0
  %v2178 = vadd.f32 0.0, %v2177
  %v2179 = vpop.f32.mrf.mxu0
  %v2180 = vadd.f32 0.0, %v2179
  %v2181 = vpop.f32.mrf.mxu0
  %v2182 = vadd.f32 0.0, %v2181
  %2183 = vdwg.mxu0
  %v2184 = vpack.c.bf16 %v2180, %v2176
  %v2185 = vpack.c.bf16 %v2182, %v2178
  %s2186 = scalar_lea.vmem %s8, 512
  %v2187 = vld [vmem:[%s2186] sm:$0xff]
  %v2188 = vld [vmem:[%s2186 + $0x8] sm:$0xff]
  %v2189 = vld [vmem:[%s2186 + $0x10] sm:$0xff]
  %v2190 = vld [vmem:[%s2186 + $0x18] sm:$0xff]
  %v2191 = vld [vmem:[%s2186 + $0x20] sm:$0xff]
  %v2192 = vld [vmem:[%s2186 + $0x28] sm:$0xff]
  %v2193 = vld [vmem:[%s2186 + $0x30] sm:$0xff]
  %v2194 = vld [vmem:[%s2186 + $0x38] sm:$0xff]
  %v2195 = vld [vmem:[%s2186 + $0x40] sm:$0xff]
  %v2196 = vld [vmem:[%s2186 + $0x48] sm:$0xff]
  %v2197 = vld [vmem:[%s2186 + $0x50] sm:$0xff]
  %v2198 = vld [vmem:[%s2186 + $0x58] sm:$0xff]
  %v2199 = vld [vmem:[%s2186 + $0x60] sm:$0xff]
  %v2200 = vld [vmem:[%s2186 + $0x68] sm:$0xff]
  %v2201 = vld [vmem:[%s2186 + $0x70] sm:$0xff]
  %v2202 = vld [vmem:[%s2186 + $0x78] sm:$0xff]
  %v2203 = vld [vmem:[%s2186 + $0x80] sm:$0xff]
  %v2204 = vld [vmem:[%s2186 + $0x88] sm:$0xff]
  %v2205 = vld [vmem:[%s2186 + $0x90] sm:$0xff]
  %v2206 = vld [vmem:[%s2186 + $0x98] sm:$0xff]
  %v2207 = vld [vmem:[%s2186 + $0xa0] sm:$0xff]
  %v2208 = vld [vmem:[%s2186 + $0xa8] sm:$0xff]
  %v2209 = vld [vmem:[%s2186 + $0xb0] sm:$0xff]
  %v2210 = vld [vmem:[%s2186 + $0xb8] sm:$0xff]
  %v2211 = vld [vmem:[%s2186 + $0xc0] sm:$0xff]
  %v2212 = vld [vmem:[%s2186 + $0xc8] sm:$0xff]
  %v2213 = vld [vmem:[%s2186 + $0xd0] sm:$0xff]
  %v2214 = vld [vmem:[%s2186 + $0xd8] sm:$0xff]
  %v2215 = vld [vmem:[%s2186 + $0xe0] sm:$0xff]
  %v2216 = vld [vmem:[%s2186 + $0xe8] sm:$0xff]
  %v2217 = vld [vmem:[%s2186 + $0xf0] sm:$0xff]
  %v2218 = vld [vmem:[%s2186 + $0xf8] sm:$0xff]
  %v2251 = vunpack.c.l.b16 %v2187
  %v2252 = vunpack.c.h.b16 %v2187
  %v2253 = vunpack.c.l.b16 %v2188
  %v2254 = vunpack.c.h.b16 %v2188
  %v2255 = vunpack.c.l.b16 %v2189
  %v2256 = vunpack.c.h.b16 %v2189
  %v2257 = vunpack.c.l.b16 %v2190
  %v2258 = vunpack.c.h.b16 %v2190
  %v2259 = vunpack.c.l.b16 %v2191
  %v2260 = vunpack.c.h.b16 %v2191
  %v2261 = vunpack.c.l.b16 %v2192
  %v2262 = vunpack.c.h.b16 %v2192
  %v2263 = vunpack.c.l.b16 %v2193
  %v2264 = vunpack.c.h.b16 %v2193
  %v2265 = vunpack.c.l.b16 %v2194
  %v2266 = vunpack.c.h.b16 %v2194
  %v2267 = vunpack.c.l.b16 %v2195
  %v2268 = vunpack.c.h.b16 %v2195
  %v2269 = vunpack.c.l.b16 %v2196
  %v2270 = vunpack.c.h.b16 %v2196
  %v2271 = vunpack.c.l.b16 %v2197
  %v2272 = vunpack.c.h.b16 %v2197
  %v2273 = vunpack.c.l.b16 %v2198
  %v2274 = vunpack.c.h.b16 %v2198
  %v2275 = vunpack.c.l.b16 %v2199
  %v2276 = vunpack.c.h.b16 %v2199
  %v2277 = vunpack.c.l.b16 %v2200
  %v2278 = vunpack.c.h.b16 %v2200
  %v2279 = vunpack.c.l.b16 %v2201
  %v2280 = vunpack.c.h.b16 %v2201
  %v2281 = vunpack.c.l.b16 %v2202
  %v2282 = vunpack.c.h.b16 %v2202
  %v2283 = vunpack.c.l.b16 %v2203
  %v2284 = vunpack.c.h.b16 %v2203
  %v2285 = vunpack.c.l.b16 %v2204
  %v2286 = vunpack.c.h.b16 %v2204
  %v2287 = vunpack.c.l.b16 %v2205
  %v2288 = vunpack.c.h.b16 %v2205
  %v2289 = vunpack.c.l.b16 %v2206
  %v2290 = vunpack.c.h.b16 %v2206
  %v2291 = vunpack.c.l.b16 %v2207
  %v2292 = vunpack.c.h.b16 %v2207
  %v2293 = vunpack.c.l.b16 %v2208
  %v2294 = vunpack.c.h.b16 %v2208
  %v2295 = vunpack.c.l.b16 %v2209
  %v2296 = vunpack.c.h.b16 %v2209
  %v2297 = vunpack.c.l.b16 %v2210
  %v2298 = vunpack.c.h.b16 %v2210
  %v2299 = vunpack.c.l.b16 %v2211
  %v2300 = vunpack.c.h.b16 %v2211
  %v2301 = vunpack.c.l.b16 %v2212
  %v2302 = vunpack.c.h.b16 %v2212
  %v2303 = vunpack.c.l.b16 %v2213
  %v2304 = vunpack.c.h.b16 %v2213
  %v2305 = vunpack.c.l.b16 %v2214
  %v2306 = vunpack.c.h.b16 %v2214
  %v2307 = vunpack.c.l.b16 %v2215
  %v2308 = vunpack.c.h.b16 %v2215
  %v2309 = vunpack.c.l.b16 %v2216
  %v2310 = vunpack.c.h.b16 %v2216
  %v2311 = vunpack.c.l.b16 %v2217
  %v2312 = vunpack.c.h.b16 %v2217
  %v2313 = vunpack.c.l.b16 %v2218
  %v2314 = vunpack.c.h.b16 %v2218
  %v2315 = vpack.c.b16 %v2253, %v2251
  %v2316 = vpack.c.b16 %v2254, %v2252
  %v2317 = vpack.c.b16 %v2257, %v2255
  %v2318 = vpack.c.b16 %v2258, %v2256
  %v2319 = vpack.c.b16 %v2261, %v2259
  %v2320 = vpack.c.b16 %v2262, %v2260
  %v2321 = vpack.c.b16 %v2265, %v2263
  %v2322 = vpack.c.b16 %v2266, %v2264
  %v2323 = vpack.c.b16 %v2269, %v2267
  %v2324 = vpack.c.b16 %v2270, %v2268
  %v2325 = vpack.c.b16 %v2273, %v2271
  %v2326 = vpack.c.b16 %v2274, %v2272
  %v2327 = vpack.c.b16 %v2277, %v2275
  %v2328 = vpack.c.b16 %v2278, %v2276
  %v2329 = vpack.c.b16 %v2281, %v2279
  %v2330 = vpack.c.b16 %v2282, %v2280
  %v2331 = vpack.c.b16 %v2285, %v2283
  %v2332 = vpack.c.b16 %v2286, %v2284
  %v2333 = vpack.c.b16 %v2289, %v2287
  %v2334 = vpack.c.b16 %v2290, %v2288
  %v2335 = vpack.c.b16 %v2293, %v2291
  %v2336 = vpack.c.b16 %v2294, %v2292
  %v2337 = vpack.c.b16 %v2297, %v2295
  %v2338 = vpack.c.b16 %v2298, %v2296
  %v2339 = vpack.c.b16 %v2301, %v2299
  %v2340 = vpack.c.b16 %v2302, %v2300
  %v2341 = vpack.c.b16 %v2305, %v2303
  %v2342 = vpack.c.b16 %v2306, %v2304
  %v2343 = vpack.c.b16 %v2309, %v2307
  %v2344 = vpack.c.b16 %v2310, %v2308
  %v2345 = vpack.c.b16 %v2313, %v2311
  %v2346 = vpack.c.b16 %v2314, %v2312
  %2379 = vmatprep.subr.bf16.mxu0 %v2330
  %2380 = vmatpush1.bf16.msra.mxu0 %v2329
  %2381 = vmatprep.subr.bf16.mxu0 %v2328
  %2382 = vmatpush1.bf16.msra.mxu0 %v2327
  %2383 = vmatprep.subr.bf16.mxu0 %v2326
  %2384 = vmatpush1.bf16.msra.mxu0 %v2325
  %2385 = vmatprep.subr.bf16.mxu0 %v2324
  %2386 = vmatpush1.bf16.msra.mxu0 %v2323
  %2387 = vmatprep.subr.bf16.mxu0 %v2322
  %2388 = vmatpush1.bf16.msra.mxu0 %v2321
  %2389 = vmatprep.subr.bf16.mxu0 %v2320
  %2390 = vmatpush1.bf16.msra.mxu0 %v2319
  %2391 = vmatprep.subr.bf16.mxu0 %v2318
  %2392 = vmatpush1.bf16.msra.mxu0 %v2317
  %2393 = vmatprep.subr.bf16.mxu0 %v2316
  %2394 = vmatpush1.bf16.msra.mxu0 %v2315
  %2395 = vmatprep.subr.bf16.mxu0 %v2346
  %2396 = vmatpush2.bf16.msra.mxu0 %v2345
  %2397 = vmatprep.subr.bf16.mxu0 %v2344
  %2398 = vmatpush2.bf16.msra.mxu0 %v2343
  %2399 = vmatprep.subr.bf16.mxu0 %v2342
  %2400 = vmatpush2.bf16.msra.mxu0 %v2341
  %2401 = vmatprep.subr.bf16.mxu0 %v2340
  %2402 = vmatpush2.bf16.msra.mxu0 %v2339
  %2403 = vmatprep.subr.bf16.mxu0 %v2338
  %2404 = vmatpush2.bf16.msra.mxu0 %v2337
  %2405 = vmatprep.subr.bf16.mxu0 %v2336
  %2406 = vmatpush2.bf16.msra.mxu0 %v2335
  %2407 = vmatprep.subr.bf16.mxu0 %v2334
  %2408 = vmatpush2.bf16.msra.mxu0 %v2333
  %2409 = vmatprep.subr.bf16.mxu0 %v2332
  %2410 = vmatpush2.bf16.msra.mxu0 %v2331
  %2411 = vmatprep.mubr.bf16.mxu0 %v2185
  %2412 = vmatmul.mubr.bf16.gmra.mxu0 %v2184
  %v2413 = vpop.f32.mrf.mxu0
  %v2414 = vadd.f32 0.0, %v2413
  %v2415 = vpop.f32.mrf.mxu0
  %v2416 = vadd.f32 0.0, %v2415
  %v2417 = vpop.f32.mrf.mxu0
  %v2418 = vadd.f32 0.0, %v2417
  %v2419 = vpop.f32.mrf.mxu0
  %v2420 = vadd.f32 0.0, %v2419
  %2421 = vdwg.mxu0
  %v2422 = vadd.f32 %v2122, %v2414
  %v2423 = vadd.f32 %v2124, %v2416
  %v2424 = vadd.f32 %v2126, %v2418
  %v2425 = vadd.f32 %v2128, %v2420
  %v2426 = vld [vmem:[%s9] sm:$0x3]
  %v2428 = vlaneseq
  %v2429 = vshrl.u32 %v2428, 7
  %v2430 = vsub.s32 0, %v2429
  %v2431 = vrot.slane %v2426, %v2430
  %v2432 = vlaneseq
  %v2433 = vshrl.u32 %v2432, 7
  %v2434 = vsub.s32 1, %v2433
  %v2435 = vrot.slane %v2426, %v2434
  %v2438 = vadd.f32 %v2422, %v2431
  %v2439 = vadd.f32 %v2423, %v2435
  %v2440 = vadd.f32 %v2424, %v2431
  %v2441 = vadd.f32 %v2425, %v2435
  %v2442 = vpack.c.bf16 %v2440, %v2438
  %v2443 = vpack.c.bf16 %v2441, %v2439
  %2444 = vmatprep.subr.bf16.mxu0 0
  %2445 = vmatpush1.bf16.msra.mxu0 0
  %2446 = vmatprep.subr.bf16.mxu0 0
  %2447 = vmatpush1.bf16.msra.mxu0 0
  %2448 = vmatprep.subr.bf16.mxu0 0
  %2449 = vmatpush1.bf16.msra.mxu0 0
  %2450 = vmatprep.subr.bf16.mxu0 0
  %2451 = vmatpush1.bf16.msra.mxu0 0
  %2452 = vmatprep.subr.bf16.mxu0 0
  %2453 = vmatpush1.bf16.msra.mxu0 0
  %2454 = vmatprep.subr.bf16.mxu0 0
  %2455 = vmatpush1.bf16.msra.mxu0 0
  %2456 = vmatprep.subr.bf16.mxu0 0
  %2457 = vmatpush1.bf16.msra.mxu0 0
  %2458 = vmatprep.subr.bf16.mxu0 %v2443
  %2459 = vmatpush1.bf16.msra.mxu0 %v2442
  %2460 = vmatprep.subr.bf16.mxu0 0
  %2461 = vmatpush2.bf16.msra.mxu0 0
  %2462 = vmatprep.subr.bf16.mxu0 0
  %2463 = vmatpush2.bf16.msra.mxu0 0
  %2464 = vmatprep.subr.bf16.mxu0 0
  %2465 = vmatpush2.bf16.msra.mxu0 0
  %2466 = vmatprep.subr.bf16.mxu0 0
  %2467 = vmatpush2.bf16.msra.mxu0 0
  %2468 = vmatprep.subr.bf16.mxu0 0
  %2469 = vmatpush2.bf16.msra.mxu0 0
  %2470 = vmatprep.subr.bf16.mxu0 0
  %2471 = vmatpush2.bf16.msra.mxu0 0
  %2472 = vmatprep.subr.bf16.mxu0 0
  %2473 = vmatpush2.bf16.msra.mxu0 0
  %2474 = vmatprep.subr.bf16.mxu0 0
  %2475 = vmatpush2.bf16.msra.mxu0 0
  %2476 = vmatprep.mubr.bf16.mxu0 0
  %2477 = vmatmul.mubr.bf16.gmra.mxu0 %v1556
  %v2478 = vpop.f32.mrf.mxu0
  %v2479 = vadd.f32 0.0, %v2478
  %v2480 = vpop.f32.mrf.mxu0
  %v2481 = vadd.f32 0.0, %v2480
  %v2482 = vpop.f32.mrf.mxu0
  %v2483 = vadd.f32 0.0, %v2482
  %v2484 = vpop.f32.mrf.mxu0
  %v2485 = vadd.f32 0.0, %v2484
  %2486 = vdwg.mxu0
  %v2487 = vpack.c.bf16 %v2483, %v2479
  %v2488 = vpack.c.bf16 %v2485, %v2481
  %v2489 = vld [vmem:[%s10] sm:$0xff]
  %v2490 = vld [vmem:[%s10 + $0x8] sm:$0xff]
  %v2491 = vld [vmem:[%s10 + $0x10] sm:$0xff]
  %v2492 = vld [vmem:[%s10 + $0x18] sm:$0xff]
  %v2493 = vld [vmem:[%s10 + $0x20] sm:$0xff]
  %v2494 = vld [vmem:[%s10 + $0x28] sm:$0xff]
  %v2495 = vld [vmem:[%s10 + $0x30] sm:$0xff]
  %v2496 = vld [vmem:[%s10 + $0x38] sm:$0xff]
  %v2497 = vld [vmem:[%s10 + $0x40] sm:$0xff]
  %v2498 = vld [vmem:[%s10 + $0x48] sm:$0xff]
  %v2499 = vld [vmem:[%s10 + $0x50] sm:$0xff]
  %v2500 = vld [vmem:[%s10 + $0x58] sm:$0xff]
  %v2501 = vld [vmem:[%s10 + $0x60] sm:$0xff]
  %v2502 = vld [vmem:[%s10 + $0x68] sm:$0xff]
  %v2503 = vld [vmem:[%s10 + $0x70] sm:$0xff]
  %v2504 = vld [vmem:[%s10 + $0x78] sm:$0xff]
  %v2505 = vld [vmem:[%s10 + $0x80] sm:$0xff]
  %v2506 = vld [vmem:[%s10 + $0x88] sm:$0xff]
  %v2507 = vld [vmem:[%s10 + $0x90] sm:$0xff]
  %v2508 = vld [vmem:[%s10 + $0x98] sm:$0xff]
  %v2509 = vld [vmem:[%s10 + $0xa0] sm:$0xff]
  %v2510 = vld [vmem:[%s10 + $0xa8] sm:$0xff]
  %v2511 = vld [vmem:[%s10 + $0xb0] sm:$0xff]
  %v2512 = vld [vmem:[%s10 + $0xb8] sm:$0xff]
  %v2513 = vld [vmem:[%s10 + $0xc0] sm:$0xff]
  %v2514 = vld [vmem:[%s10 + $0xc8] sm:$0xff]
  %v2515 = vld [vmem:[%s10 + $0xd0] sm:$0xff]
  %v2516 = vld [vmem:[%s10 + $0xd8] sm:$0xff]
  %v2517 = vld [vmem:[%s10 + $0xe0] sm:$0xff]
  %v2518 = vld [vmem:[%s10 + $0xe8] sm:$0xff]
  %v2519 = vld [vmem:[%s10 + $0xf0] sm:$0xff]
  %v2520 = vld [vmem:[%s10 + $0xf8] sm:$0xff]
  %2521 = vmatprep.subr.bf16.mxu0 0
  %2522 = vmatpush1.bf16.msra.mxu0 0
  %2523 = vmatprep.subr.bf16.mxu0 0
  %2524 = vmatpush1.bf16.msra.mxu0 0
  %2525 = vmatprep.subr.bf16.mxu0 0
  %2526 = vmatpush1.bf16.msra.mxu0 0
  %2527 = vmatprep.subr.bf16.mxu0 0
  %2528 = vmatpush1.bf16.msra.mxu0 0
  %2529 = vmatprep.subr.bf16.mxu0 0
  %2530 = vmatpush1.bf16.msra.mxu0 0
  %2531 = vmatprep.subr.bf16.mxu0 0
  %2532 = vmatpush1.bf16.msra.mxu0 0
  %2533 = vmatprep.subr.bf16.mxu0 0
  %2534 = vmatpush1.bf16.msra.mxu0 0
  %2535 = vmatprep.subr.bf16.mxu0 %v2443
  %2536 = vmatpush1.bf16.msra.mxu0 %v2442
  %2537 = vmatprep.subr.bf16.mxu0 0
  %2538 = vmatpush2.bf16.msra.mxu0 0
  %2539 = vmatprep.subr.bf16.mxu0 0
  %2540 = vmatpush2.bf16.msra.mxu0 0
  %2541 = vmatprep.subr.bf16.mxu0 0
  %2542 = vmatpush2.bf16.msra.mxu0 0
  %2543 = vmatprep.subr.bf16.mxu0 0
  %2544 = vmatpush2.bf16.msra.mxu0 0
  %2545 = vmatprep.subr.bf16.mxu0 0
  %2546 = vmatpush2.bf16.msra.mxu0 0
  %2547 = vmatprep.subr.bf16.mxu0 0
  %2548 = vmatpush2.bf16.msra.mxu0 0
  %2549 = vmatprep.subr.bf16.mxu0 0
  %2550 = vmatpush2.bf16.msra.mxu0 0
  %2551 = vmatprep.subr.bf16.mxu0 0
  %2552 = vmatpush2.bf16.msra.mxu0 0
  %2553 = vmatprep.mubr.bf16.mxu0 0
  %2554 = vmatmul.mubr.bf16.gmra.mxu0 %v1644
  %v2555 = vpop.f32.mrf.mxu0
  %v2556 = vadd.f32 0.0, %v2555
  %v2557 = vpop.f32.mrf.mxu0
  %v2558 = vadd.f32 0.0, %v2557
  %v2559 = vpop.f32.mrf.mxu0
  %v2560 = vadd.f32 0.0, %v2559
  %v2561 = vpop.f32.mrf.mxu0
  %v2562 = vadd.f32 0.0, %v2561
  %2563 = vdwg.mxu0
  %v2564 = vpack.c.bf16 %v2560, %v2556
  %v2565 = vpack.c.bf16 %v2562, %v2558
  %s2566 = scalar_lea.vmem %s10, 256
  %v2567 = vld [vmem:[%s2566] sm:$0xff]
  %v2568 = vld [vmem:[%s2566 + $0x8] sm:$0xff]
  %v2569 = vld [vmem:[%s2566 + $0x10] sm:$0xff]
  %v2570 = vld [vmem:[%s2566 + $0x18] sm:$0xff]
  %v2571 = vld [vmem:[%s2566 + $0x20] sm:$0xff]
  %v2572 = vld [vmem:[%s2566 + $0x28] sm:$0xff]
  %v2573 = vld [vmem:[%s2566 + $0x30] sm:$0xff]
  %v2574 = vld [vmem:[%s2566 + $0x38] sm:$0xff]
  %v2575 = vld [vmem:[%s2566 + $0x40] sm:$0xff]
  %v2576 = vld [vmem:[%s2566 + $0x48] sm:$0xff]
  %v2577 = vld [vmem:[%s2566 + $0x50] sm:$0xff]
  %v2578 = vld [vmem:[%s2566 + $0x58] sm:$0xff]
  %v2579 = vld [vmem:[%s2566 + $0x60] sm:$0xff]
  %v2580 = vld [vmem:[%s2566 + $0x68] sm:$0xff]
  %v2581 = vld [vmem:[%s2566 + $0x70] sm:$0xff]
  %v2582 = vld [vmem:[%s2566 + $0x78] sm:$0xff]
  %v2583 = vld [vmem:[%s2566 + $0x80] sm:$0xff]
  %v2584 = vld [vmem:[%s2566 + $0x88] sm:$0xff]
  %v2585 = vld [vmem:[%s2566 + $0x90] sm:$0xff]
  %v2586 = vld [vmem:[%s2566 + $0x98] sm:$0xff]
  %v2587 = vld [vmem:[%s2566 + $0xa0] sm:$0xff]
  %v2588 = vld [vmem:[%s2566 + $0xa8] sm:$0xff]
  %v2589 = vld [vmem:[%s2566 + $0xb0] sm:$0xff]
  %v2590 = vld [vmem:[%s2566 + $0xb8] sm:$0xff]
  %v2591 = vld [vmem:[%s2566 + $0xc0] sm:$0xff]
  %v2592 = vld [vmem:[%s2566 + $0xc8] sm:$0xff]
  %v2593 = vld [vmem:[%s2566 + $0xd0] sm:$0xff]
  %v2594 = vld [vmem:[%s2566 + $0xd8] sm:$0xff]
  %v2595 = vld [vmem:[%s2566 + $0xe0] sm:$0xff]
  %v2596 = vld [vmem:[%s2566 + $0xe8] sm:$0xff]
  %v2597 = vld [vmem:[%s2566 + $0xf0] sm:$0xff]
  %v2598 = vld [vmem:[%s2566 + $0xf8] sm:$0xff]
  %v2631 = vunpack.c.l.b16 %v2567
  %v2632 = vunpack.c.h.b16 %v2567
  %v2633 = vunpack.c.l.b16 %v2568
  %v2634 = vunpack.c.h.b16 %v2568
  %v2635 = vunpack.c.l.b16 %v2569
  %v2636 = vunpack.c.h.b16 %v2569
  %v2637 = vunpack.c.l.b16 %v2570
  %v2638 = vunpack.c.h.b16 %v2570
  %v2639 = vunpack.c.l.b16 %v2571
  %v2640 = vunpack.c.h.b16 %v2571
  %v2641 = vunpack.c.l.b16 %v2572
  %v2642 = vunpack.c.h.b16 %v2572
  %v2643 = vunpack.c.l.b16 %v2573
  %v2644 = vunpack.c.h.b16 %v2573
  %v2645 = vunpack.c.l.b16 %v2574
  %v2646 = vunpack.c.h.b16 %v2574
  %v2647 = vunpack.c.l.b16 %v2575
  %v2648 = vunpack.c.h.b16 %v2575
  %v2649 = vunpack.c.l.b16 %v2576
  %v2650 = vunpack.c.h.b16 %v2576
  %v2651 = vunpack.c.l.b16 %v2577
  %v2652 = vunpack.c.h.b16 %v2577
  %v2653 = vunpack.c.l.b16 %v2578
  %v2654 = vunpack.c.h.b16 %v2578
  %v2655 = vunpack.c.l.b16 %v2579
  %v2656 = vunpack.c.h.b16 %v2579
  %v2657 = vunpack.c.l.b16 %v2580
  %v2658 = vunpack.c.h.b16 %v2580
  %v2659 = vunpack.c.l.b16 %v2581
  %v2660 = vunpack.c.h.b16 %v2581
  %v2661 = vunpack.c.l.b16 %v2582
  %v2662 = vunpack.c.h.b16 %v2582
  %v2663 = vunpack.c.l.b16 %v2583
  %v2664 = vunpack.c.h.b16 %v2583
  %v2665 = vunpack.c.l.b16 %v2584
  %v2666 = vunpack.c.h.b16 %v2584
  %v2667 = vunpack.c.l.b16 %v2585
  %v2668 = vunpack.c.h.b16 %v2585
  %v2669 = vunpack.c.l.b16 %v2586
  %v2670 = vunpack.c.h.b16 %v2586
  %v2671 = vunpack.c.l.b16 %v2587
  %v2672 = vunpack.c.h.b16 %v2587
  %v2673 = vunpack.c.l.b16 %v2588
  %v2674 = vunpack.c.h.b16 %v2588
  %v2675 = vunpack.c.l.b16 %v2589
  %v2676 = vunpack.c.h.b16 %v2589
  %v2677 = vunpack.c.l.b16 %v2590
  %v2678 = vunpack.c.h.b16 %v2590
  %v2679 = vunpack.c.l.b16 %v2591
  %v2680 = vunpack.c.h.b16 %v2591
  %v2681 = vunpack.c.l.b16 %v2592
  %v2682 = vunpack.c.h.b16 %v2592
  %v2683 = vunpack.c.l.b16 %v2593
  %v2684 = vunpack.c.h.b16 %v2593
  %v2685 = vunpack.c.l.b16 %v2594
  %v2686 = vunpack.c.h.b16 %v2594
  %v2687 = vunpack.c.l.b16 %v2595
  %v2688 = vunpack.c.h.b16 %v2595
  %v2689 = vunpack.c.l.b16 %v2596
  %v2690 = vunpack.c.h.b16 %v2596
  %v2691 = vunpack.c.l.b16 %v2597
  %v2692 = vunpack.c.h.b16 %v2597
  %v2693 = vunpack.c.l.b16 %v2598
  %v2694 = vunpack.c.h.b16 %v2598
  %v2695 = vpack.c.b16 %v2633, %v2631
  %v2696 = vpack.c.b16 %v2634, %v2632
  %v2697 = vpack.c.b16 %v2637, %v2635
  %v2698 = vpack.c.b16 %v2638, %v2636
  %v2699 = vpack.c.b16 %v2641, %v2639
  %v2700 = vpack.c.b16 %v2642, %v2640
  %v2701 = vpack.c.b16 %v2645, %v2643
  %v2702 = vpack.c.b16 %v2646, %v2644
  %v2703 = vpack.c.b16 %v2649, %v2647
  %v2704 = vpack.c.b16 %v2650, %v2648
  %v2705 = vpack.c.b16 %v2653, %v2651
  %v2706 = vpack.c.b16 %v2654, %v2652
  %v2707 = vpack.c.b16 %v2657, %v2655
  %v2708 = vpack.c.b16 %v2658, %v2656
  %v2709 = vpack.c.b16 %v2661, %v2659
  %v2710 = vpack.c.b16 %v2662, %v2660
  %v2711 = vpack.c.b16 %v2665, %v2663
  %v2712 = vpack.c.b16 %v2666, %v2664
  %v2713 = vpack.c.b16 %v2669, %v2667
  %v2714 = vpack.c.b16 %v2670, %v2668
  %v2715 = vpack.c.b16 %v2673, %v2671
  %v2716 = vpack.c.b16 %v2674, %v2672
  %v2717 = vpack.c.b16 %v2677, %v2675
  %v2718 = vpack.c.b16 %v2678, %v2676
  %v2719 = vpack.c.b16 %v2681, %v2679
  %v2720 = vpack.c.b16 %v2682, %v2680
  %v2721 = vpack.c.b16 %v2685, %v2683
  %v2722 = vpack.c.b16 %v2686, %v2684
  %v2723 = vpack.c.b16 %v2689, %v2687
  %v2724 = vpack.c.b16 %v2690, %v2688
  %v2725 = vpack.c.b16 %v2693, %v2691
  %v2726 = vpack.c.b16 %v2694, %v2692
  %2759 = vmatprep.subr.bf16.mxu0 %v2710
  %2760 = vmatpush1.bf16.msra.mxu0 %v2709
  %2761 = vmatprep.subr.bf16.mxu0 %v2708
  %2762 = vmatpush1.bf16.msra.mxu0 %v2707
  %2763 = vmatprep.subr.bf16.mxu0 %v2706
  %2764 = vmatpush1.bf16.msra.mxu0 %v2705
  %2765 = vmatprep.subr.bf16.mxu0 %v2704
  %2766 = vmatpush1.bf16.msra.mxu0 %v2703
  %2767 = vmatprep.subr.bf16.mxu0 %v2702
  %2768 = vmatpush1.bf16.msra.mxu0 %v2701
  %2769 = vmatprep.subr.bf16.mxu0 %v2700
  %2770 = vmatpush1.bf16.msra.mxu0 %v2699
  %2771 = vmatprep.subr.bf16.mxu0 %v2698
  %2772 = vmatpush1.bf16.msra.mxu0 %v2697
  %2773 = vmatprep.subr.bf16.mxu0 %v2696
  %2774 = vmatpush1.bf16.msra.mxu0 %v2695
  %2775 = vmatprep.subr.bf16.mxu0 %v2726
  %2776 = vmatpush2.bf16.msra.mxu0 %v2725
  %2777 = vmatprep.subr.bf16.mxu0 %v2724
  %2778 = vmatpush2.bf16.msra.mxu0 %v2723
  %2779 = vmatprep.subr.bf16.mxu0 %v2722
  %2780 = vmatpush2.bf16.msra.mxu0 %v2721
  %2781 = vmatprep.subr.bf16.mxu0 %v2720
  %2782 = vmatpush2.bf16.msra.mxu0 %v2719
  %2783 = vmatprep.subr.bf16.mxu0 %v2718
  %2784 = vmatpush2.bf16.msra.mxu0 %v2717
  %2785 = vmatprep.subr.bf16.mxu0 %v2716
  %2786 = vmatpush2.bf16.msra.mxu0 %v2715
  %2787 = vmatprep.subr.bf16.mxu0 %v2714
  %2788 = vmatpush2.bf16.msra.mxu0 %v2713
  %2789 = vmatprep.subr.bf16.mxu0 %v2712
  %2790 = vmatpush2.bf16.msra.mxu0 %v2711
  %2791 = vmatprep.mubr.bf16.mxu0 %v2565
  %2792 = vmatmul.mubr.bf16.gmra.mxu0 %v2564
  %v2793 = vpop.f32.mrf.mxu0
  %v2794 = vadd.f32 0.0, %v2793
  %v2795 = vpop.f32.mrf.mxu0
  %v2796 = vadd.f32 0.0, %v2795
  %v2797 = vpop.f32.mrf.mxu0
  %v2798 = vadd.f32 0.0, %v2797
  %v2799 = vpop.f32.mrf.mxu0
  %v2800 = vadd.f32 0.0, %v2799
  %2801 = vdwg.mxu0
  %v2834 = vunpack.c.l.b16 %v2489
  %v2835 = vunpack.c.h.b16 %v2489
  %v2836 = vunpack.c.l.b16 %v2490
  %v2837 = vunpack.c.h.b16 %v2490
  %v2838 = vunpack.c.l.b16 %v2491
  %v2839 = vunpack.c.h.b16 %v2491
  %v2840 = vunpack.c.l.b16 %v2492
  %v2841 = vunpack.c.h.b16 %v2492
  %v2842 = vunpack.c.l.b16 %v2493
  %v2843 = vunpack.c.h.b16 %v2493
  %v2844 = vunpack.c.l.b16 %v2494
  %v2845 = vunpack.c.h.b16 %v2494
  %v2846 = vunpack.c.l.b16 %v2495
  %v2847 = vunpack.c.h.b16 %v2495
  %v2848 = vunpack.c.l.b16 %v2496
  %v2849 = vunpack.c.h.b16 %v2496
  %v2850 = vunpack.c.l.b16 %v2497
  %v2851 = vunpack.c.h.b16 %v2497
  %v2852 = vunpack.c.l.b16 %v2498
  %v2853 = vunpack.c.h.b16 %v2498
  %v2854 = vunpack.c.l.b16 %v2499
  %v2855 = vunpack.c.h.b16 %v2499
  %v2856 = vunpack.c.l.b16 %v2500
  %v2857 = vunpack.c.h.b16 %v2500
  %v2858 = vunpack.c.l.b16 %v2501
  %v2859 = vunpack.c.h.b16 %v2501
  %v2860 = vunpack.c.l.b16 %v2502
  %v2861 = vunpack.c.h.b16 %v2502
  %v2862 = vunpack.c.l.b16 %v2503
  %v2863 = vunpack.c.h.b16 %v2503
  %v2864 = vunpack.c.l.b16 %v2504
  %v2865 = vunpack.c.h.b16 %v2504
  %v2866 = vunpack.c.l.b16 %v2505
  %v2867 = vunpack.c.h.b16 %v2505
  %v2868 = vunpack.c.l.b16 %v2506
  %v2869 = vunpack.c.h.b16 %v2506
  %v2870 = vunpack.c.l.b16 %v2507
  %v2871 = vunpack.c.h.b16 %v2507
  %v2872 = vunpack.c.l.b16 %v2508
  %v2873 = vunpack.c.h.b16 %v2508
  %v2874 = vunpack.c.l.b16 %v2509
  %v2875 = vunpack.c.h.b16 %v2509
  %v2876 = vunpack.c.l.b16 %v2510
  %v2877 = vunpack.c.h.b16 %v2510
  %v2878 = vunpack.c.l.b16 %v2511
  %v2879 = vunpack.c.h.b16 %v2511
  %v2880 = vunpack.c.l.b16 %v2512
  %v2881 = vunpack.c.h.b16 %v2512
  %v2882 = vunpack.c.l.b16 %v2513
  %v2883 = vunpack.c.h.b16 %v2513
  %v2884 = vunpack.c.l.b16 %v2514
  %v2885 = vunpack.c.h.b16 %v2514
  %v2886 = vunpack.c.l.b16 %v2515
  %v2887 = vunpack.c.h.b16 %v2515
  %v2888 = vunpack.c.l.b16 %v2516
  %v2889 = vunpack.c.h.b16 %v2516
  %v2890 = vunpack.c.l.b16 %v2517
  %v2891 = vunpack.c.h.b16 %v2517
  %v2892 = vunpack.c.l.b16 %v2518
  %v2893 = vunpack.c.h.b16 %v2518
  %v2894 = vunpack.c.l.b16 %v2519
  %v2895 = vunpack.c.h.b16 %v2519
  %v2896 = vunpack.c.l.b16 %v2520
  %v2897 = vunpack.c.h.b16 %v2520
  %v2898 = vpack.c.b16 %v2836, %v2834
  %v2899 = vpack.c.b16 %v2837, %v2835
  %v2900 = vpack.c.b16 %v2840, %v2838
  %v2901 = vpack.c.b16 %v2841, %v2839
  %v2902 = vpack.c.b16 %v2844, %v2842
  %v2903 = vpack.c.b16 %v2845, %v2843
  %v2904 = vpack.c.b16 %v2848, %v2846
  %v2905 = vpack.c.b16 %v2849, %v2847
  %v2906 = vpack.c.b16 %v2852, %v2850
  %v2907 = vpack.c.b16 %v2853, %v2851
  %v2908 = vpack.c.b16 %v2856, %v2854
  %v2909 = vpack.c.b16 %v2857, %v2855
  %v2910 = vpack.c.b16 %v2860, %v2858
  %v2911 = vpack.c.b16 %v2861, %v2859
  %v2912 = vpack.c.b16 %v2864, %v2862
  %v2913 = vpack.c.b16 %v2865, %v2863
  %v2914 = vpack.c.b16 %v2868, %v2866
  %v2915 = vpack.c.b16 %v2869, %v2867
  %v2916 = vpack.c.b16 %v2872, %v2870
  %v2917 = vpack.c.b16 %v2873, %v2871
  %v2918 = vpack.c.b16 %v2876, %v2874
  %v2919 = vpack.c.b16 %v2877, %v2875
  %v2920 = vpack.c.b16 %v2880, %v2878
  %v2921 = vpack.c.b16 %v2881, %v2879
  %v2922 = vpack.c.b16 %v2884, %v2882
  %v2923 = vpack.c.b16 %v2885, %v2883
  %v2924 = vpack.c.b16 %v2888, %v2886
  %v2925 = vpack.c.b16 %v2889, %v2887
  %v2926 = vpack.c.b16 %v2892, %v2890
  %v2927 = vpack.c.b16 %v2893, %v2891
  %v2928 = vpack.c.b16 %v2896, %v2894
  %v2929 = vpack.c.b16 %v2897, %v2895
  %2962 = vmatprep.subr.bf16.mxu0 %v2913
  %2963 = vmatpush1.bf16.msra.mxu0 %v2912
  %2964 = vmatprep.subr.bf16.mxu0 %v2911
  %2965 = vmatpush1.bf16.msra.mxu0 %v2910
  %2966 = vmatprep.subr.bf16.mxu0 %v2909
  %2967 = vmatpush1.bf16.msra.mxu0 %v2908
  %2968 = vmatprep.subr.bf16.mxu0 %v2907
  %2969 = vmatpush1.bf16.msra.mxu0 %v2906
  %2970 = vmatprep.subr.bf16.mxu0 %v2905
  %2971 = vmatpush1.bf16.msra.mxu0 %v2904
  %2972 = vmatprep.subr.bf16.mxu0 %v2903
  %2973 = vmatpush1.bf16.msra.mxu0 %v2902
  %2974 = vmatprep.subr.bf16.mxu0 %v2901
  %2975 = vmatpush1.bf16.msra.mxu0 %v2900
  %2976 = vmatprep.subr.bf16.mxu0 %v2899
  %2977 = vmatpush1.bf16.msra.mxu0 %v2898
  %2978 = vmatprep.subr.bf16.mxu0 %v2929
  %2979 = vmatpush2.bf16.msra.mxu0 %v2928
  %2980 = vmatprep.subr.bf16.mxu0 %v2927
  %2981 = vmatpush2.bf16.msra.mxu0 %v2926
  %2982 = vmatprep.subr.bf16.mxu0 %v2925
  %2983 = vmatpush2.bf16.msra.mxu0 %v2924
  %2984 = vmatprep.subr.bf16.mxu0 %v2923
  %2985 = vmatpush2.bf16.msra.mxu0 %v2922
  %2986 = vmatprep.subr.bf16.mxu0 %v2921
  %2987 = vmatpush2.bf16.msra.mxu0 %v2920
  %2988 = vmatprep.subr.bf16.mxu0 %v2919
  %2989 = vmatpush2.bf16.msra.mxu0 %v2918
  %2990 = vmatprep.subr.bf16.mxu0 %v2917
  %2991 = vmatpush2.bf16.msra.mxu0 %v2916
  %2992 = vmatprep.subr.bf16.mxu0 %v2915
  %2993 = vmatpush2.bf16.msra.mxu0 %v2914
  %2994 = vmatprep.mubr.bf16.mxu0 %v2488
  %2995 = vmatmul.mubr.bf16.gmra.mxu0 %v2487
  %v2996 = vpop.f32.mrf.mxu0
  %v2997 = vadd.f32 %v2794, %v2996
  %v2998 = vpop.f32.mrf.mxu0
  %v2999 = vadd.f32 %v2796, %v2998
  %v3000 = vpop.f32.mrf.mxu0
  %v3001 = vadd.f32 %v2798, %v3000
  %v3002 = vpop.f32.mrf.mxu0
  %v3003 = vadd.f32 %v2800, %v3002
  %3004 = vdwg.mxu0
  %3005 = vmatprep.subr.bf16.mxu0 0
  %3006 = vmatpush1.bf16.msra.mxu0 0
  %3007 = vmatprep.subr.bf16.mxu0 0
  %3008 = vmatpush1.bf16.msra.mxu0 0
  %3009 = vmatprep.subr.bf16.mxu0 0
  %3010 = vmatpush1.bf16.msra.mxu0 0
  %3011 = vmatprep.subr.bf16.mxu0 0
  %3012 = vmatpush1.bf16.msra.mxu0 0
  %3013 = vmatprep.subr.bf16.mxu0 0
  %3014 = vmatpush1.bf16.msra.mxu0 0
  %3015 = vmatprep.subr.bf16.mxu0 0
  %3016 = vmatpush1.bf16.msra.mxu0 0
  %3017 = vmatprep.subr.bf16.mxu0 0
  %3018 = vmatpush1.bf16.msra.mxu0 0
  %3019 = vmatprep.subr.bf16.mxu0 %v2443
  %3020 = vmatpush1.bf16.msra.mxu0 %v2442
  %3021 = vmatprep.subr.bf16.mxu0 0
  %3022 = vmatpush2.bf16.msra.mxu0 0
  %3023 = vmatprep.subr.bf16.mxu0 0
  %3024 = vmatpush2.bf16.msra.mxu0 0
  %3025 = vmatprep.subr.bf16.mxu0 0
  %3026 = vmatpush2.bf16.msra.mxu0 0
  %3027 = vmatprep.subr.bf16.mxu0 0
  %3028 = vmatpush2.bf16.msra.mxu0 0
  %3029 = vmatprep.subr.bf16.mxu0 0
  %3030 = vmatpush2.bf16.msra.mxu0 0
  %3031 = vmatprep.subr.bf16.mxu0 0
  %3032 = vmatpush2.bf16.msra.mxu0 0
  %3033 = vmatprep.subr.bf16.mxu0 0
  %3034 = vmatpush2.bf16.msra.mxu0 0
  %3035 = vmatprep.subr.bf16.mxu0 0
  %3036 = vmatpush2.bf16.msra.mxu0 0
  %3037 = vmatprep.mubr.bf16.mxu0 0
  %3038 = vmatmul.mubr.bf16.gmra.mxu0 %v2139
  %v3039 = vpop.f32.mrf.mxu0
  %v3040 = vadd.f32 0.0, %v3039
  %v3041 = vpop.f32.mrf.mxu0
  %v3042 = vadd.f32 0.0, %v3041
  %v3043 = vpop.f32.mrf.mxu0
  %v3044 = vadd.f32 0.0, %v3043
  %v3045 = vpop.f32.mrf.mxu0
  %v3046 = vadd.f32 0.0, %v3045
  %3047 = vdwg.mxu0
  %v3048 = vpack.c.bf16 %v3044, %v3040
  %v3049 = vpack.c.bf16 %v3046, %v3042
  %s3050 = scalar_lea.vmem %s10, 512
  %v3051 = vld [vmem:[%s3050] sm:$0xff]
  %v3052 = vld [vmem:[%s3050 + $0x8] sm:$0xff]
  %v3053 = vld [vmem:[%s3050 + $0x10] sm:$0xff]
  %v3054 = vld [vmem:[%s3050 + $0x18] sm:$0xff]
  %v3055 = vld [vmem:[%s3050 + $0x20] sm:$0xff]
  %v3056 = vld [vmem:[%s3050 + $0x28] sm:$0xff]
  %v3057 = vld [vmem:[%s3050 + $0x30] sm:$0xff]
  %v3058 = vld [vmem:[%s3050 + $0x38] sm:$0xff]
  %v3059 = vld [vmem:[%s3050 + $0x40] sm:$0xff]
  %v3060 = vld [vmem:[%s3050 + $0x48] sm:$0xff]
  %v3061 = vld [vmem:[%s3050 + $0x50] sm:$0xff]
  %v3062 = vld [vmem:[%s3050 + $0x58] sm:$0xff]
  %v3063 = vld [vmem:[%s3050 + $0x60] sm:$0xff]
  %v3064 = vld [vmem:[%s3050 + $0x68] sm:$0xff]
  %v3065 = vld [vmem:[%s3050 + $0x70] sm:$0xff]
  %v3066 = vld [vmem:[%s3050 + $0x78] sm:$0xff]
  %v3067 = vld [vmem:[%s3050 + $0x80] sm:$0xff]
  %v3068 = vld [vmem:[%s3050 + $0x88] sm:$0xff]
  %v3069 = vld [vmem:[%s3050 + $0x90] sm:$0xff]
  %v3070 = vld [vmem:[%s3050 + $0x98] sm:$0xff]
  %v3071 = vld [vmem:[%s3050 + $0xa0] sm:$0xff]
  %v3072 = vld [vmem:[%s3050 + $0xa8] sm:$0xff]
  %v3073 = vld [vmem:[%s3050 + $0xb0] sm:$0xff]
  %v3074 = vld [vmem:[%s3050 + $0xb8] sm:$0xff]
  %v3075 = vld [vmem:[%s3050 + $0xc0] sm:$0xff]
  %v3076 = vld [vmem:[%s3050 + $0xc8] sm:$0xff]
  %v3077 = vld [vmem:[%s3050 + $0xd0] sm:$0xff]
  %v3078 = vld [vmem:[%s3050 + $0xd8] sm:$0xff]
  %v3079 = vld [vmem:[%s3050 + $0xe0] sm:$0xff]
  %v3080 = vld [vmem:[%s3050 + $0xe8] sm:$0xff]
  %v3081 = vld [vmem:[%s3050 + $0xf0] sm:$0xff]
  %v3082 = vld [vmem:[%s3050 + $0xf8] sm:$0xff]
  %v3115 = vunpack.c.l.b16 %v3051
  %v3116 = vunpack.c.h.b16 %v3051
  %v3117 = vunpack.c.l.b16 %v3052
  %v3118 = vunpack.c.h.b16 %v3052
  %v3119 = vunpack.c.l.b16 %v3053
  %v3120 = vunpack.c.h.b16 %v3053
  %v3121 = vunpack.c.l.b16 %v3054
  %v3122 = vunpack.c.h.b16 %v3054
  %v3123 = vunpack.c.l.b16 %v3055
  %v3124 = vunpack.c.h.b16 %v3055
  %v3125 = vunpack.c.l.b16 %v3056
  %v3126 = vunpack.c.h.b16 %v3056
  %v3127 = vunpack.c.l.b16 %v3057
  %v3128 = vunpack.c.h.b16 %v3057
  %v3129 = vunpack.c.l.b16 %v3058
  %v3130 = vunpack.c.h.b16 %v3058
  %v3131 = vunpack.c.l.b16 %v3059
  %v3132 = vunpack.c.h.b16 %v3059
  %v3133 = vunpack.c.l.b16 %v3060
  %v3134 = vunpack.c.h.b16 %v3060
  %v3135 = vunpack.c.l.b16 %v3061
  %v3136 = vunpack.c.h.b16 %v3061
  %v3137 = vunpack.c.l.b16 %v3062
  %v3138 = vunpack.c.h.b16 %v3062
  %v3139 = vunpack.c.l.b16 %v3063
  %v3140 = vunpack.c.h.b16 %v3063
  %v3141 = vunpack.c.l.b16 %v3064
  %v3142 = vunpack.c.h.b16 %v3064
  %v3143 = vunpack.c.l.b16 %v3065
  %v3144 = vunpack.c.h.b16 %v3065
  %v3145 = vunpack.c.l.b16 %v3066
  %v3146 = vunpack.c.h.b16 %v3066
  %v3147 = vunpack.c.l.b16 %v3067
  %v3148 = vunpack.c.h.b16 %v3067
  %v3149 = vunpack.c.l.b16 %v3068
  %v3150 = vunpack.c.h.b16 %v3068
  %v3151 = vunpack.c.l.b16 %v3069
  %v3152 = vunpack.c.h.b16 %v3069
  %v3153 = vunpack.c.l.b16 %v3070
  %v3154 = vunpack.c.h.b16 %v3070
  %v3155 = vunpack.c.l.b16 %v3071
  %v3156 = vunpack.c.h.b16 %v3071
  %v3157 = vunpack.c.l.b16 %v3072
  %v3158 = vunpack.c.h.b16 %v3072
  %v3159 = vunpack.c.l.b16 %v3073
  %v3160 = vunpack.c.h.b16 %v3073
  %v3161 = vunpack.c.l.b16 %v3074
  %v3162 = vunpack.c.h.b16 %v3074
  %v3163 = vunpack.c.l.b16 %v3075
  %v3164 = vunpack.c.h.b16 %v3075
  %v3165 = vunpack.c.l.b16 %v3076
  %v3166 = vunpack.c.h.b16 %v3076
  %v3167 = vunpack.c.l.b16 %v3077
  %v3168 = vunpack.c.h.b16 %v3077
  %v3169 = vunpack.c.l.b16 %v3078
  %v3170 = vunpack.c.h.b16 %v3078
  %v3171 = vunpack.c.l.b16 %v3079
  %v3172 = vunpack.c.h.b16 %v3079
  %v3173 = vunpack.c.l.b16 %v3080
  %v3174 = vunpack.c.h.b16 %v3080
  %v3175 = vunpack.c.l.b16 %v3081
  %v3176 = vunpack.c.h.b16 %v3081
  %v3177 = vunpack.c.l.b16 %v3082
  %v3178 = vunpack.c.h.b16 %v3082
  %v3179 = vpack.c.b16 %v3117, %v3115
  %v3180 = vpack.c.b16 %v3118, %v3116
  %v3181 = vpack.c.b16 %v3121, %v3119
  %v3182 = vpack.c.b16 %v3122, %v3120
  %v3183 = vpack.c.b16 %v3125, %v3123
  %v3184 = vpack.c.b16 %v3126, %v3124
  %v3185 = vpack.c.b16 %v3129, %v3127
  %v3186 = vpack.c.b16 %v3130, %v3128
  %v3187 = vpack.c.b16 %v3133, %v3131
  %v3188 = vpack.c.b16 %v3134, %v3132
  %v3189 = vpack.c.b16 %v3137, %v3135
  %v3190 = vpack.c.b16 %v3138, %v3136
  %v3191 = vpack.c.b16 %v3141, %v3139
  %v3192 = vpack.c.b16 %v3142, %v3140
  %v3193 = vpack.c.b16 %v3145, %v3143
  %v3194 = vpack.c.b16 %v3146, %v3144
  %v3195 = vpack.c.b16 %v3149, %v3147
  %v3196 = vpack.c.b16 %v3150, %v3148
  %v3197 = vpack.c.b16 %v3153, %v3151
  %v3198 = vpack.c.b16 %v3154, %v3152
  %v3199 = vpack.c.b16 %v3157, %v3155
  %v3200 = vpack.c.b16 %v3158, %v3156
  %v3201 = vpack.c.b16 %v3161, %v3159
  %v3202 = vpack.c.b16 %v3162, %v3160
  %v3203 = vpack.c.b16 %v3165, %v3163
  %v3204 = vpack.c.b16 %v3166, %v3164
  %v3205 = vpack.c.b16 %v3169, %v3167
  %v3206 = vpack.c.b16 %v3170, %v3168
  %v3207 = vpack.c.b16 %v3173, %v3171
  %v3208 = vpack.c.b16 %v3174, %v3172
  %v3209 = vpack.c.b16 %v3177, %v3175
  %v3210 = vpack.c.b16 %v3178, %v3176
  %3243 = vmatprep.subr.bf16.mxu0 %v3194
  %3244 = vmatpush1.bf16.msra.mxu0 %v3193
  %3245 = vmatprep.subr.bf16.mxu0 %v3192
  %3246 = vmatpush1.bf16.msra.mxu0 %v3191
  %3247 = vmatprep.subr.bf16.mxu0 %v3190
  %3248 = vmatpush1.bf16.msra.mxu0 %v3189
  %3249 = vmatprep.subr.bf16.mxu0 %v3188
  %3250 = vmatpush1.bf16.msra.mxu0 %v3187
  %3251 = vmatprep.subr.bf16.mxu0 %v3186
  %3252 = vmatpush1.bf16.msra.mxu0 %v3185
  %3253 = vmatprep.subr.bf16.mxu0 %v3184
  %3254 = vmatpush1.bf16.msra.mxu0 %v3183
  %3255 = vmatprep.subr.bf16.mxu0 %v3182
  %3256 = vmatpush1.bf16.msra.mxu0 %v3181
  %3257 = vmatprep.subr.bf16.mxu0 %v3180
  %3258 = vmatpush1.bf16.msra.mxu0 %v3179
  %3259 = vmatprep.subr.bf16.mxu0 %v3210
  %3260 = vmatpush2.bf16.msra.mxu0 %v3209
  %3261 = vmatprep.subr.bf16.mxu0 %v3208
  %3262 = vmatpush2.bf16.msra.mxu0 %v3207
  %3263 = vmatprep.subr.bf16.mxu0 %v3206
  %3264 = vmatpush2.bf16.msra.mxu0 %v3205
  %3265 = vmatprep.subr.bf16.mxu0 %v3204
  %3266 = vmatpush2.bf16.msra.mxu0 %v3203
  %3267 = vmatprep.subr.bf16.mxu0 %v3202
  %3268 = vmatpush2.bf16.msra.mxu0 %v3201
  %3269 = vmatprep.subr.bf16.mxu0 %v3200
  %3270 = vmatpush2.bf16.msra.mxu0 %v3199
  %3271 = vmatprep.subr.bf16.mxu0 %v3198
  %3272 = vmatpush2.bf16.msra.mxu0 %v3197
  %3273 = vmatprep.subr.bf16.mxu0 %v3196
  %3274 = vmatpush2.bf16.msra.mxu0 %v3195
  %3275 = vmatprep.mubr.bf16.mxu0 %v3049
  %3276 = vmatmul.mubr.bf16.gmra.mxu0 %v3048
  %v3277 = vpop.f32.mrf.mxu0
  %v3278 = vadd.f32 0.0, %v3277
  %v3279 = vpop.f32.mrf.mxu0
  %v3280 = vadd.f32 0.0, %v3279
  %v3281 = vpop.f32.mrf.mxu0
  %v3282 = vadd.f32 0.0, %v3281
  %v3283 = vpop.f32.mrf.mxu0
  %v3284 = vadd.f32 0.0, %v3283
  %3285 = vdwg.mxu0
  %v3286 = vadd.f32 %v2997, %v3278
  %v3287 = vadd.f32 %v2999, %v3280
  %v3288 = vadd.f32 %v3001, %v3282
  %v3289 = vadd.f32 %v3003, %v3284
  %v3290 = vld [vmem:[%s11] sm:$0x3]
  %v3292 = vlaneseq
  %v3293 = vshrl.u32 %v3292, 7
  %v3294 = vsub.s32 0, %v3293
  %v3295 = vrot.slane %v3290, %v3294
  %v3296 = vlaneseq
  %v3297 = vshrl.u32 %v3296, 7
  %v3298 = vsub.s32 1, %v3297
  %v3299 = vrot.slane %v3290, %v3298
  %v3302 = vadd.f32 %v3286, %v3295
  %v3303 = vadd.f32 %v3287, %v3299
  %v3304 = vadd.f32 %v3288, %v3295
  %v3305 = vadd.f32 %v3289, %v3299
  %v3306 = vmax.f32 %v3302, 0.0
  %v3307 = vmax.f32 %v3303, 0.0
  %v3308 = vmax.f32 %v3304, 0.0
  %v3309 = vmax.f32 %v3305, 0.0
  %v3310 = vpack.c.bf16 %v3308, %v3306
  %v3311 = vpack.c.bf16 %v3309, %v3307
  %v3312 = vld [vmem:[%s12] sm:$0xf]
  %v3313 = vld [vmem:[%s12 + $0x4] sm:$0xf]
  %v3314 = vld [vmem:[%s12 + $0x8] sm:$0xf]
  %v3315 = vld [vmem:[%s12 + $0xc] sm:$0xf]
  %v3316 = vld [vmem:[%s12 + $0x10] sm:$0xf]
  %v3317 = vld [vmem:[%s12 + $0x14] sm:$0xf]
  %v3318 = vld [vmem:[%s12 + $0x18] sm:$0xf]
  %v3319 = vld [vmem:[%s12 + $0x1c] sm:$0xf]
  %v3320 = vld [vmem:[%s12 + $0x20] sm:$0xf]
  %v3321 = vld [vmem:[%s12 + $0x24] sm:$0xf]
  %v3322 = vld [vmem:[%s12 + $0x28] sm:$0xf]
  %v3323 = vld [vmem:[%s12 + $0x2c] sm:$0xf]
  %v3324 = vld [vmem:[%s12 + $0x30] sm:$0xf]
  %v3325 = vld [vmem:[%s12 + $0x34] sm:$0xf]
  %v3326 = vld [vmem:[%s12 + $0x38] sm:$0xf]
  %v3327 = vld [vmem:[%s12 + $0x3c] sm:$0xf]
  %v3328 = vld [vmem:[%s12 + $0x40] sm:$0xf]
  %v3329 = vld [vmem:[%s12 + $0x44] sm:$0xf]
  %v3330 = vld [vmem:[%s12 + $0x48] sm:$0xf]
  %v3331 = vld [vmem:[%s12 + $0x4c] sm:$0xf]
  %v3332 = vld [vmem:[%s12 + $0x50] sm:$0xf]
  %v3333 = vld [vmem:[%s12 + $0x54] sm:$0xf]
  %v3334 = vld [vmem:[%s12 + $0x58] sm:$0xf]
  %v3335 = vld [vmem:[%s12 + $0x5c] sm:$0xf]
  %v3336 = vld [vmem:[%s12 + $0x60] sm:$0xf]
  %v3337 = vld [vmem:[%s12 + $0x64] sm:$0xf]
  %v3338 = vld [vmem:[%s12 + $0x68] sm:$0xf]
  %v3339 = vld [vmem:[%s12 + $0x6c] sm:$0xf]
  %v3340 = vld [vmem:[%s12 + $0x70] sm:$0xf]
  %v3341 = vld [vmem:[%s12 + $0x74] sm:$0xf]
  %v3342 = vld [vmem:[%s12 + $0x78] sm:$0xf]
  %v3343 = vld [vmem:[%s12 + $0x7c] sm:$0xf]
  %v3344 = vld [vmem:[%s13] sm:$0x1]
  %v3346 = vlaneseq
  %v3347 = vshrl.u32 %v3346, 7
  %v3348 = vsub.s32 0, %v3347
  %v3349 = vrot.slane %v3344, %v3348
  %v3383 = vunpack.c.l.b16 %v3312
  %v3384 = vunpack.c.l.b16 %v3313
  %v3385 = vunpack.c.l.b16 %v3314
  %v3386 = vunpack.c.l.b16 %v3315
  %v3387 = vunpack.c.l.b16 %v3316
  %v3388 = vunpack.c.l.b16 %v3317
  %v3389 = vunpack.c.l.b16 %v3318
  %v3390 = vunpack.c.l.b16 %v3319
  %v3391 = vunpack.c.l.b16 %v3320
  %v3392 = vunpack.c.l.b16 %v3321
  %v3393 = vunpack.c.l.b16 %v3322
  %v3394 = vunpack.c.l.b16 %v3323
  %v3395 = vunpack.c.l.b16 %v3324
  %v3396 = vunpack.c.l.b16 %v3325
  %v3397 = vunpack.c.l.b16 %v3326
  %v3398 = vunpack.c.l.b16 %v3327
  %v3399 = vunpack.c.l.b16 %v3328
  %v3400 = vunpack.c.l.b16 %v3329
  %v3401 = vunpack.c.l.b16 %v3330
  %v3402 = vunpack.c.l.b16 %v3331
  %v3403 = vunpack.c.l.b16 %v3332
  %v3404 = vunpack.c.l.b16 %v3333
  %v3405 = vunpack.c.l.b16 %v3334
  %v3406 = vunpack.c.l.b16 %v3335
  %v3407 = vunpack.c.l.b16 %v3336
  %v3408 = vunpack.c.l.b16 %v3337
  %v3409 = vunpack.c.l.b16 %v3338
  %v3410 = vunpack.c.l.b16 %v3339
  %v3411 = vunpack.c.l.b16 %v3340
  %v3412 = vunpack.c.l.b16 %v3341
  %v3413 = vunpack.c.l.b16 %v3342
  %v3414 = vunpack.c.l.b16 %v3343
  %v3415 = vpack.c.b16 %v3384, %v3383
  %v3416 = vpack.c.b16 %v3386, %v3385
  %v3417 = vpack.c.b16 %v3388, %v3387
  %v3418 = vpack.c.b16 %v3390, %v3389
  %v3419 = vpack.c.b16 %v3392, %v3391
  %v3420 = vpack.c.b16 %v3394, %v3393
  %v3421 = vpack.c.b16 %v3396, %v3395
  %v3422 = vpack.c.b16 %v3398, %v3397
  %v3423 = vpack.c.b16 %v3400, %v3399
  %v3424 = vpack.c.b16 %v3402, %v3401
  %v3425 = vpack.c.b16 %v3404, %v3403
  %v3426 = vpack.c.b16 %v3406, %v3405
  %v3427 = vpack.c.b16 %v3408, %v3407
  %v3428 = vpack.c.b16 %v3410, %v3409
  %v3429 = vpack.c.b16 %v3412, %v3411
  %v3430 = vpack.c.b16 %v3414, %v3413
  %3447 = vmatprep.subr.bf16.mxu0 0
  %3448 = vmatpush1.bf16.msra.mxu0 %v3422
  %3449 = vmatprep.subr.bf16.mxu0 0
  %3450 = vmatpush1.bf16.msra.mxu0 %v3421
  %3451 = vmatprep.subr.bf16.mxu0 0
  %3452 = vmatpush1.bf16.msra.mxu0 %v3420
  %3453 = vmatprep.subr.bf16.mxu0 0
  %3454 = vmatpush1.bf16.msra.mxu0 %v3419
  %3455 = vmatprep.subr.bf16.mxu0 0
  %3456 = vmatpush1.bf16.msra.mxu0 %v3418
  %3457 = vmatprep.subr.bf16.mxu0 0
  %3458 = vmatpush1.bf16.msra.mxu0 %v3417
  %3459 = vmatprep.subr.bf16.mxu0 0
  %3460 = vmatpush1.bf16.msra.mxu0 %v3416
  %3461 = vmatprep.subr.bf16.mxu0 0
  %3462 = vmatpush1.bf16.msra.mxu0 %v3415
  %3463 = vmatprep.subr.bf16.mxu0 0
  %3464 = vmatpush2.bf16.msra.mxu0 %v3430
  %3465 = vmatprep.subr.bf16.mxu0 0
  %3466 = vmatpush2.bf16.msra.mxu0 %v3429
  %3467 = vmatprep.subr.bf16.mxu0 0
  %3468 = vmatpush2.bf16.msra.mxu0 %v3428
  %3469 = vmatprep.subr.bf16.mxu0 0
  %3470 = vmatpush2.bf16.msra.mxu0 %v3427
  %3471 = vmatprep.subr.bf16.mxu0 0
  %3472 = vmatpush2.bf16.msra.mxu0 %v3426
  %3473 = vmatprep.subr.bf16.mxu0 0
  %3474 = vmatpush2.bf16.msra.mxu0 %v3425
  %3475 = vmatprep.subr.bf16.mxu0 0
  %3476 = vmatpush2.bf16.msra.mxu0 %v3424
  %3477 = vmatprep.subr.bf16.mxu0 0
  %3478 = vmatpush2.bf16.msra.mxu0 %v3423
  %3479 = vmatprep.mubr.bf16.mxu0 %v3311
  %3480 = vmatmul.mubr.bf16.gmra.mxu0 %v3310
  %v3481 = vpop.f32.mrf.mxu0
  %v3482 = vadd.f32 %v3349, %v3481
  %v3483 = vpop.f32.mrf.mxu0
  %v3484 = vpop.f32.mrf.mxu0
  %v3485 = vadd.f32 %v3349, %v3484
  %v3486 = vpop.f32.mrf.mxu0
  %3487 = vdwg.mxu0
  %v3488 = vmin.f32 %v3482, 4.1351666
  %v3489 = vmin.f32 %v3485, 4.1351666
  %v3490 = vld [vmem:[%s14] sm:$0xff]
  %v3491 = vld [vmem:[%s14 + $0x8] sm:$0xff]
  %3494 = vrot.lane.b32.xlu0 %v3490, 48
  %v3495 = vpop.permute.xlu0 %3494
  %3496 = vrot.lane.b32.xlu0 %v3491, 48
  %v3497 = vpop.permute.xlu0 %3496
  %v3500 = vsub.f32 %v3490, %v3495
  %v3501 = vsub.f32 %v3491, %v3497
  %v3502 = vadd.f32 %v3500, 1.0
  %v3503 = vadd.f32 %v3501, 1.0
  %v3504 = vmul.f32 %v3502, 0.5
  %v3505 = vmul.f32 %v3503, 0.5
  %3508 = vrot.lane.b32.xlu0 %v3504, 80
  %v3509 = vpop.permute.xlu0 %3508
  %3510 = vrot.lane.b32.xlu0 %v3505, 80
  %v3511 = vpop.permute.xlu0 %3510
  %v3514 = vadd.f32 %v3490, %v3509
  %v3515 = vadd.f32 %v3491, %v3511
  %3518 = vrot.lane.b32.xlu0 %v3502, 104
  %v3519 = vpop.permute.xlu0 %3518
  %3520 = vrot.lane.b32.xlu0 %v3503, 104
  %v3521 = vpop.permute.xlu0 %3520
  %v3524 = vmul.f32 %v3482, %v3519
  %v3525 = vmul.f32 %v3485, %v3521
  %3528 = vrot.lane.b32.xlu0 %v3514, 24
  %v3529 = vpop.permute.xlu0 %3528
  %3530 = vrot.lane.b32.xlu0 %v3515, 24
  %v3531 = vpop.permute.xlu0 %3530
  %v3534 = vadd.f32 %v3524, %v3529
  %v3535 = vadd.f32 %v3525, %v3531
  %v3536 = vmul.f32 %v3488, 1.442695
  %v3537 = vpow.pop %v3536
  %v3538 = vmul.f32 %v3489, 1.442695
  %v3539 = vpow.pop %v3538
  %3540 = vrot.lane.b32.xlu0 %v3502, 24
  %v3541 = vpop.permute.xlu0 %3540
  %3542 = vrot.lane.b32.xlu0 %v3503, 24
  %v3543 = vpop.permute.xlu0 %3542
  %v3546 = vmul.f32 %v3537, %v3541
  %v3547 = vmul.f32 %v3539, %v3543
  %v3548 = vmul.f32 %v3546, 0.5
  %v3549 = vmul.f32 %v3547, 0.5
  %3552 = vrot.lane.b32.xlu0 %v3548, 80
  %v3553 = vpop.permute.xlu0 %3552
  %3554 = vrot.lane.b32.xlu0 %v3549, 80
  %v3555 = vpop.permute.xlu0 %3554
  %v3558 = vsub.f32 %v3534, %v3553
  %v3559 = vsub.f32 %v3535, %v3555
  %v3560 = vadd.f32 %v3534, %v3553
  %v3561 = vadd.f32 %v3535, %v3555
  %v3562 = vsub.f32 %v3560, 1.0
  %v3563 = vsub.f32 %v3561, 1.0
  %v3564 = vmax.f32 %v3558, 0.0
  %v3565 = vmax.f32 %v3559, 0.0
  %v3566 = vmin.f32 %v3564, 15.0
  %v3567 = vmin.f32 %v3565, 15.0
  %v3568 = vmax.f32 %v3562, 0.0
  %v3569 = vmax.f32 %v3563, 0.0
  %v3570 = vmin.f32 %v3568, 15.0
  %v3571 = vmin.f32 %v3569, 15.0
  %v3572 = vxor.u32 %v3482, 2147483648
  %v3573 = vxor.u32 %v3485, 2147483648
  %v3574 = vmul.f32 %v3572, 1.442695
  %v3575 = vpow.pop %v3574
  %v3576 = vmul.f32 %v3573, 1.442695
  %v3577 = vpow.pop %v3576
  %v3578 = vadd.f32 %v3575, 1.0
  %v3579 = vadd.f32 %v3577, 1.0
  %v3580 = vrcp.pop %v3578
  %v3581 = vmul.f32 1.0, %v3580
  %v3582 = vrcp.pop %v3579
  %v3583 = vmul.f32 1.0, %v3582
  %3586 = vrot.lane.b32.xlu0 %v3566, 104
  %v3587 = vpop.permute.xlu0 %3586
  %3588 = vrot.lane.b32.xlu0 %v3567, 104
  %v3589 = vpop.permute.xlu0 %3588
  %3594 = vrot.lane.b32.xlu0 %v3570, 24
  %v3595 = vpop.permute.xlu0 %3594
  %3596 = vrot.lane.b32.xlu0 %v3571, 24
  %v3597 = vpop.permute.xlu0 %3596
  %3602 = vrot.lane.b32.xlu0 %v3581, 96
  %v3603 = vpop.permute.xlu0 %3602
  %3604 = vrot.lane.b32.xlu0 %v3583, 96
  %v3605 = vpop.permute.xlu0 %3604
  %vm3608 = vcmask 392192
  %v3609 = vsel %vm3608, %v3587, %v3595
  %v3610 = vsel %vm3608, %v3589, %v3597
  %vm3611 = vcmask 785408
  %v3612 = vsel %vm3611, %v3609, %v3603
  %v3613 = vsel %vm3611, %v3610, %v3605
  %vm3614 = vcmask 982016
  %v3615 = vsel %vm3614, %v3612, 0.0
  %v3616 = vsel %vm3614, %v3613, 0.0
  %3617 = vst [vmem:[%s15] sm:$0xff] %v3615
  %3618 = vst [vmem:[%s15 + $0x8] sm:$0xff] %v3616
  // Predicated region
  $region62: #{generalized_rcnn_forward.1} parent=0 // pred_check
    _
  $region63: #{generalized_rcnn_forward.1} parent=0 // pred_check_branch
    %3620 = sbr.rel (0) target = $region65
  $region64: #{generalized_rcnn_forward.1} parent=0 // pred_region
    _
  $region65: #{generalized_rcnn_forward.1} parent=0 // pred_fallthru
    _
  // Predicated region
  $region66: #{generalized_rcnn_forward.1} parent=0 // pred_check
    _
  $region67: #{generalized_rcnn_forward.1} parent=0 // pred_check_branch
    %3622 = sbr.rel (0) target = $region69
  $region68: #{generalized_rcnn_forward.1} parent=0 // pred_region
    _
  $region69: #{generalized_rcnn_forward.1} parent=0 // pred_fallthru
    _

</llo_original>
